<compile_context>
chip_gen: v5e
topology: v5e:2x2
jax: 0.10.0
libtpu: 0.0.40
codegen_flags: <defaults>
</compile_context>

<pallas_src>
import math

import jax
import jax.numpy as jnp
from jax import lax
from jax.experimental import pallas as pl
from jax.experimental.pallas import tpu as pltpu


def _round_up(x, m):
    return ((x + m - 1) // m) * m


_VMEM_CAP = None


def _vmem_capacity_bytes():
    """Per-TensorCore VMEM (128 MiB v5e/v6e, 64 MiB v7x); safe 64 MiB fallback."""
    global _VMEM_CAP
    if _VMEM_CAP is None:
        cap = 64 * 1024 * 1024
        try:
            c = int(pltpu.get_tpu_info().vmem_capacity_bytes)
            if c > 0:
                cap = c
        except Exception:
            pass
        _VMEM_CAP = cap
    return _VMEM_CAP


# ----------------------------------------------------------------------------
# Fused implicit-GEMM conv kernel (spatial stride 1)
# ----------------------------------------------------------------------------
def _make_fused_kernel(KT, KH, KW, tr, Wo_c, Cin, Npad):
    MW = tr * Wo_c

    def kernel(*refs):
        x_refs = refs[:KT]          # KT x (tr+KH-1, Wo_c+KW-1, Cin) bf16 tiles
        w_ref = refs[KT]            # (KT*KH*KW, Cin, Npad) bf16, resident
        b_ref = refs[KT + 1]        # (1, Npad) f32
        o_ref = refs[KT + 2]        # (MW, Npad) bf16
        acc_ref = refs[KT + 3]      # (MW, Npad) f32 scratch

        p = 0
        for kt in range(KT):
            xr = x_refs[kt]
            for kh in range(KH):
                for kw in range(KW):
                    a = xr[kh:kh + tr, kw:kw + Wo_c, :].reshape(MW, Cin)
                    d = jnp.dot(a, w_ref[p], preferred_element_type=jnp.float32)
                    if p == 0:
                        acc_ref[...] = d
                    else:
                        acc_ref[...] += d
                    p += 1
        o_ref[...] = (acc_ref[...] + b_ref[...]).astype(o_ref.dtype)

    return kernel


def _pick_tr(B, To, Ho, Wo_c, Wp_c, Cin, Npad, taps, KT, KH, budget):
    """Largest output-row tile whose working set (incl. resident weight) fits VMEM."""
    fixed = 2 * taps * Cin * Npad * 2 + 2 * Npad * 4 + (2 << 20)

    def need(t):
        t_in = t + KH - 1
        return (2 * KT * t_in * Wp_c * Cin * 2   # double-buffered input tiles (bf16)
                + t_in * Wp_c * Cin * 2          # in-kernel tap-slice temp
                + 2 * t * Wo_c * Npad * 2        # double-buffered bf16 output tile
                + 2 * t * Wo_c * Npad * 4)       # f32 accumulator (+ temp)

    tr_cap = max(1, Ho)
    if B * To == 1 and Ho >= 16:
        tr_cap = -(-Ho // 2)      # keep >= 2 grid steps so both v7x cores get work
    tr = min(256, tr_cap)
    while tr > 1 and fixed + need(tr) > budget:
        tr = max(1, tr // 2)
    # TODO(synk): if `fixed` alone exceeds the budget, split K/N across a reduction
    # grid axis instead of shrinking tr further.
    return tr


def _fused_conv(x_cl, wt, bias_row, KT, KH, KW, st, ph, pw):
    """Implicit-GEMM conv (spatial stride 1).

    x_cl: (B, T, H, W, Cin) bf16 channels-last (temporal/causal padding already applied).
    wt:   (KT*KH*KW, Cin, Npad) bf16 tap-major weights.   Returns (B, To, Ho, Wo, Npad) bf16.
    """
    B, T, H, W, Cin = x_cl.shape
    taps, _, Npad = wt.shape
    To = (T - KT) // st + 1
    Ho = H + 2 * ph - KH + 1
    Wo = W + 2 * pw - KW + 1

    # Sublane-friendly output width; extra columns are over-compute, sliced off below.
    Wo_c = _round_up(Wo, 8)
    Wp_c = Wo_c + KW - 1

    cap = _vmem_capacity_bytes()
    budget = int(cap * 0.80)
    tr = _pick_tr(B, To, Ho, Wo_c, Wp_c, Cin, Npad, taps, KT, KH, budget)
    nr = pl.cdiv(Ho, tr)
    tr = pl.cdiv(Ho, nr)          # balance row blocks (minimizes tail over-compute)
    nr = pl.cdiv(Ho, tr)
    tr_in = tr + KH - 1
    Hp_c = nr * tr + KH - 1
    MW = tr * Wo_c

    # Conv padding + alignment padding in one pass, channels-last bf16.
    xpad = jnp.pad(x_cl, ((0, 0), (0, 0),
                          (ph, Hp_c - H - ph),
                          (pw, Wp_c - W - pw),
                          (0, 0)))
    # Halo'd output-row tiles: (B, T, nr, tr_in, Wp_c, Cin); ~(KH-1)/tr duplication only.
    if nr == 1:
        xt = xpad[:, :, None]
    else:
        xt = jnp.stack([xpad[:, :, r * tr:r * tr + tr_in] for r in range(nr)], axis=2)

    kernel = _make_fused_kernel(KT, KH, KW, tr, Wo_c, Cin, Npad)

    def _x_map(kt):
        def m(b, to, r):
            return (b, to * st + kt, r, 0, 0, 0)
        return m

    in_specs = [pl.BlockSpec((None, None, None, tr_in, Wp_c, Cin), _x_map(kt))
                for kt in range(KT)]
    in_specs += [
        pl.BlockSpec((taps, Cin, Npad), lambda b, to, r: (0, 0, 0)),   # resident weight
        pl.BlockSpec((1, Npad), lambda b, to, r: (0, 0)),              # bias
    ]

    need = (2 * KT * tr_in * Wp_c * Cin * 2
            + tr_in * Wp_c * Cin * 2
            + 2 * taps * Cin * Npad * 2
            + 2 * MW * Npad * 2
            + 2 * MW * Npad * 4
            + 2 * Npad * 4
            + (2 << 20))
    vmem_limit = int(min(max(need, 32 * 1024 * 1024), int(cap * 0.94)))

    out = pl.pallas_call(
        kernel,
        out_shape=jax.ShapeDtypeStruct((B, To, nr, MW, Npad), jnp.bfloat16),
        grid=(B, To, nr),
        in_specs=in_specs,
        out_specs=pl.BlockSpec((None, None, None, MW, Npad),
                               lambda b, to, r: (b, to, r, 0, 0)),
        scratch_shapes=[pltpu.VMEM((MW, Npad), jnp.float32)],
        compiler_params=pltpu.CompilerParams(
            dimension_semantics=("parallel", "parallel", "parallel"),
            vmem_limit_bytes=vmem_limit),
    )(*([xt] * KT), wt, bias_row)

    out = out.reshape(B, To, nr * tr, Wo_c, Npad)
    return out[:, :, :Ho, :Wo, :]


# ----------------------------------------------------------------------------
# im2col fallback (spatially strided convs): matmul + bias kernel
# ----------------------------------------------------------------------------
def _mm_bias_kernel(a_ref, w_ref, b_ref, o_ref):
    o_ref[...] = (jnp.dot(a_ref[...], w_ref[...], preferred_element_type=jnp.float32)
                  + b_ref[...]).astype(o_ref.dtype)


def _matmul_bias_pallas(a, w, bias_row):
    """a: (M, K) bf16, w: (K, Npad) bf16, bias_row: (1, Npad) f32 -> (M, Npad) bf16."""
    M, K = a.shape
    Npad = w.shape[1]
    cap = _vmem_capacity_bytes()
    budget = int(cap * 0.80)
    fixed = 2 * K * Npad * 2 + 2 * Npad * 4 + (2 << 20)

    def need(t):
        return 2 * t * K * 2 + t * K * 2 + 2 * t * Npad * 2 + t * Npad * 4

    tm = 512
    while tm > 16 and fixed + need(tm) > budget:
        tm //= 2
    if M < tm:
        tm = max(8, _round_up(M, 8))
    grid_m = pl.cdiv(M, tm)
    vmem_limit = int(min(max(fixed + need(tm), 32 * 1024 * 1024), int(cap * 0.94)))

    return pl.pallas_call(
        _mm_bias_kernel,
        out_shape=jax.ShapeDtypeStruct((M, Npad), jnp.bfloat16),
        grid=(grid_m,),
        in_specs=[
            pl.BlockSpec((tm, K), lambda i: (i, 0)),
            pl.BlockSpec((K, Npad), lambda i: (0, 0)),
            pl.BlockSpec((1, Npad), lambda i: (0, 0)),
        ],
        out_specs=pl.BlockSpec((tm, Npad), lambda i: (i, 0)),
        compiler_params=pltpu.CompilerParams(
            dimension_semantics=("parallel",),
            vmem_limit_bytes=vmem_limit),
    )(a, w, bias_row)


def _im2col_conv(x_cl, wt, bias_row, KT, KH, KW, st, sh, sw, ph, pw):
    """Fallback for spatially-strided convs; returns (B, To, Ho, Wo, Npad) bf16."""
    B, T, H, W, Cin = x_cl.shape
    taps, _, Npad = wt.shape
    xp = jnp.pad(x_cl, ((0, 0), (0, 0), (ph, ph), (pw, pw), (0, 0)))
    Hp, Wp = H + 2 * ph, W + 2 * pw
    To = (T - KT) // st + 1
    Ho = (Hp - KH) // sh + 1
    Wo = (Wp - KW) // sw + 1
    cols = []
    for kt in range(KT):
        for kh in range(KH):
            for kw in range(KW):
                cols.append(xp[:,
                               kt:kt + (To - 1) * st + 1:st,
                               kh:kh + (Ho - 1) * sh + 1:sh,
                               kw:kw + (Wo - 1) * sw + 1:sw, :])
    pat = jnp.stack(cols, axis=4)                      # (B, To, Ho, Wo, taps, Cin)
    a = pat.reshape(B * To * Ho * Wo, taps * Cin)
    out = _matmul_bias_pallas(a, wt.reshape(taps * Cin, Npad), bias_row)
    return out.reshape(B, To, Ho, Wo, Npad)


def _conv_core(x_cl, wt, bias_row, KT, KH, KW, st, sh, sw, ph, pw):
    if sh == 1 and sw == 1:
        return _fused_conv(x_cl, wt, bias_row, KT, KH, KW, st, ph, pw)
    # TODO(synk): extend the fused implicit-GEMM kernel to spatial stride 2.
    return _im2col_conv(x_cl, wt, bias_row, KT, KH, KW, st, sh, sw, ph, pw)


# ----------------------------------------------------------------------------
# jitted forward wrappers (NC[T]HW f32 module API, channels-last bf16 inside)
# ----------------------------------------------------------------------------
def _conv2d_fwd_impl(x, wt, bias_row, cout, ksize, stride, padding):
    KH, KW = ksize
    sh, sw = stride
    ph, pw = padding
    if x.ndim == 5:
        B, C, T, H, W = x.shape
        xc = jnp.transpose(x.astype(jnp.bfloat16), (0, 2, 3, 4, 1))
        xc = xc.reshape(B * T, H, W, C)[:, None]                 # (B*T, 1, H, W, C)
        y = _conv_core(xc, wt, bias_row, 1, KH, KW, 1, sh, sw, ph, pw)
        y = y[:, 0, :, :, :cout]                                 # (B*T, Ho, Wo, cout) bf16
        Ho, Wo = y.shape[1], y.shape[2]
        y = y.reshape(B, T, Ho, Wo, cout)
        return jnp.transpose(y, (0, 4, 1, 2, 3)).astype(jnp.float32)
    B, C, H, W = x.shape
    xc = jnp.transpose(x.astype(jnp.bfloat16), (0, 2, 3, 1))[:, None]   # (B, 1, H, W, C)
    y = _conv_core(xc, wt, bias_row, 1, KH, KW, 1, sh, sw, ph, pw)
    y = y[:, 0, :, :, :cout]
    return jnp.transpose(y, (0, 3, 1, 2)).astype(jnp.float32)


def _conv3d_fwd_impl(x, wt, bias_row, cout, ksize, stride, padding, slice_seq_len):
    KT, KH, KW = ksize
    st, sh, sw = stride
    p_t, p_h, p_w = padding
    assert st in (1, 2), 'only temporal stride = 1 or 2 are supported'
    T = x.shape[2]
    outs = []
    for i in range(0, T, slice_seq_len + st - 1):
        en = min(i + slice_seq_len, T)
        _x = x[:, :, i:en]
        if i == 0:
            _x = jnp.pad(_x, ((0, 0), (0, 0), (p_t, 0), (p_h, p_h), (p_w, p_w)))
        else:
            pad0 = KT - 1
            _x = jnp.pad(_x, ((0, 0), (0, 0), (pad0, 0), (p_h, p_h), (p_w, p_w)))
            _x = _x.at[:, :, :pad0,
                       p_h:_x.shape[-2] - p_h,
                       p_w:_x.shape[-1] - p_w].add(x[:, :, i - pad0:i])
        xc = jnp.transpose(_x.astype(jnp.bfloat16), (0, 2, 3, 4, 1))   # (B, T_i, H, W, C)
        y = _conv_core(xc, wt, bias_row, KT, KH, KW, st, sh, sw, 0, 0)
        outs.append(y[..., :cout])
    y = jnp.concatenate(outs, axis=1) if len(outs) > 1 else outs[0]
    return jnp.transpose(y, (0, 4, 1, 2, 3)).astype(jnp.float32)


_conv2d_fwd = jax.jit(_conv2d_fwd_impl, static_argnums=(3, 4, 5, 6))
_conv3d_fwd = jax.jit(_conv3d_fwd_impl, static_argnums=(3, 4, 5, 6, 7))


# ----------------------------------------------------------------------------
# Conv module (JAX port of the PyTorch module)
# ----------------------------------------------------------------------------
class Conv:
    def __init__(self, in_channels, out_channels, kernel_size, stride=1, padding=0,
                 cnn_type='2d', causal_offset=0, temporal_down=False, *, key):
        self.cnn_type = cnn_type
        self.slice_seq_len = 17
        self.causal_offset = causal_offset
        self.out_channels = out_channels

        if cnn_type == '2d':
            ks = (kernel_size,) * 2 if isinstance(kernel_size, int) else tuple(kernel_size)
            st = (stride,) * 2 if isinstance(stride, int) else tuple(stride)
            pd = (padding,) * 2 if isinstance(padding, int) else tuple(padding)
            self.ksize, self.conv_stride, self.conv_padding = ks, st, pd
            wshape = (out_channels, in_channels) + ks
            self.stride, self.kernel_size = stride, kernel_size
        elif cnn_type == '3d':
            st = (1, stride, stride) if temporal_down is False else (stride, stride, stride)
            ks = (kernel_size,) * 3 if isinstance(kernel_size, int) else tuple(kernel_size)
            self.ksize, self.conv_stride = ks, st
            self.padding = (ks[0] - 1 + causal_offset, padding, padding)
            wshape = (out_channels, in_channels) + ks
            self.stride, self.kernel_size = st, ks
        else:
            raise ValueError(cnn_type)

        # deterministic param init (matches PyTorch Conv default uniform bounds)
        fan_in = in_channels * int(math.prod(wshape[2:]))
        bound = 1.0 / math.sqrt(fan_in)
        kw_, kb_ = jax.random.split(key)
        self.weight = jax.random.uniform(kw_, wshape, jnp.float32, -bound, bound)
        self.bias = jax.random.uniform(kb_, (out_channels,), jnp.float32, -bound, bound)

        # Precompute tap-major (taps, Cin, Npad) bf16 weights once; lane-dense Npad
        # (256-aligned for wide layers to keep v6e/v7x 256-wide MXU passes packed).
        npad = _round_up(out_channels, 256) if out_channels >= 256 else _round_up(out_channels, 128)
        self.n_padded = npad
        if cnn_type == '2d':
            wm = jnp.transpose(self.weight, (2, 3, 1, 0)).reshape(-1, in_channels, out_channels)
        else:
            wm = jnp.transpose(self.weight, (2, 3, 4, 1, 0)).reshape(-1, in_channels, out_channels)
        self.wt = jnp.pad(wm, ((0, 0), (0, 0), (0, npad - out_channels))).astype(jnp.bfloat16)
        self.bias_row = jnp.pad(self.bias, (0, npad - out_channels)).reshape(1, npad).astype(jnp.float32)

    def __call__(self, x):
        if self.cnn_type == '2d':
            return _conv2d_fwd(x, self.wt, self.bias_row, self.out_channels,
                               self.ksize, self.conv_stride, self.conv_padding)
        return _conv3d_fwd(x, self.wt, self.bias_row, self.out_channels,
                           self.ksize, self.conv_stride, self.padding, self.slice_seq_len)


# ----------------------------------------------------------------------------
# Demo / correctness check
# ----------------------------------------------------------------------------
if __name__ == "__main__":
    root = jax.random.PRNGKey(0)
    k_x2, k_x3, k_c2, k_c3, k_c2s = jax.random.split(root, 5)

    # --- 2d path (fused implicit-GEMM kernel): x (2,4,16,16), Conv(4->8, k3, s1, p1) ---
    x2 = jax.random.normal(k_x2, (2, 4, 16, 16), jnp.float32)
    conv2 = Conv(4, 8, 3, stride=1, padding=1, cnn_type='2d', key=k_c2)
    y2 = jax.block_until_ready(conv2(x2))

    x2b = x2.astype(jnp.bfloat16).astype(jnp.float32)
    w2b = conv2.weight.astype(jnp.bfloat16).astype(jnp.float32)
    ref2 = lax.conv_general_dilated(
        x2b, w2b, window_strides=(1, 1), padding=((1, 1), (1, 1)),
        dimension_numbers=('NCHW', 'OIHW', 'NCHW'),
    ) + conv2.bias.reshape(1, -1, 1, 1)
    assert y2.shape == ref2.shape
    assert jnp.allclose(y2, ref2, atol=2e-2, rtol=2e-2), float(jnp.max(jnp.abs(y2 - ref2)))

    # --- 2d path applied to a 5-D input (B C T H W -> (B T) C H W collapse) ---
    x2_5d = jax.random.normal(k_x2, (1, 4, 3, 16, 16), jnp.float32)
    y2_5d = jax.block_until_ready(conv2(x2_5d))
    assert y2_5d.shape == (1, 8, 3, 16, 16)

    # --- strided 2d conv (im2col fallback kernel): Conv(4->8, k3, s2, p1) ---
    conv2s = Conv(4, 8, 3, stride=2, padding=1, cnn_type='2d', key=k_c2s)
    y2s = jax.block_until_ready(conv2s(x2))
    w2sb = conv2s.weight.astype(jnp.bfloat16).astype(jnp.float32)
    ref2s = lax.conv_general_dilated(
        x2b, w2sb, window_strides=(2, 2), padding=((1, 1), (1, 1)),
        dimension_numbers=('NCHW', 'OIHW', 'NCHW'),
    ) + conv2s.bias.reshape(1, -1, 1, 1)
    assert y2s.shape == ref2s.shape
    assert jnp.allclose(y2s, ref2s, atol=2e-2, rtol=2e-2), float(jnp.max(jnp.abs(y2s - ref2s)))

    # --- 3d causal path (fused kernel): x (1,4,5,8,8), Conv3d(4->8, k3, p1) ---
    x3 = jax.random.normal(k_x3, (1, 4, 5, 8, 8), jnp.float32)
    conv3 = Conv(4, 8, 3, stride=1, padding=1, cnn_type='3d', key=k_c3)
    y3 = jax.block_until_ready(conv3(x3))

    x3b = x3.astype(jnp.bfloat16).astype(jnp.float32)
    w3b = conv3.weight.astype(jnp.bfloat16).astype(jnp.float32)
    x3p = jnp.pad(x3b, ((0, 0), (0, 0), (2, 0), (1, 1), (1, 1)))  # causal T pad + spatial
    ref3 = lax.conv_general_dilated(
        x3p, w3b, window_strides=(1, 1, 1), padding='VALID',
        dimension_numbers=('NCDHW', 'OIDHW', 'NCDHW'),
    ) + conv3.bias.reshape(1, -1, 1, 1, 1)
    assert y3.shape == ref3.shape
    assert jnp.allclose(y3, ref3, atol=2e-2, rtol=2e-2), float(jnp.max(jnp.abs(y3 - ref3)))

    print("KERNEL_OK")
</pallas_src>

<mosaic_0001>
module attributes {stable_mosaic.version = 11 : i64} {
  func.func @kernel(%arg0: i32, %arg1: i32, %arg2: i32, %arg3: memref<1x1x1x18x18x4xbf16, #tpu.memory_space<vmem>>, %arg4: memref<9x4x128xbf16, #tpu.memory_space<vmem>>, %arg5: memref<1x128xf32, #tpu.memory_space<vmem>>, %arg6: memref<1x1x1x256x128xbf16, #tpu.memory_space<vmem>>, %arg7: memref<256x128xf32, #tpu.memory_space<vmem>>) attributes {dimension_semantics = [#tpu.dimension_semantics<parallel>, #tpu.dimension_semantics<parallel>, #tpu.dimension_semantics<parallel>], iteration_bounds = array<i64: 2, 1, 1>, scalar_prefetch = 0 : i64, scratch_operands = 1 : i64, tpu.core_type = #tpu.core_type<tc>, window_params = [{transform_indices = @transform_0, window_bounds = array<i64: 1, 1, 1, 18, 18, 4>}, {pipeline_mode = #tpu.pipeline_mode<synchronous>, transform_indices = @transform_1, window_bounds = array<i64: 9, 4, 128>}, {pipeline_mode = #tpu.pipeline_mode<synchronous>, transform_indices = @transform_2, window_bounds = array<i64: 1, 128>}, {transform_indices = @transform_3, window_bounds = array<i64: 1, 1, 1, 256, 128>}]} {
    %c0 = arith.constant 0 : index
    %c0_0 = arith.constant 0 : index
    %c0_1 = arith.constant 0 : index
    %c0_2 = arith.constant 0 : index
    %c0_3 = arith.constant 0 : index
    %c0_4 = arith.constant 0 : index
    %0 = vector.load %arg3[%c0, %c0_0, %c0_1, %c0_2, %c0_3, %c0_4] : memref<1x1x1x18x18x4xbf16, #tpu.memory_space<vmem>>, vector<1x1x1x16x16x4xbf16>
    %1 = vector.shape_cast %0 : vector<1x1x1x16x16x4xbf16> to vector<16x16x4xbf16>
    %2 = vector.shape_cast %1 : vector<16x16x4xbf16> to vector<256x4xbf16>
    %c0_5 = arith.constant 0 : index
    %c0_6 = arith.constant 0 : index
    %c0_7 = arith.constant 0 : index
    %3 = vector.load %arg4[%c0_5, %c0_6, %c0_7] : memref<9x4x128xbf16, #tpu.memory_space<vmem>>, vector<1x4x128xbf16>
    %4 = vector.shape_cast %3 : vector<1x4x128xbf16> to vector<4x128xbf16>
    %cst = arith.constant dense<0.000000e+00> : vector<256x128xf32>
    %5 = tpu.matmul %2, %4, %cst {dimension_numbers = #tpu.dot_dimension_numbers<[1], [0], [0], [1], [0, 0, 1, 1], [], []>} : vector<256x4xbf16>, vector<4x128xbf16>, vector<256x128xf32> -> vector<256x128xf32>
    %c0_8 = arith.constant 0 : index
    %c0_9 = arith.constant 0 : index
    %6 = vector.load %arg7[%c0_8, %c0_9] : memref<256x128xf32, #tpu.memory_space<vmem>>, vector<256x128xf32>
    tpu.vector_store %arg7[%c0_8, %c0_9], %5 {strides = array<i32>} : memref<256x128xf32, #tpu.memory_space<vmem>>, vector<256x128xf32>,
    %c0_10 = arith.constant 0 : index
    %c0_11 = arith.constant 0 : index
    %c0_12 = arith.constant 0 : index
    %c0_13 = arith.constant 0 : index
    %c1 = arith.constant 1 : index
    %c0_14 = arith.constant 0 : index
    %7 = vector.load %arg3[%c0_10, %c0_11, %c0_12, %c0_13, %c1, %c0_14] : memref<1x1x1x18x18x4xbf16, #tpu.memory_space<vmem>>, vector<1x1x1x16x16x4xbf16>
    %8 = vector.shape_cast %7 : vector<1x1x1x16x16x4xbf16> to vector<16x16x4xbf16>
    %9 = vector.shape_cast %8 : vector<16x16x4xbf16> to vector<256x4xbf16>
    %c1_15 = arith.constant 1 : index
    %c0_16 = arith.constant 0 : index
    %c0_17 = arith.constant 0 : index
    %10 = vector.load %arg4[%c1_15, %c0_16, %c0_17] : memref<9x4x128xbf16, #tpu.memory_space<vmem>>, vector<1x4x128xbf16>
    %11 = vector.shape_cast %10 : vector<1x4x128xbf16> to vector<4x128xbf16>
    %cst_18 = arith.constant dense<0.000000e+00> : vector<256x128xf32>
    %12 = tpu.matmul %9, %11, %cst_18 {dimension_numbers = #tpu.dot_dimension_numbers<[1], [0], [0], [1], [0, 0, 1, 1], [], []>} : vector<256x4xbf16>, vector<4x128xbf16>, vector<256x128xf32> -> vector<256x128xf32>
    %c0_19 = arith.constant 0 : index
    %c0_20 = arith.constant 0 : index
    %13 = vector.load %arg7[%c0_19, %c0_20] : memref<256x128xf32, #tpu.memory_space<vmem>>, vector<256x128xf32>
    %14 = arith.addf %13, %12 : vector<256x128xf32>
    %c0_21 = arith.constant 0 : index
    %c0_22 = arith.constant 0 : index
    %15 = vector.load %arg7[%c0_21, %c0_22] : memref<256x128xf32, #tpu.memory_space<vmem>>, vector<256x128xf32>
    tpu.vector_store %arg7[%c0_21, %c0_22], %14 {strides = array<i32>} : memref<256x128xf32, #tpu.memory_space<vmem>>, vector<256x128xf32>,
    %c0_23 = arith.constant 0 : index
    %c0_24 = arith.constant 0 : index
    %c0_25 = arith.constant 0 : index
    %c0_26 = arith.constant 0 : index
    %c2 = arith.constant 2 : index
    %c0_27 = arith.constant 0 : index
    %16 = vector.load %arg3[%c0_23, %c0_24, %c0_25, %c0_26, %c2, %c0_27] : memref<1x1x1x18x18x4xbf16, #tpu.memory_space<vmem>>, vector<1x1x1x16x16x4xbf16>
    %17 = vector.shape_cast %16 : vector<1x1x1x16x16x4xbf16> to vector<16x16x4xbf16>
    %18 = vector.shape_cast %17 : vector<16x16x4xbf16> to vector<256x4xbf16>
    %c2_28 = arith.constant 2 : index
    %c0_29 = arith.constant 0 : index
    %c0_30 = arith.constant 0 : index
    %19 = vector.load %arg4[%c2_28, %c0_29, %c0_30] : memref<9x4x128xbf16, #tpu.memory_space<vmem>>, vector<1x4x128xbf16>
    %20 = vector.shape_cast %19 : vector<1x4x128xbf16> to vector<4x128xbf16>
    %cst_31 = arith.constant dense<0.000000e+00> : vector<256x128xf32>
    %21 = tpu.matmul %18, %20, %cst_31 {dimension_numbers = #tpu.dot_dimension_numbers<[1], [0], [0], [1], [0, 0, 1, 1], [], []>} : vector<256x4xbf16>, vector<4x128xbf16>, vector<256x128xf32> -> vector<256x128xf32>
    %c0_32 = arith.constant 0 : index
    %c0_33 = arith.constant 0 : index
    %22 = vector.load %arg7[%c0_32, %c0_33] : memref<256x128xf32, #tpu.memory_space<vmem>>, vector<256x128xf32>
    %23 = arith.addf %22, %21 : vector<256x128xf32>
    %c0_34 = arith.constant 0 : index
    %c0_35 = arith.constant 0 : index
    %24 = vector.load %arg7[%c0_34, %c0_35] : memref<256x128xf32, #tpu.memory_space<vmem>>, vector<256x128xf32>
    tpu.vector_store %arg7[%c0_34, %c0_35], %23 {strides = array<i32>} : memref<256x128xf32, #tpu.memory_space<vmem>>, vector<256x128xf32>,
    %c0_36 = arith.constant 0 : index
    %c0_37 = arith.constant 0 : index
    %c0_38 = arith.constant 0 : index
    %c1_39 = arith.constant 1 : index
    %c0_40 = arith.constant 0 : index
    %c0_41 = arith.constant 0 : index
    %25 = vector.load %arg3[%c0_36, %c0_37, %c0_38, %c1_39, %c0_40, %c0_41] : memref<1x1x1x18x18x4xbf16, #tpu.memory_space<vmem>>, vector<1x1x1x16x16x4xbf16>
    %26 = vector.shape_cast %25 : vector<1x1x1x16x16x4xbf16> to vector<16x16x4xbf16>
    %27 = vector.shape_cast %26 : vector<16x16x4xbf16> to vector<256x4xbf16>
    %c3 = arith.constant 3 : index
    %c0_42 = arith.constant 0 : index
    %c0_43 = arith.constant 0 : index
    %28 = vector.load %arg4[%c3, %c0_42, %c0_43] : memref<9x4x128xbf16, #tpu.memory_space<vmem>>, vector<1x4x128xbf16>
    %29 = vector.shape_cast %28 : vector<1x4x128xbf16> to vector<4x128xbf16>
    %cst_44 = arith.constant dense<0.000000e+00> : vector<256x128xf32>
    %30 = tpu.matmul %27, %29, %cst_44 {dimension_numbers = #tpu.dot_dimension_numbers<[1], [0], [0], [1], [0, 0, 1, 1], [], []>} : vector<256x4xbf16>, vector<4x128xbf16>, vector<256x128xf32> -> vector<256x128xf32>
    %c0_45 = arith.constant 0 : index
    %c0_46 = arith.constant 0 : index
    %31 = vector.load %arg7[%c0_45, %c0_46] : memref<256x128xf32, #tpu.memory_space<vmem>>, vector<256x128xf32>
    %32 = arith.addf %31, %30 : vector<256x128xf32>
    %c0_47 = arith.constant 0 : index
    %c0_48 = arith.constant 0 : index
    %33 = vector.load %arg7[%c0_47, %c0_48] : memref<256x128xf32, #tpu.memory_space<vmem>>, vector<256x128xf32>
    tpu.vector_store %arg7[%c0_47, %c0_48], %32 {strides = array<i32>} : memref<256x128xf32, #tpu.memory_space<vmem>>, vector<256x128xf32>,
    %c0_49 = arith.constant 0 : index
    %c0_50 = arith.constant 0 : index
    %c0_51 = arith.constant 0 : index
    %c1_52 = arith.constant 1 : index
    %c1_53 = arith.constant 1 : index
    %c0_54 = arith.constant 0 : index
    %34 = vector.load %arg3[%c0_49, %c0_50, %c0_51, %c1_52, %c1_53, %c0_54] : memref<1x1x1x18x18x4xbf16, #tpu.memory_space<vmem>>, vector<1x1x1x16x16x4xbf16>
    %35 = vector.shape_cast %34 : vector<1x1x1x16x16x4xbf16> to vector<16x16x4xbf16>
    %36 = vector.shape_cast %35 : vector<16x16x4xbf16> to vector<256x4xbf16>
    %c4 = arith.constant 4 : index
    %c0_55 = arith.constant 0 : index
    %c0_56 = arith.constant 0 : index
    %37 = vector.load %arg4[%c4, %c0_55, %c0_56] : memref<9x4x128xbf16, #tpu.memory_space<vmem>>, vector<1x4x128xbf16>
    %38 = vector.shape_cast %37 : vector<1x4x128xbf16> to vector<4x128xbf16>
    %cst_57 = arith.constant dense<0.000000e+00> : vector<256x128xf32>
    %39 = tpu.matmul %36, %38, %cst_57 {dimension_numbers = #tpu.dot_dimension_numbers<[1], [0], [0], [1], [0, 0, 1, 1], [], []>} : vector<256x4xbf16>, vector<4x128xbf16>, vector<256x128xf32> -> vector<256x128xf32>
    %c0_58 = arith.constant 0 : index
    %c0_59 = arith.constant 0 : index
    %40 = vector.load %arg7[%c0_58, %c0_59] : memref<256x128xf32, #tpu.memory_space<vmem>>, vector<256x128xf32>
    %41 = arith.addf %40, %39 : vector<256x128xf32>
    %c0_60 = arith.constant 0 : index
    %c0_61 = arith.constant 0 : index
    %42 = vector.load %arg7[%c0_60, %c0_61] : memref<256x128xf32, #tpu.memory_space<vmem>>, vector<256x128xf32>
    tpu.vector_store %arg7[%c0_60, %c0_61], %41 {strides = array<i32>} : memref<256x128xf32, #tpu.memory_space<vmem>>, vector<256x128xf32>,
    %c0_62 = arith.constant 0 : index
    %c0_63 = arith.constant 0 : index
    %c0_64 = arith.constant 0 : index
    %c1_65 = arith.constant 1 : index
    %c2_66 = arith.constant 2 : index
    %c0_67 = arith.constant 0 : index
    %43 = vector.load %arg3[%c0_62, %c0_63, %c0_64, %c1_65, %c2_66, %c0_67] : memref<1x1x1x18x18x4xbf16, #tpu.memory_space<vmem>>, vector<1x1x1x16x16x4xbf16>
    %44 = vector.shape_cast %43 : vector<1x1x1x16x16x4xbf16> to vector<16x16x4xbf16>
    %45 = vector.shape_cast %44 : vector<16x16x4xbf16> to vector<256x4xbf16>
    %c5 = arith.constant 5 : index
    %c0_68 = arith.constant 0 : index
    %c0_69 = arith.constant 0 : index
    %46 = vector.load %arg4[%c5, %c0_68, %c0_69] : memref<9x4x128xbf16, #tpu.memory_space<vmem>>, vector<1x4x128xbf16>
    %47 = vector.shape_cast %46 : vector<1x4x128xbf16> to vector<4x128xbf16>
    %cst_70 = arith.constant dense<0.000000e+00> : vector<256x128xf32>
    %48 = tpu.matmul %45, %47, %cst_70 {dimension_numbers = #tpu.dot_dimension_numbers<[1], [0], [0], [1], [0, 0, 1, 1], [], []>} : vector<256x4xbf16>, vector<4x128xbf16>, vector<256x128xf32> -> vector<256x128xf32>
    %c0_71 = arith.constant 0 : index
    %c0_72 = arith.constant 0 : index
    %49 = vector.load %arg7[%c0_71, %c0_72] : memref<256x128xf32, #tpu.memory_space<vmem>>, vector<256x128xf32>
    %50 = arith.addf %49, %48 : vector<256x128xf32>
    %c0_73 = arith.constant 0 : index
    %c0_74 = arith.constant 0 : index
    %51 = vector.load %arg7[%c0_73, %c0_74] : memref<256x128xf32, #tpu.memory_space<vmem>>, vector<256x128xf32>
    tpu.vector_store %arg7[%c0_73, %c0_74], %50 {strides = array<i32>} : memref<256x128xf32, #tpu.memory_space<vmem>>, vector<256x128xf32>,
    %c0_75 = arith.constant 0 : index
    %c0_76 = arith.constant 0 : index
    %c0_77 = arith.constant 0 : index
    %c2_78 = arith.constant 2 : index
    %c0_79 = arith.constant 0 : index
    %c0_80 = arith.constant 0 : index
    %52 = vector.load %arg3[%c0_75, %c0_76, %c0_77, %c2_78, %c0_79, %c0_80] : memref<1x1x1x18x18x4xbf16, #tpu.memory_space<vmem>>, vector<1x1x1x16x16x4xbf16>
    %53 = vector.shape_cast %52 : vector<1x1x1x16x16x4xbf16> to vector<16x16x4xbf16>
    %54 = vector.shape_cast %53 : vector<16x16x4xbf16> to vector<256x4xbf16>
    %c6 = arith.constant 6 : index
    %c0_81 = arith.constant 0 : index
    %c0_82 = arith.constant 0 : index
    %55 = vector.load %arg4[%c6, %c0_81, %c0_82] : memref<9x4x128xbf16, #tpu.memory_space<vmem>>, vector<1x4x128xbf16>
    %56 = vector.shape_cast %55 : vector<1x4x128xbf16> to vector<4x128xbf16>
    %cst_83 = arith.constant dense<0.000000e+00> : vector<256x128xf32>
    %57 = tpu.matmul %54, %56, %cst_83 {dimension_numbers = #tpu.dot_dimension_numbers<[1], [0], [0], [1], [0, 0, 1, 1], [], []>} : vector<256x4xbf16>, vector<4x128xbf16>, vector<256x128xf32> -> vector<256x128xf32>
    %c0_84 = arith.constant 0 : index
    %c0_85 = arith.constant 0 : index
    %58 = vector.load %arg7[%c0_84, %c0_85] : memref<256x128xf32, #tpu.memory_space<vmem>>, vector<256x128xf32>
    %59 = arith.addf %58, %57 : vector<256x128xf32>
    %c0_86 = arith.constant 0 : index
    %c0_87 = arith.constant 0 : index
    %60 = vector.load %arg7[%c0_86, %c0_87] : memref<256x128xf32, #tpu.memory_space<vmem>>, vector<256x128xf32>
    tpu.vector_store %arg7[%c0_86, %c0_87], %59 {strides = array<i32>} : memref<256x128xf32, #tpu.memory_space<vmem>>, vector<256x128xf32>,
    %c0_88 = arith.constant 0 : index
    %c0_89 = arith.constant 0 : index
    %c0_90 = arith.constant 0 : index
    %c2_91 = arith.constant 2 : index
    %c1_92 = arith.constant 1 : index
    %c0_93 = arith.constant 0 : index
    %61 = vector.load %arg3[%c0_88, %c0_89, %c0_90, %c2_91, %c1_92, %c0_93] : memref<1x1x1x18x18x4xbf16, #tpu.memory_space<vmem>>, vector<1x1x1x16x16x4xbf16>
    %62 = vector.shape_cast %61 : vector<1x1x1x16x16x4xbf16> to vector<16x16x4xbf16>
    %63 = vector.shape_cast %62 : vector<16x16x4xbf16> to vector<256x4xbf16>
    %c7 = arith.constant 7 : index
    %c0_94 = arith.constant 0 : index
    %c0_95 = arith.constant 0 : index
    %64 = vector.load %arg4[%c7, %c0_94, %c0_95] : memref<9x4x128xbf16, #tpu.memory_space<vmem>>, vector<1x4x128xbf16>
    %65 = vector.shape_cast %64 : vector<1x4x128xbf16> to vector<4x128xbf16>
    %cst_96 = arith.constant dense<0.000000e+00> : vector<256x128xf32>
    %66 = tpu.matmul %63, %65, %cst_96 {dimension_numbers = #tpu.dot_dimension_numbers<[1], [0], [0], [1], [0, 0, 1, 1], [], []>} : vector<256x4xbf16>, vector<4x128xbf16>, vector<256x128xf32> -> vector<256x128xf32>
    %c0_97 = arith.constant 0 : index
    %c0_98 = arith.constant 0 : index
    %67 = vector.load %arg7[%c0_97, %c0_98] : memref<256x128xf32, #tpu.memory_space<vmem>>, vector<256x128xf32>
    %68 = arith.addf %67, %66 : vector<256x128xf32>
    %c0_99 = arith.constant 0 : index
    %c0_100 = arith.constant 0 : index
    %69 = vector.load %arg7[%c0_99, %c0_100] : memref<256x128xf32, #tpu.memory_space<vmem>>, vector<256x128xf32>
    tpu.vector_store %arg7[%c0_99, %c0_100], %68 {strides = array<i32>} : memref<256x128xf32, #tpu.memory_space<vmem>>, vector<256x128xf32>,
    %c0_101 = arith.constant 0 : index
    %c0_102 = arith.constant 0 : index
    %c0_103 = arith.constant 0 : index
    %c2_104 = arith.constant 2 : index
    %c2_105 = arith.constant 2 : index
    %c0_106 = arith.constant 0 : index
    %70 = vector.load %arg3[%c0_101, %c0_102, %c0_103, %c2_104, %c2_105, %c0_106] : memref<1x1x1x18x18x4xbf16, #tpu.memory_space<vmem>>, vector<1x1x1x16x16x4xbf16>
    %71 = vector.shape_cast %70 : vector<1x1x1x16x16x4xbf16> to vector<16x16x4xbf16>
    %72 = vector.shape_cast %71 : vector<16x16x4xbf16> to vector<256x4xbf16>
    %c8 = arith.constant 8 : index
    %c0_107 = arith.constant 0 : index
    %c0_108 = arith.constant 0 : index
    %73 = vector.load %arg4[%c8, %c0_107, %c0_108] : memref<9x4x128xbf16, #tpu.memory_space<vmem>>, vector<1x4x128xbf16>
    %74 = vector.shape_cast %73 : vector<1x4x128xbf16> to vector<4x128xbf16>
    %cst_109 = arith.constant dense<0.000000e+00> : vector<256x128xf32>
    %75 = tpu.matmul %72, %74, %cst_109 {dimension_numbers = #tpu.dot_dimension_numbers<[1], [0], [0], [1], [0, 0, 1, 1], [], []>} : vector<256x4xbf16>, vector<4x128xbf16>, vector<256x128xf32> -> vector<256x128xf32>
    %c0_110 = arith.constant 0 : index
    %c0_111 = arith.constant 0 : index
    %76 = vector.load %arg7[%c0_110, %c0_111] : memref<256x128xf32, #tpu.memory_space<vmem>>, vector<256x128xf32>
    %77 = arith.addf %76, %75 : vector<256x128xf32>
    %c0_112 = arith.constant 0 : index
    %c0_113 = arith.constant 0 : index
    %78 = vector.load %arg7[%c0_112, %c0_113] : memref<256x128xf32, #tpu.memory_space<vmem>>, vector<256x128xf32>
    tpu.vector_store %arg7[%c0_112, %c0_113], %77 {strides = array<i32>} : memref<256x128xf32, #tpu.memory_space<vmem>>, vector<256x128xf32>,
    %c0_114 = arith.constant 0 : index
    %c0_115 = arith.constant 0 : index
    %79 = vector.load %arg7[%c0_114, %c0_115] : memref<256x128xf32, #tpu.memory_space<vmem>>, vector<256x128xf32>
    %c0_116 = arith.constant 0 : index
    %c0_117 = arith.constant 0 : index
    %80 = vector.load %arg5[%c0_116, %c0_117] : memref<1x128xf32, #tpu.memory_space<vmem>>, vector<1x128xf32>
    %81 = vector.broadcast %80 : vector<1x128xf32> to vector<256x128xf32>
    %82 = arith.addf %79, %81 : vector<256x128xf32>
    %83 = arith.truncf %82 : vector<256x128xf32> to vector<256x128xbf16>
    %c0_118 = arith.constant 0 : index
    %c0_119 = arith.constant 0 : index
    %c0_120 = arith.constant 0 : index
    %c0_121 = arith.constant 0 : index
    %c0_122 = arith.constant 0 : index
    %84 = vector.load %arg6[%c0_118, %c0_119, %c0_120, %c0_121, %c0_122] : memref<1x1x1x256x128xbf16, #tpu.memory_space<vmem>>, vector<1x1x1x256x128xbf16>
    %85 = vector.shape_cast %84 : vector<1x1x1x256x128xbf16> to vector<256x128xbf16>
    %86 = vector.shape_cast %83 : vector<256x128xbf16> to vector<1x1x1x256x128xbf16>
    tpu.vector_store %arg6[%c0_118, %c0_119, %c0_120, %c0_121, %c0_122], %86 {strides = array<i32>} : memref<1x1x1x256x128xbf16, #tpu.memory_space<vmem>>, vector<1x1x1x256x128xbf16>,
    return
  }
  func.func @transform_0(%arg0: i32, %arg1: i32, %arg2: i32) -> (i32, i32, i32, i32, i32, i32) {
    %c1_i32 = arith.constant 1 : i32
    %0 = arith.muli %arg1, %c1_i32 : i32
    %c0_i32 = arith.constant 0 : i32
    %1 = arith.addi %0, %c0_i32 : i32
    %c0_i32_0 = arith.constant 0 : i32
    %c0_i32_1 = arith.constant 0 : i32
    %c0_i32_2 = arith.constant 0 : i32
    %c0_i32_3 = arith.constant 0 : i32
    return %arg0, %1, %arg2, %c0_i32_0, %c0_i32_1, %c0_i32_2 : i32, i32, i32, i32, i32, i32
  }
  func.func @transform_1(%arg0: i32, %arg1: i32, %arg2: i32) -> (i32, i32, i32) {
    %c0_i32 = arith.constant 0 : i32
    %c0_i32_0 = arith.constant 0 : i32
    %c0_i32_1 = arith.constant 0 : i32
    %c0_i32_2 = arith.constant 0 : i32
    return %c0_i32, %c0_i32_0, %c0_i32_1 : i32, i32, i32
  }
  func.func @transform_2(%arg0: i32, %arg1: i32, %arg2: i32) -> (i32, i32) {
    %c0_i32 = arith.constant 0 : i32
    %c0_i32_0 = arith.constant 0 : i32
    %c0_i32_1 = arith.constant 0 : i32
    return %c0_i32, %c0_i32_0 : i32, i32
  }
  func.func @transform_3(%arg0: i32, %arg1: i32, %arg2: i32) -> (i32, i32, i32, i32, i32) {
    %c0_i32 = arith.constant 0 : i32
    %c0_i32_0 = arith.constant 0 : i32
    %c0_i32_1 = arith.constant 0 : i32
    return %arg0, %arg1, %arg2, %c0_i32, %c0_i32_0 : i32, i32, i32, i32, i32
  }
}

</mosaic_0001>

<llo_original>
// kernel: _conv2d_fwd_impl.1
$region0: #{_conv2d_fwd_impl.1}
  #allocation0 [shape = 'u32[]', space=smem, size = 0x4, offset = 0x4, fixed_abs, tag = 'smem constant byte address 0x4 - core index']
  #allocation1 [shape = 'u32[72,128]{1,0:T(1,128)}', space=vmem, size = 0x9000, scoped, tag = 'internal scratch']
  #allocation2 [shape = 'f32[256,128]{1,0:T(8,128)}', space=vmem, size = 0x20000, scoped, tag = 'scratch operand']
  %s0 = inlined_call_operand.vmem [shape: bf16[2,1,1,18,18,4], index: 0, kind: input, shape index: {}]
  %s1 = inlined_call_operand.vmem [shape: bf16[9,4,128], index: 1, kind: input, shape index: {}]
  %s2 = inlined_call_operand.vmem [shape: f32[1,128], index: 2, kind: input, shape index: {}]
  %s3 = inlined_call_operand.vmem [shape: bf16[2,1,1,256,128], index: 3, kind: output, shape index: {}]
  %s4 = sld [smem:[#allocation0]]
  $region45: #{_conv2d_fwd_impl.1} parent=0
    _
  %s6 = ssub.s32 1, %s4
  %s7 = scalar_select 0, %s6, %s4
  loop: start=0, step=1, limit=4
  $region2: #{_conv2d_fwd_impl.1} parent=0 // loop_pre_header
    _
  $region3: #{_conv2d_fwd_impl.1} parent=0 // loop_header
    %s9 = sphi 0, %s13
    %p10 = scmp.ge.s32.totalorder %s9, 4
    %s16 = sphi 0, %s35
    %s17 = sphi 0, %s31
    %s18 = sphi 0, %s27
    %s19 = sphi 0, %s16
    %s20 = sphi 0, %s17
    %s21 = sphi 0, %s18
    %s22 = sphi 0, %s19
    %s23 = sphi 0, %s20
    %s24 = sphi 0, %s21
    %s42 = sphi 0, %s44
    %s45 = sphi 0, %s42
    %s46 = sphi 0, %s45
    %s62 = sphi 0, %s46
    %s66 = sphi 0, %s66
    %s68 = sphi 0, %s66
    %s69 = sphi 0, %s68
    %s83 = sphi 0, %s69
    %s87 = sphi 0, %s87
    %s89 = sphi 0, %s87
    %s90 = sphi 0, %s89
    %s104 = sphi 0, %s90
    %s114 = sphi 0, %s116
    %s117 = sphi 0, %s114
    %s118 = sphi 0, %s117
    %s134 = sphi 0, %s118
  $region4: #{_conv2d_fwd_impl.1} parent=0 // loop_header_branch
    %12 = sbr.rel (%p10) target = $region8
  $region5: #{_conv2d_fwd_impl.1} parent=0 // loop_body
    %s14 = ssub.s32 %s9, 1
    %s15 = ssub.s32 %s9, 2
    %s25 = sadd.s32 1, %s18
    %p26 = scmp.ge.s32.totalorder %s25, 1
    %s27 = scalar_select %p26, 0, %s25
    %s28 = sadd.s32 1, %s17
    %s29 = scalar_select %p26, %s28, %s17
    %p30 = scmp.ge.s32.totalorder %s29, 1
    %s31 = scalar_select %p30, 0, %s29
    %s32 = sadd.s32 1, %s16
    %s33 = scalar_select %p30, %s32, %s16
    %p34 = scmp.ge.s32.totalorder %s33, 2
    %s35 = scalar_select %p34, 0, %s33
    %s36 = ssub.s32 %s16, %s35
    %s37 = ssub.s32 %s17, %s31
    %s38 = sor.u32 %s36, %s37
    %s39 = ssub.s32 %s18, %s27
    %s40 = sor.u32 %s38, %s39
    %p41 = scmp.eq.s32.totalorder %s40, 0
    %s43 = sadd.s32 %s42, 1
    %s44 = scalar_select %p41, %s42, %s43
    %p47 = pneg %p41
    %p48 = scmp.eq.s32.totalorder %s9, 1
    %p49 = por %p47, %p48
    %p50 = scmp.ne.s32.totalorder %s42, %s45
    %p51 = scmp.eq.s32.totalorder %s9, 0
    %p52 = por %p50, %p51
    %p53 = scmp.ne.s32.totalorder %s42, %s45
    %p54 = scmp.eq.s32.totalorder %s14, 1
    %p55 = por %p53, %p54
    %p56 = scmp.ne.s32.totalorder %s45, %s46
    %p57 = scmp.eq.s32.totalorder %s14, 0
    %p58 = por %p56, %p57
    %p59 = scmp.ne.s32.totalorder %s45, %s46
    %p60 = scmp.eq.s32.totalorder %s15, 1
    %p61 = por %p59, %p60
    %p63 = scmp.ne.s32.totalorder %s46, %s62
    %p64 = scmp.eq.s32.totalorder %s15, 0
    %p65 = por %p63, %p64
    %s67 = sadd.s32 %s66, 1
    %p70 = scmp.eq.s32.totalorder %s9, 1
    %p71 = scmp.ne.s32.totalorder %s66, %s68
    %p72 = scmp.eq.s32.totalorder %s9, 0
    %p73 = por %p71, %p72
    %p74 = scmp.ne.s32.totalorder %s66, %s68
    %p75 = scmp.eq.s32.totalorder %s14, 1
    %p76 = por %p74, %p75
    %p77 = scmp.ne.s32.totalorder %s68, %s69
    %p78 = scmp.eq.s32.totalorder %s14, 0
    %p79 = por %p77, %p78
    %p80 = scmp.ne.s32.totalorder %s68, %s69
    %p81 = scmp.eq.s32.totalorder %s15, 1
    %p82 = por %p80, %p81
    %p84 = scmp.ne.s32.totalorder %s69, %s83
    %p85 = scmp.eq.s32.totalorder %s15, 0
    %p86 = por %p84, %p85
    %s88 = sadd.s32 %s87, 1
    %p91 = scmp.eq.s32.totalorder %s9, 1
    %p92 = scmp.ne.s32.totalorder %s87, %s89
    %p93 = scmp.eq.s32.totalorder %s9, 0
    %p94 = por %p92, %p93
    %p95 = scmp.ne.s32.totalorder %s87, %s89
    %p96 = scmp.eq.s32.totalorder %s14, 1
    %p97 = por %p95, %p96
    %p98 = scmp.ne.s32.totalorder %s89, %s90
    %p99 = scmp.eq.s32.totalorder %s14, 0
    %p100 = por %p98, %p99
    %p101 = scmp.ne.s32.totalorder %s89, %s90
    %p102 = scmp.eq.s32.totalorder %s15, 1
    %p103 = por %p101, %p102
    %p105 = scmp.ne.s32.totalorder %s90, %s104
    %p106 = scmp.eq.s32.totalorder %s15, 0
    %p107 = por %p105, %p106
    %s108 = ssub.s32 %s16, %s35
    %s109 = ssub.s32 %s17, %s31
    %s110 = sor.u32 %s108, %s109
    %s111 = ssub.s32 %s18, %s27
    %s112 = sor.u32 %s110, %s111
    %p113 = scmp.eq.s32.totalorder %s112, 0
    %s115 = sadd.s32 %s114, 1
    %s116 = scalar_select %p113, %s114, %s115
    %p119 = pneg %p113
    %p120 = scmp.eq.s32.totalorder %s9, 1
    %p121 = por %p119, %p120
    %p122 = scmp.ne.s32.totalorder %s114, %s117
    %p123 = scmp.eq.s32.totalorder %s9, 0
    %p124 = por %p122, %p123
    %p125 = scmp.ne.s32.totalorder %s114, %s117
    %p126 = scmp.eq.s32.totalorder %s14, 1
    %p127 = por %p125, %p126
    %p128 = scmp.ne.s32.totalorder %s117, %s118
    %p129 = scmp.eq.s32.totalorder %s14, 0
    %p130 = por %p128, %p129
    %p131 = scmp.ne.s32.totalorder %s117, %s118
    %p132 = scmp.eq.s32.totalorder %s15, 1
    %p133 = por %p131, %p132
    %p135 = scmp.ne.s32.totalorder %s118, %s134
    %p136 = scmp.eq.s32.totalorder %s15, 0
    %p137 = por %p135, %p136
    %p138 = scmp.le.s32.totalorder 1, %s9
    %p139 = scmp.lt.s32.totalorder %s9, 3
    %p140 = pnand %p138, %p139
    %p141 = pneg %p140
    // Predicated region
    $region9: #{_conv2d_fwd_impl.1} parent=5 // pred_check
      _
    $region10: #{_conv2d_fwd_impl.1} parent=5 // pred_check_branch
      %143 = sbr.rel (%p140) target = $region12
    $region11: #{_conv2d_fwd_impl.1} parent=5 // pred_region
      %s144 = ssub.s32 %s9, 1
      // Predicated region
      $region13: #{_conv2d_fwd_impl.1} parent=11 // pred_check
        %p145 = pneg %p79
      $region14: #{_conv2d_fwd_impl.1} parent=11 // pred_check_branch
        %147 = sbr.rel (%p145) target = $region16
      $region15: #{_conv2d_fwd_impl.1} parent=11 // pred_region
        _
      $region16: #{_conv2d_fwd_impl.1} parent=11 // pred_fallthru
        _
      // Predicated region
      $region17: #{_conv2d_fwd_impl.1} parent=11 // pred_check
        %p148 = pneg %p100
      $region18: #{_conv2d_fwd_impl.1} parent=11 // pred_check_branch
        %150 = sbr.rel (%p148) target = $region20
      $region19: #{_conv2d_fwd_impl.1} parent=11 // pred_region
        _
      $region20: #{_conv2d_fwd_impl.1} parent=11 // pred_fallthru
        _
    $region12: #{_conv2d_fwd_impl.1} parent=5 // pred_fallthru
      _
    %p151 = scmp.lt.s32.totalorder %s9, 2
    // Predicated region
    $region21: #{_conv2d_fwd_impl.1} parent=5 // pred_check
      %p152 = pneg %p151
    $region22: #{_conv2d_fwd_impl.1} parent=5 // pred_check_branch
      %154 = sbr.rel (%p152) target = $region24
    $region23: #{_conv2d_fwd_impl.1} parent=5 // pred_region
      // Predicated region
      $region25: #{_conv2d_fwd_impl.1} parent=23 // pred_check
        %p155 = pneg %p52
      $region26: #{_conv2d_fwd_impl.1} parent=23 // pred_check_branch
        %157 = sbr.rel (%p155) target = $region28
      $region27: #{_conv2d_fwd_impl.1} parent=23 // pred_region
        %p158 = scmp.lt.s32.totalorder %s16, 1
        %s159 = scalar_select %p158, %s16, 1
        %p160 = scmp.lt.s32.totalorder %s17, 0
        %s161 = scalar_select %p160, %s17, 0
        %p162 = scmp.lt.s32.totalorder %s18, 0
        %s163 = scalar_select %p162, %s18, 0
        %s164 = smul.addr %s163, 54
        %s165 = smul.addr %s161, 54
        %s166 = sadd.s32 %s164, %s165
        %s167 = smul.addr %s159, 54
        %s168 = sadd.s32 %s166, %s167
        %s169 = smul.addr %s168, 4
        %s170 = scalar_lea.vmem %s0, %s169
      $region28: #{_conv2d_fwd_impl.1} parent=23 // pred_fallthru
        _
    $region24: #{_conv2d_fwd_impl.1} parent=5 // pred_fallthru
      _
    %p171 = scmp.le.s32.totalorder 1, %s9
    %p172 = scmp.lt.s32.totalorder %s9, 3
    %p173 = pnand %p171, %p172
    %p174 = pneg %p173
    // Predicated region
    $region29: #{_conv2d_fwd_impl.1} parent=5 // pred_check
      _
    $region30: #{_conv2d_fwd_impl.1} parent=5 // pred_check_branch
      %176 = sbr.rel (%p173) target = $region32
    $region31: #{_conv2d_fwd_impl.1} parent=5 // pred_region
      %s177 = ssub.s32 %s9, 1
      %p178 = scmp.lt.s32.totalorder %s19, 1
      %s179 = scalar_select %p178, %s19, 1
      %p180 = scmp.lt.s32.totalorder %s20, 0
      %s181 = scalar_select %p180, %s20, 0
      %p182 = scmp.lt.s32.totalorder %s21, 0
      %s183 = scalar_select %p182, %s21, 0
      %s184 = smul.addr %s183, 54
      %s185 = smul.addr %s181, 54
      %s186 = sadd.s32 %s184, %s185
      %s187 = smul.addr %s179, 54
      %s188 = sadd.s32 %s186, %s187
      %s189 = smul.addr %s188, 4
      %s190 = scalar_lea.vmem %s0, %s189
      %p191 = pneg %p58
      %p192 = pneg %p55
      %p193 = pneg %p79
      %p194 = pneg %p76
      %p195 = pneg %p100
      %p196 = pneg %p97
      %p197 = pneg %p130
      %p198 = pneg %p127
      %p199 = scmp.lt.s32.totalorder %s19, 1
      %s200 = scalar_select %p199, %s19, 1
      %p201 = scmp.lt.s32.totalorder %s20, 0
      %s202 = scalar_select %p201, %s20, 0
      %p203 = scmp.lt.s32.totalorder %s21, 0
      %s204 = scalar_select %p203, %s21, 0
      %s205 = smul.addr %s204, 32
      %s206 = smul.addr %s202, 32
      %s207 = sadd.s32 %s205, %s206
      %s208 = smul.addr %s200, 32
      %s209 = sadd.s32 %s207, %s208
      %s210 = smul.addr %s209, 4
      %s211 = scalar_lea.vmem %s3, %s210
      %p212 = scmp.lt.s32.totalorder %s19, 1
      %s213 = scalar_select %p212, %s19, 1
      %p214 = scmp.lt.s32.totalorder %s20, 0
      %s215 = scalar_select %p214, %s20, 0
      %p216 = scmp.lt.s32.totalorder %s21, 0
      %s217 = scalar_select %p216, %s21, 0
      %s218 = smul.addr %s217, 54
      %s219 = smul.addr %s215, 54
      %s220 = sadd.s32 %s218, %s219
      %s221 = smul.addr %s213, 54
      %s222 = sadd.s32 %s220, %s221
      %s223 = smul.addr %s222, 4
      %s224 = scalar_lea.vmem %s0, %s223
      %p225 = scmp.lt.s32.totalorder %s19, 1
      %s226 = scalar_select %p225, %s19, 1
      %p227 = scmp.lt.s32.totalorder %s20, 0
      %s228 = scalar_select %p227, %s20, 0
      %p229 = scmp.lt.s32.totalorder %s21, 0
      %s230 = scalar_select %p229, %s21, 0
      %s231 = smul.addr %s230, 32
      %s232 = smul.addr %s228, 32
      %s233 = sadd.s32 %s231, %s232
      %s234 = smul.addr %s226, 32
      %s235 = sadd.s32 %s233, %s234
      %s236 = smul.addr %s235, 4
      %s237 = scalar_lea.vmem %s3, %s236
      %v239 = vld [vmem:[%s224] sm:$0xf]
      %v240 = vld [vmem:[%s224 + $0x4] sm:$0xf]
      %v241 = vld [vmem:[%s224 + $0xc] sm:$0xf]
      %v242 = vld [vmem:[%s224 + $0x10] sm:$0xf]
      %v243 = vld [vmem:[%s224 + $0x18] sm:$0xf]
      %v244 = vld [vmem:[%s224 + $0x1c] sm:$0xf]
      %v245 = vld [vmem:[%s224 + $0x24] sm:$0xf]
      %v246 = vld [vmem:[%s224 + $0x28] sm:$0xf]
      %v247 = vld [vmem:[%s224 + $0x30] sm:$0xf]
      %v248 = vld [vmem:[%s224 + $0x34] sm:$0xf]
      %v249 = vld [vmem:[%s224 + $0x3c] sm:$0xf]
      %v250 = vld [vmem:[%s224 + $0x40] sm:$0xf]
      %v251 = vld [vmem:[%s224 + $0x48] sm:$0xf]
      %v252 = vld [vmem:[%s224 + $0x4c] sm:$0xf]
      %v253 = vld [vmem:[%s224 + $0x54] sm:$0xf]
      %v254 = vld [vmem:[%s224 + $0x58] sm:$0xf]
      %v255 = vld [vmem:[%s224 + $0x60] sm:$0xf]
      %v256 = vld [vmem:[%s224 + $0x64] sm:$0xf]
      %v257 = vld [vmem:[%s224 + $0x6c] sm:$0xf]
      %v258 = vld [vmem:[%s224 + $0x70] sm:$0xf]
      %v259 = vld [vmem:[%s224 + $0x78] sm:$0xf]
      %v260 = vld [vmem:[%s224 + $0x7c] sm:$0xf]
      %v261 = vld [vmem:[%s224 + $0x84] sm:$0xf]
      %v262 = vld [vmem:[%s224 + $0x88] sm:$0xf]
      %v263 = vld [vmem:[%s224 + $0x90] sm:$0xf]
      %v264 = vld [vmem:[%s224 + $0x94] sm:$0xf]
      %v265 = vld [vmem:[%s224 + $0x9c] sm:$0xf]
      %v266 = vld [vmem:[%s224 + $0xa0] sm:$0xf]
      %v267 = vld [vmem:[%s224 + $0xa8] sm:$0xf]
      %v268 = vld [vmem:[%s224 + $0xac] sm:$0xf]
      %v269 = vld [vmem:[%s224 + $0xb4] sm:$0xf]
      %v270 = vld [vmem:[%s224 + $0xb8] sm:$0xf]
      %v271 = vld [vmem:[%s1] sm:$0x3]
      %v304 = vunpack.c.l.b16 %v239
      %v305 = vunpack.c.l.b16 %v240
      %v306 = vunpack.c.l.b16 %v241
      %v307 = vunpack.c.l.b16 %v242
      %v308 = vunpack.c.l.b16 %v243
      %v309 = vunpack.c.l.b16 %v244
      %v310 = vunpack.c.l.b16 %v245
      %v311 = vunpack.c.l.b16 %v246
      %v312 = vunpack.c.l.b16 %v247
      %v313 = vunpack.c.l.b16 %v248
      %v314 = vunpack.c.l.b16 %v249
      %v315 = vunpack.c.l.b16 %v250
      %v316 = vunpack.c.l.b16 %v251
      %v317 = vunpack.c.l.b16 %v252
      %v318 = vunpack.c.l.b16 %v253
      %v319 = vunpack.c.l.b16 %v254
      %v320 = vunpack.c.l.b16 %v255
      %v321 = vunpack.c.l.b16 %v256
      %v322 = vunpack.c.l.b16 %v257
      %v323 = vunpack.c.l.b16 %v258
      %v324 = vunpack.c.l.b16 %v259
      %v325 = vunpack.c.l.b16 %v260
      %v326 = vunpack.c.l.b16 %v261
      %v327 = vunpack.c.l.b16 %v262
      %v328 = vunpack.c.l.b16 %v263
      %v329 = vunpack.c.l.b16 %v264
      %v330 = vunpack.c.l.b16 %v265
      %v331 = vunpack.c.l.b16 %v266
      %v332 = vunpack.c.l.b16 %v267
      %v333 = vunpack.c.l.b16 %v268
      %v334 = vunpack.c.l.b16 %v269
      %v335 = vunpack.c.l.b16 %v270
      %v336 = vpack.c.b16 %v305, %v304
      %v337 = vpack.c.b16 %v307, %v306
      %v338 = vpack.c.b16 %v309, %v308
      %v339 = vpack.c.b16 %v311, %v310
      %v340 = vpack.c.b16 %v313, %v312
      %v341 = vpack.c.b16 %v315, %v314
      %v342 = vpack.c.b16 %v317, %v316
      %v343 = vpack.c.b16 %v319, %v318
      %v344 = vpack.c.b16 %v321, %v320
      %v345 = vpack.c.b16 %v323, %v322
      %v346 = vpack.c.b16 %v325, %v324
      %v347 = vpack.c.b16 %v327, %v326
      %v348 = vpack.c.b16 %v329, %v328
      %v349 = vpack.c.b16 %v331, %v330
      %v350 = vpack.c.b16 %v333, %v332
      %v351 = vpack.c.b16 %v335, %v334
      %vm352 = vcmask 31744
      %v354 = vsel %vm352, %v336, 0
      %v357 = vsel %vm352, %v337, 0
      %v360 = vsel %vm352, %v338, 0
      %v363 = vsel %vm352, %v339, 0
      %v366 = vsel %vm352, %v340, 0
      %v369 = vsel %vm352, %v341, 0
      %v372 = vsel %vm352, %v342, 0
      %v375 = vsel %vm352, %v343, 0
      %v378 = vsel %vm352, %v344, 0
      %v381 = vsel %vm352, %v345, 0
      %v384 = vsel %vm352, %v346, 0
      %v387 = vsel %vm352, %v347, 0
      %v390 = vsel %vm352, %v348, 0
      %v393 = vsel %vm352, %v349, 0
      %v396 = vsel %vm352, %v350, 0
      %v399 = vsel %vm352, %v351, 0
      %vm401 = vcmask 1041408
      %v403 = vsel %vm401, %v271, 0
      %405 = vmatpush.bf16.msra.mxu0 0
      %406 = vmatpush.bf16.msra.mxu0 0
      %407 = vmatpush.bf16.msra.mxu0 0
      %408 = vmatpush.bf16.msra.mxu0 0
      %409 = vmatpush.bf16.msra.mxu0 0
      %410 = vmatpush.bf16.msra.mxu0 0
      %411 = vmatpush.bf16.msra.mxu0 0
      %412 = vmatpush.bf16.msra.mxu0 %v403
      %413 = vmatmul.bf16.gmra.mxu0 %v354
      %v414 = vpop.f32.mrf.mxu0
      %v415 = vadd.f32 0.0, %v414
      %v416 = vpop.f32.mrf.mxu0
      %v417 = vadd.f32 0.0, %v416
      %418 = vmatmul.bf16.gmra.mxu0 %v357
      %v419 = vpop.f32.mrf.mxu0
      %v420 = vadd.f32 0.0, %v419
      %v421 = vpop.f32.mrf.mxu0
      %v422 = vadd.f32 0.0, %v421
      %423 = vmatmul.bf16.gmra.mxu0 %v360
      %v424 = vpop.f32.mrf.mxu0
      %v425 = vadd.f32 0.0, %v424
      %v426 = vpop.f32.mrf.mxu0
      %v427 = vadd.f32 0.0, %v426
      %428 = vmatmul.bf16.gmra.mxu0 %v363
      %v429 = vpop.f32.mrf.mxu0
      %v430 = vadd.f32 0.0, %v429
      %v431 = vpop.f32.mrf.mxu0
      %v432 = vadd.f32 0.0, %v431
      %433 = vmatmul.bf16.gmra.mxu0 %v366
      %v434 = vpop.f32.mrf.mxu0
      %v435 = vadd.f32 0.0, %v434
      %v436 = vpop.f32.mrf.mxu0
      %v437 = vadd.f32 0.0, %v436
      %438 = vmatmul.bf16.gmra.mxu0 %v369
      %v439 = vpop.f32.mrf.mxu0
      %v440 = vadd.f32 0.0, %v439
      %v441 = vpop.f32.mrf.mxu0
      %v442 = vadd.f32 0.0, %v441
      %443 = vmatmul.bf16.gmra.mxu0 %v372
      %v444 = vpop.f32.mrf.mxu0
      %v445 = vadd.f32 0.0, %v444
      %v446 = vpop.f32.mrf.mxu0
      %v447 = vadd.f32 0.0, %v446
      %448 = vmatmul.bf16.gmra.mxu0 %v375
      %v449 = vpop.f32.mrf.mxu0
      %v450 = vadd.f32 0.0, %v449
      %v451 = vpop.f32.mrf.mxu0
      %v452 = vadd.f32 0.0, %v451
      %453 = vmatmul.bf16.gmra.mxu0 %v378
      %v454 = vpop.f32.mrf.mxu0
      %v455 = vadd.f32 0.0, %v454
      %v456 = vpop.f32.mrf.mxu0
      %v457 = vadd.f32 0.0, %v456
      %458 = vmatmul.bf16.gmra.mxu0 %v381
      %v459 = vpop.f32.mrf.mxu0
      %v460 = vadd.f32 0.0, %v459
      %v461 = vpop.f32.mrf.mxu0
      %v462 = vadd.f32 0.0, %v461
      %463 = vmatmul.bf16.gmra.mxu0 %v384
      %v464 = vpop.f32.mrf.mxu0
      %v465 = vadd.f32 0.0, %v464
      %v466 = vpop.f32.mrf.mxu0
      %v467 = vadd.f32 0.0, %v466
      %468 = vmatmul.bf16.gmra.mxu0 %v387
      %v469 = vpop.f32.mrf.mxu0
      %v470 = vadd.f32 0.0, %v469
      %v471 = vpop.f32.mrf.mxu0
      %v472 = vadd.f32 0.0, %v471
      %473 = vmatmul.bf16.gmra.mxu0 %v390
      %v474 = vpop.f32.mrf.mxu0
      %v475 = vadd.f32 0.0, %v474
      %v476 = vpop.f32.mrf.mxu0
      %v477 = vadd.f32 0.0, %v476
      %478 = vmatmul.bf16.gmra.mxu0 %v393
      %v479 = vpop.f32.mrf.mxu0
      %v480 = vadd.f32 0.0, %v479
      %v481 = vpop.f32.mrf.mxu0
      %v482 = vadd.f32 0.0, %v481
      %483 = vmatmul.bf16.gmra.mxu0 %v396
      %v484 = vpop.f32.mrf.mxu0
      %v485 = vadd.f32 0.0, %v484
      %v486 = vpop.f32.mrf.mxu0
      %v487 = vadd.f32 0.0, %v486
      %488 = vmatmul.bf16.gmra.mxu0 %v399
      %v489 = vpop.f32.mrf.mxu0
      %v490 = vadd.f32 0.0, %v489
      %v491 = vpop.f32.mrf.mxu0
      %v492 = vadd.f32 0.0, %v491
      %493 = vdwg.mxu0
      %494 = vst [vmem:[#allocation2] sm:$0xff] %v415
      %495 = vst [vmem:[#allocation2 + $0x8] sm:$0xff] %v417
      %496 = vst [vmem:[#allocation2 + $0x10] sm:$0xff] %v420
      %497 = vst [vmem:[#allocation2 + $0x18] sm:$0xff] %v422
      %498 = vst [vmem:[#allocation2 + $0x20] sm:$0xff] %v425
      %499 = vst [vmem:[#allocation2 + $0x28] sm:$0xff] %v427
      %500 = vst [vmem:[#allocation2 + $0x30] sm:$0xff] %v430
      %501 = vst [vmem:[#allocation2 + $0x38] sm:$0xff] %v432
      %502 = vst [vmem:[#allocation2 + $0x40] sm:$0xff] %v435
      %503 = vst [vmem:[#allocation2 + $0x48] sm:$0xff] %v437
      %504 = vst [vmem:[#allocation2 + $0x50] sm:$0xff] %v440
      %505 = vst [vmem:[#allocation2 + $0x58] sm:$0xff] %v442
      %506 = vst [vmem:[#allocation2 + $0x60] sm:$0xff] %v445
      %507 = vst [vmem:[#allocation2 + $0x68] sm:$0xff] %v447
      %508 = vst [vmem:[#allocation2 + $0x70] sm:$0xff] %v450
      %509 = vst [vmem:[#allocation2 + $0x78] sm:$0xff] %v452
      %510 = vst [vmem:[#allocation2 + $0x80] sm:$0xff] %v455
      %511 = vst [vmem:[#allocation2 + $0x88] sm:$0xff] %v457
      %512 = vst [vmem:[#allocation2 + $0x90] sm:$0xff] %v460
      %513 = vst [vmem:[#allocation2 + $0x98] sm:$0xff] %v462
      %514 = vst [vmem:[#allocation2 + $0xa0] sm:$0xff] %v465
      %515 = vst [vmem:[#allocation2 + $0xa8] sm:$0xff] %v467
      %516 = vst [vmem:[#allocation2 + $0xb0] sm:$0xff] %v470
      %517 = vst [vmem:[#allocation2 + $0xb8] sm:$0xff] %v472
      %518 = vst [vmem:[#allocation2 + $0xc0] sm:$0xff] %v475
      %519 = vst [vmem:[#allocation2 + $0xc8] sm:$0xff] %v477
      %520 = vst [vmem:[#allocation2 + $0xd0] sm:$0xff] %v480
      %521 = vst [vmem:[#allocation2 + $0xd8] sm:$0xff] %v482
      %522 = vst [vmem:[#allocation2 + $0xe0] sm:$0xff] %v485
      %523 = vst [vmem:[#allocation2 + $0xe8] sm:$0xff] %v487
      %524 = vst [vmem:[#allocation2 + $0xf0] sm:$0xff] %v490
      %525 = vst [vmem:[#allocation2 + $0xf8] sm:$0xff] %v492
      %v526 = vld [vmem:[%s224] sm:$0xf]
      %v527 = vld [vmem:[%s224 + $0x4] sm:$0xf]
      %v528 = vld [vmem:[%s224 + $0x8] sm:$0x1]
      %v529 = vld [vmem:[%s224 + $0xc] sm:$0xf]
      %v530 = vld [vmem:[%s224 + $0x10] sm:$0xf]
      %v531 = vld [vmem:[%s224 + $0x14] sm:$0x1]
      %v532 = vld [vmem:[%s224 + $0x18] sm:$0xf]
      %v533 = vld [vmem:[%s224 + $0x1c] sm:$0xf]
      %v534 = vld [vmem:[%s224 + $0x20] sm:$0x1]
      %v535 = vld [vmem:[%s224 + $0x24] sm:$0xf]
      %v536 = vld [vmem:[%s224 + $0x28] sm:$0xf]
      %v537 = vld [vmem:[%s224 + $0x2c] sm:$0x1]
      %v538 = vld [vmem:[%s224 + $0x30] sm:$0xf]
      %v539 = vld [vmem:[%s224 + $0x34] sm:$0xf]
      %v540 = vld [vmem:[%s224 + $0x38] sm:$0x1]
      %v541 = vld [vmem:[%s224 + $0x3c] sm:$0xf]
      %v542 = vld [vmem:[%s224 + $0x40] sm:$0xf]
      %v543 = vld [vmem:[%s224 + $0x44] sm:$0x1]
      %v544 = vld [vmem:[%s224 + $0x48] sm:$0xf]
      %v545 = vld [vmem:[%s224 + $0x4c] sm:$0xf]
      %v546 = vld [vmem:[%s224 + $0x50] sm:$0x1]
      %v547 = vld [vmem:[%s224 + $0x54] sm:$0xf]
      %v548 = vld [vmem:[%s224 + $0x58] sm:$0xf]
      %v549 = vld [vmem:[%s224 + $0x5c] sm:$0x1]
      %v550 = vld [vmem:[%s224 + $0x60] sm:$0xf]
      %v551 = vld [vmem:[%s224 + $0x64] sm:$0xf]
      %v552 = vld [vmem:[%s224 + $0x68] sm:$0x1]
      %v553 = vld [vmem:[%s224 + $0x6c] sm:$0xf]
      %v554 = vld [vmem:[%s224 + $0x70] sm:$0xf]
      %v555 = vld [vmem:[%s224 + $0x74] sm:$0x1]
      %v556 = vld [vmem:[%s224 + $0x78] sm:$0xf]
      %v557 = vld [vmem:[%s224 + $0x7c] sm:$0xf]
      %v558 = vld [vmem:[%s224 + $0x80] sm:$0x1]
      %v559 = vld [vmem:[%s224 + $0x84] sm:$0xf]
      %v560 = vld [vmem:[%s224 + $0x88] sm:$0xf]
      %v561 = vld [vmem:[%s224 + $0x8c] sm:$0x1]
      %v562 = vld [vmem:[%s224 + $0x90] sm:$0xf]
      %v563 = vld [vmem:[%s224 + $0x94] sm:$0xf]
      %v564 = vld [vmem:[%s224 + $0x98] sm:$0x1]
      %v565 = vld [vmem:[%s224 + $0x9c] sm:$0xf]
      %v566 = vld [vmem:[%s224 + $0xa0] sm:$0xf]
      %v567 = vld [vmem:[%s224 + $0xa4] sm:$0x1]
      %v568 = vld [vmem:[%s224 + $0xa8] sm:$0xf]
      %v569 = vld [vmem:[%s224 + $0xac] sm:$0xf]
      %v570 = vld [vmem:[%s224 + $0xb0] sm:$0x1]
      %v571 = vld [vmem:[%s224 + $0xb4] sm:$0xf]
      %v572 = vld [vmem:[%s224 + $0xb8] sm:$0xf]
      %v573 = vld [vmem:[%s224 + $0xbc] sm:$0x1]
      %vm574 = vsmask.f32 3328
      %vm575 = vsmask.f32 7440
      %vm576 = vmor %vm574, %vm575
      %v578 = vshrl.u32 %v526, 16
      %v580 = vrot.slane %v578, 4
      %v581 = vshll.u32 %v526, 16
      %v583 = vrot.slane %v581, 5
      %v584 = vor.u32 %v580, %v583
      %v585 = vrot.slane %v584, 4
      %v587 = vshll.u32 %v527, 16
      %v589 = vrot.slane %v587, 5
      %v590 = vsel %vm576, %v585, %v589
      %v591 = vshrl.u32 %v527, 16
      %v593 = vrot.slane %v591, 4
      %v594 = vor.u32 %v593, %v589
      %v595 = vrot.slane %v594, 4
      %v597 = vshll.u32 %v528, 16
      %v599 = vrot.slane %v597, 5
      %v600 = vsel %vm576, %v595, %v599
      %v602 = vshrl.u32 %v529, 16
      %v604 = vrot.slane %v602, 4
      %v605 = vshll.u32 %v529, 16
      %v607 = vrot.slane %v605, 5
      %v608 = vor.u32 %v604, %v607
      %v609 = vrot.slane %v608, 4
      %v611 = vshll.u32 %v530, 16
      %v613 = vrot.slane %v611, 5
      %v614 = vsel %vm576, %v609, %v613
      %v615 = vshrl.u32 %v530, 16
      %v617 = vrot.slane %v615, 4
      %v618 = vor.u32 %v617, %v613
      %v619 = vrot.slane %v618, 4
      %v621 = vshll.u32 %v531, 16
      %v623 = vrot.slane %v621, 5
      %v624 = vsel %vm576, %v619, %v623
      %v626 = vshrl.u32 %v532, 16
      %v628 = vrot.slane %v626, 4
      %v629 = vshll.u32 %v532, 16
      %v631 = vrot.slane %v629, 5
      %v632 = vor.u32 %v628, %v631
      %v633 = vrot.slane %v632, 4
      %v635 = vshll.u32 %v533, 16
      %v637 = vrot.slane %v635, 5
      %v638 = vsel %vm576, %v633, %v637
      %v639 = vshrl.u32 %v533, 16
      %v641 = vrot.slane %v639, 4
      %v642 = vor.u32 %v641, %v637
      %v643 = vrot.slane %v642, 4
      %v645 = vshll.u32 %v534, 16
      %v647 = vrot.slane %v645, 5
      %v648 = vsel %vm576, %v643, %v647
      %v650 = vshrl.u32 %v535, 16
      %v652 = vrot.slane %v650, 4
      %v653 = vshll.u32 %v535, 16
      %v655 = vrot.slane %v653, 5
      %v656 = vor.u32 %v652, %v655
      %v657 = vrot.slane %v656, 4
      %v659 = vshll.u32 %v536, 16
      %v661 = vrot.slane %v659, 5
      %v662 = vsel %vm576, %v657, %v661
      %v663 = vshrl.u32 %v536, 16
      %v665 = vrot.slane %v663, 4
      %v666 = vor.u32 %v665, %v661
      %v667 = vrot.slane %v666, 4
      %v669 = vshll.u32 %v537, 16
      %v671 = vrot.slane %v669, 5
      %v672 = vsel %vm576, %v667, %v671
      %v674 = vshrl.u32 %v538, 16
      %v676 = vrot.slane %v674, 4
      %v677 = vshll.u32 %v538, 16
      %v679 = vrot.slane %v677, 5
      %v680 = vor.u32 %v676, %v679
      %v681 = vrot.slane %v680, 4
      %v683 = vshll.u32 %v539, 16
      %v685 = vrot.slane %v683, 5
      %v686 = vsel %vm576, %v681, %v685
      %v687 = vshrl.u32 %v539, 16
      %v689 = vrot.slane %v687, 4
      %v690 = vor.u32 %v689, %v685
      %v691 = vrot.slane %v690, 4
      %v693 = vshll.u32 %v540, 16
      %v695 = vrot.slane %v693, 5
      %v696 = vsel %vm576, %v691, %v695
      %v698 = vshrl.u32 %v541, 16
      %v700 = vrot.slane %v698, 4
      %v701 = vshll.u32 %v541, 16
      %v703 = vrot.slane %v701, 5
      %v704 = vor.u32 %v700, %v703
      %v705 = vrot.slane %v704, 4
      %v707 = vshll.u32 %v542, 16
      %v709 = vrot.slane %v707, 5
      %v710 = vsel %vm576, %v705, %v709
      %v711 = vshrl.u32 %v542, 16
      %v713 = vrot.slane %v711, 4
      %v714 = vor.u32 %v713, %v709
      %v715 = vrot.slane %v714, 4
      %v717 = vshll.u32 %v543, 16
      %v719 = vrot.slane %v717, 5
      %v720 = vsel %vm576, %v715, %v719
      %v722 = vshrl.u32 %v544, 16
      %v724 = vrot.slane %v722, 4
      %v725 = vshll.u32 %v544, 16
      %v727 = vrot.slane %v725, 5
      %v728 = vor.u32 %v724, %v727
      %v729 = vrot.slane %v728, 4
      %v731 = vshll.u32 %v545, 16
      %v733 = vrot.slane %v731, 5
      %v734 = vsel %vm576, %v729, %v733
      %v735 = vshrl.u32 %v545, 16
      %v737 = vrot.slane %v735, 4
      %v738 = vor.u32 %v737, %v733
      %v739 = vrot.slane %v738, 4
      %v741 = vshll.u32 %v546, 16
      %v743 = vrot.slane %v741, 5
      %v744 = vsel %vm576, %v739, %v743
      %v746 = vshrl.u32 %v547, 16
      %v748 = vrot.slane %v746, 4
      %v749 = vshll.u32 %v547, 16
      %v751 = vrot.slane %v749, 5
      %v752 = vor.u32 %v748, %v751
      %v753 = vrot.slane %v752, 4
      %v755 = vshll.u32 %v548, 16
      %v757 = vrot.slane %v755, 5
      %v758 = vsel %vm576, %v753, %v757
      %v759 = vshrl.u32 %v548, 16
      %v761 = vrot.slane %v759, 4
      %v762 = vor.u32 %v761, %v757
      %v763 = vrot.slane %v762, 4
      %v765 = vshll.u32 %v549, 16
      %v767 = vrot.slane %v765, 5
      %v768 = vsel %vm576, %v763, %v767
      %v770 = vshrl.u32 %v550, 16
      %v772 = vrot.slane %v770, 4
      %v773 = vshll.u32 %v550, 16
      %v775 = vrot.slane %v773, 5
      %v776 = vor.u32 %v772, %v775
      %v777 = vrot.slane %v776, 4
      %v779 = vshll.u32 %v551, 16
      %v781 = vrot.slane %v779, 5
      %v782 = vsel %vm576, %v777, %v781
      %v783 = vshrl.u32 %v551, 16
      %v785 = vrot.slane %v783, 4
      %v786 = vor.u32 %v785, %v781
      %v787 = vrot.slane %v786, 4
      %v789 = vshll.u32 %v552, 16
      %v791 = vrot.slane %v789, 5
      %v792 = vsel %vm576, %v787, %v791
      %v794 = vshrl.u32 %v553, 16
      %v796 = vrot.slane %v794, 4
      %v797 = vshll.u32 %v553, 16
      %v799 = vrot.slane %v797, 5
      %v800 = vor.u32 %v796, %v799
      %v801 = vrot.slane %v800, 4
      %v803 = vshll.u32 %v554, 16
      %v805 = vrot.slane %v803, 5
      %v806 = vsel %vm576, %v801, %v805
      %v807 = vshrl.u32 %v554, 16
      %v809 = vrot.slane %v807, 4
      %v810 = vor.u32 %v809, %v805
      %v811 = vrot.slane %v810, 4
      %v813 = vshll.u32 %v555, 16
      %v815 = vrot.slane %v813, 5
      %v816 = vsel %vm576, %v811, %v815
      %v818 = vshrl.u32 %v556, 16
      %v820 = vrot.slane %v818, 4
      %v821 = vshll.u32 %v556, 16
      %v823 = vrot.slane %v821, 5
      %v824 = vor.u32 %v820, %v823
      %v825 = vrot.slane %v824, 4
      %v827 = vshll.u32 %v557, 16
      %v829 = vrot.slane %v827, 5
      %v830 = vsel %vm576, %v825, %v829
      %v831 = vshrl.u32 %v557, 16
      %v833 = vrot.slane %v831, 4
      %v834 = vor.u32 %v833, %v829
      %v835 = vrot.slane %v834, 4
      %v837 = vshll.u32 %v558, 16
      %v839 = vrot.slane %v837, 5
      %v840 = vsel %vm576, %v835, %v839
      %v842 = vshrl.u32 %v559, 16
      %v844 = vrot.slane %v842, 4
      %v845 = vshll.u32 %v559, 16
      %v847 = vrot.slane %v845, 5
      %v848 = vor.u32 %v844, %v847
      %v849 = vrot.slane %v848, 4
      %v851 = vshll.u32 %v560, 16
      %v853 = vrot.slane %v851, 5
      %v854 = vsel %vm576, %v849, %v853
      %v855 = vshrl.u32 %v560, 16
      %v857 = vrot.slane %v855, 4
      %v858 = vor.u32 %v857, %v853
      %v859 = vrot.slane %v858, 4
      %v861 = vshll.u32 %v561, 16
      %v863 = vrot.slane %v861, 5
      %v864 = vsel %vm576, %v859, %v863
      %v866 = vshrl.u32 %v562, 16
      %v868 = vrot.slane %v866, 4
      %v869 = vshll.u32 %v562, 16
      %v871 = vrot.slane %v869, 5
      %v872 = vor.u32 %v868, %v871
      %v873 = vrot.slane %v872, 4
      %v875 = vshll.u32 %v563, 16
      %v877 = vrot.slane %v875, 5
      %v878 = vsel %vm576, %v873, %v877
      %v879 = vshrl.u32 %v563, 16
      %v881 = vrot.slane %v879, 4
      %v882 = vor.u32 %v881, %v877
      %v883 = vrot.slane %v882, 4
      %v885 = vshll.u32 %v564, 16
      %v887 = vrot.slane %v885, 5
      %v888 = vsel %vm576, %v883, %v887
      %v890 = vshrl.u32 %v565, 16
      %v892 = vrot.slane %v890, 4
      %v893 = vshll.u32 %v565, 16
      %v895 = vrot.slane %v893, 5
      %v896 = vor.u32 %v892, %v895
      %v897 = vrot.slane %v896, 4
      %v899 = vshll.u32 %v566, 16
      %v901 = vrot.slane %v899, 5
      %v902 = vsel %vm576, %v897, %v901
      %v903 = vshrl.u32 %v566, 16
      %v905 = vrot.slane %v903, 4
      %v906 = vor.u32 %v905, %v901
      %v907 = vrot.slane %v906, 4
      %v909 = vshll.u32 %v567, 16
      %v911 = vrot.slane %v909, 5
      %v912 = vsel %vm576, %v907, %v911
      %v914 = vshrl.u32 %v568, 16
      %v916 = vrot.slane %v914, 4
      %v917 = vshll.u32 %v568, 16
      %v919 = vrot.slane %v917, 5
      %v920 = vor.u32 %v916, %v919
      %v921 = vrot.slane %v920, 4
      %v923 = vshll.u32 %v569, 16
      %v925 = vrot.slane %v923, 5
      %v926 = vsel %vm576, %v921, %v925
      %v927 = vshrl.u32 %v569, 16
      %v929 = vrot.slane %v927, 4
      %v930 = vor.u32 %v929, %v925
      %v931 = vrot.slane %v930, 4
      %v933 = vshll.u32 %v570, 16
      %v935 = vrot.slane %v933, 5
      %v936 = vsel %vm576, %v931, %v935
      %v938 = vshrl.u32 %v571, 16
      %v940 = vrot.slane %v938, 4
      %v941 = vshll.u32 %v571, 16
      %v943 = vrot.slane %v941, 5
      %v944 = vor.u32 %v940, %v943
      %v945 = vrot.slane %v944, 4
      %v947 = vshll.u32 %v572, 16
      %v949 = vrot.slane %v947, 5
      %v950 = vsel %vm576, %v945, %v949
      %v951 = vshrl.u32 %v572, 16
      %v953 = vrot.slane %v951, 4
      %v954 = vor.u32 %v953, %v949
      %v955 = vrot.slane %v954, 4
      %v957 = vshll.u32 %v573, 16
      %v959 = vrot.slane %v957, 5
      %v960 = vsel %vm576, %v955, %v959
      %s961 = scalar_lea.vmem %s1, 2
      %v962 = vld [vmem:[%s961] sm:$0x3]
      %v963 = vunpack.c.l.b16 %v590
      %v964 = vunpack.c.l.b16 %v600
      %v965 = vunpack.c.l.b16 %v614
      %v966 = vunpack.c.l.b16 %v624
      %v967 = vunpack.c.l.b16 %v638
      %v968 = vunpack.c.l.b16 %v648
      %v969 = vunpack.c.l.b16 %v662
      %v970 = vunpack.c.l.b16 %v672
      %v971 = vunpack.c.l.b16 %v686
      %v972 = vunpack.c.l.b16 %v696
      %v973 = vunpack.c.l.b16 %v710
      %v974 = vunpack.c.l.b16 %v720
      %v975 = vunpack.c.l.b16 %v734
      %v976 = vunpack.c.l.b16 %v744
      %v977 = vunpack.c.l.b16 %v758
      %v978 = vunpack.c.l.b16 %v768
      %v979 = vunpack.c.l.b16 %v782
      %v980 = vunpack.c.l.b16 %v792
      %v981 = vunpack.c.l.b16 %v806
      %v982 = vunpack.c.l.b16 %v816
      %v983 = vunpack.c.l.b16 %v830
      %v984 = vunpack.c.l.b16 %v840
      %v985 = vunpack.c.l.b16 %v854
      %v986 = vunpack.c.l.b16 %v864
      %v987 = vunpack.c.l.b16 %v878
      %v988 = vunpack.c.l.b16 %v888
      %v989 = vunpack.c.l.b16 %v902
      %v990 = vunpack.c.l.b16 %v912
      %v991 = vunpack.c.l.b16 %v926
      %v992 = vunpack.c.l.b16 %v936
      %v993 = vunpack.c.l.b16 %v950
      %v994 = vunpack.c.l.b16 %v960
      %v995 = vpack.c.b16 %v964, %v963
      %v996 = vpack.c.b16 %v966, %v965
      %v997 = vpack.c.b16 %v968, %v967
      %v998 = vpack.c.b16 %v970, %v969
      %v999 = vpack.c.b16 %v972, %v971
      %v1000 = vpack.c.b16 %v974, %v973
      %v1001 = vpack.c.b16 %v976, %v975
      %v1002 = vpack.c.b16 %v978, %v977
      %v1003 = vpack.c.b16 %v980, %v979
      %v1004 = vpack.c.b16 %v982, %v981
      %v1005 = vpack.c.b16 %v984, %v983
      %v1006 = vpack.c.b16 %v986, %v985
      %v1007 = vpack.c.b16 %v988, %v987
      %v1008 = vpack.c.b16 %v990, %v989
      %v1009 = vpack.c.b16 %v992, %v991
      %v1010 = vpack.c.b16 %v994, %v993
      %v1012 = vsel %vm352, %v995, 0
      %v1015 = vsel %vm352, %v996, 0
      %v1018 = vsel %vm352, %v997, 0
      %v1021 = vsel %vm352, %v998, 0
      %v1024 = vsel %vm352, %v999, 0
      %v1027 = vsel %vm352, %v1000, 0
      %v1030 = vsel %vm352, %v1001, 0
      %v1033 = vsel %vm352, %v1002, 0
      %v1036 = vsel %vm352, %v1003, 0
      %v1039 = vsel %vm352, %v1004, 0
      %v1042 = vsel %vm352, %v1005, 0
      %v1045 = vsel %vm352, %v1006, 0
      %v1048 = vsel %vm352, %v1007, 0
      %v1051 = vsel %vm352, %v1008, 0
      %v1054 = vsel %vm352, %v1009, 0
      %v1057 = vsel %vm352, %v1010, 0
      %v1060 = vsel %vm401, %v962, 0
      %1062 = vmatpush.bf16.msra.mxu0 0
      %1063 = vmatpush.bf16.msra.mxu0 0
      %1064 = vmatpush.bf16.msra.mxu0 0
      %1065 = vmatpush.bf16.msra.mxu0 0
      %1066 = vmatpush.bf16.msra.mxu0 0
      %1067 = vmatpush.bf16.msra.mxu0 0
      %1068 = vmatpush.bf16.msra.mxu0 0
      %1069 = vmatpush.bf16.msra.mxu0 %v1060
      %1070 = vmatmul.bf16.gmra.mxu0 %v1012
      %v1071 = vpop.f32.mrf.mxu0
      %v1072 = vadd.f32 0.0, %v1071
      %v1073 = vpop.f32.mrf.mxu0
      %v1074 = vadd.f32 0.0, %v1073
      %1075 = vmatmul.bf16.gmra.mxu0 %v1015
      %v1076 = vpop.f32.mrf.mxu0
      %v1077 = vadd.f32 0.0, %v1076
      %v1078 = vpop.f32.mrf.mxu0
      %v1079 = vadd.f32 0.0, %v1078
      %1080 = vmatmul.bf16.gmra.mxu0 %v1018
      %v1081 = vpop.f32.mrf.mxu0
      %v1082 = vadd.f32 0.0, %v1081
      %v1083 = vpop.f32.mrf.mxu0
      %v1084 = vadd.f32 0.0, %v1083
      %1085 = vmatmul.bf16.gmra.mxu0 %v1021
      %v1086 = vpop.f32.mrf.mxu0
      %v1087 = vadd.f32 0.0, %v1086
      %v1088 = vpop.f32.mrf.mxu0
      %v1089 = vadd.f32 0.0, %v1088
      %1090 = vmatmul.bf16.gmra.mxu0 %v1024
      %v1091 = vpop.f32.mrf.mxu0
      %v1092 = vadd.f32 0.0, %v1091
      %v1093 = vpop.f32.mrf.mxu0
      %v1094 = vadd.f32 0.0, %v1093
      %1095 = vmatmul.bf16.gmra.mxu0 %v1027
      %v1096 = vpop.f32.mrf.mxu0
      %v1097 = vadd.f32 0.0, %v1096
      %v1098 = vpop.f32.mrf.mxu0
      %v1099 = vadd.f32 0.0, %v1098
      %1100 = vmatmul.bf16.gmra.mxu0 %v1030
      %v1101 = vpop.f32.mrf.mxu0
      %v1102 = vadd.f32 0.0, %v1101
      %v1103 = vpop.f32.mrf.mxu0
      %v1104 = vadd.f32 0.0, %v1103
      %1105 = vmatmul.bf16.gmra.mxu0 %v1033
      %v1106 = vpop.f32.mrf.mxu0
      %v1107 = vadd.f32 0.0, %v1106
      %v1108 = vpop.f32.mrf.mxu0
      %v1109 = vadd.f32 0.0, %v1108
      %1110 = vmatmul.bf16.gmra.mxu0 %v1036
      %v1111 = vpop.f32.mrf.mxu0
      %v1112 = vadd.f32 0.0, %v1111
      %v1113 = vpop.f32.mrf.mxu0
      %v1114 = vadd.f32 0.0, %v1113
      %1115 = vmatmul.bf16.gmra.mxu0 %v1039
      %v1116 = vpop.f32.mrf.mxu0
      %v1117 = vadd.f32 0.0, %v1116
      %v1118 = vpop.f32.mrf.mxu0
      %v1119 = vadd.f32 0.0, %v1118
      %1120 = vmatmul.bf16.gmra.mxu0 %v1042
      %v1121 = vpop.f32.mrf.mxu0
      %v1122 = vadd.f32 0.0, %v1121
      %v1123 = vpop.f32.mrf.mxu0
      %v1124 = vadd.f32 0.0, %v1123
      %1125 = vmatmul.bf16.gmra.mxu0 %v1045
      %v1126 = vpop.f32.mrf.mxu0
      %v1127 = vadd.f32 0.0, %v1126
      %v1128 = vpop.f32.mrf.mxu0
      %v1129 = vadd.f32 0.0, %v1128
      %1130 = vmatmul.bf16.gmra.mxu0 %v1048
      %v1131 = vpop.f32.mrf.mxu0
      %v1132 = vadd.f32 0.0, %v1131
      %v1133 = vpop.f32.mrf.mxu0
      %v1134 = vadd.f32 0.0, %v1133
      %1135 = vmatmul.bf16.gmra.mxu0 %v1051
      %v1136 = vpop.f32.mrf.mxu0
      %v1137 = vadd.f32 0.0, %v1136
      %v1138 = vpop.f32.mrf.mxu0
      %v1139 = vadd.f32 0.0, %v1138
      %1140 = vmatmul.bf16.gmra.mxu0 %v1054
      %v1141 = vpop.f32.mrf.mxu0
      %v1142 = vadd.f32 0.0, %v1141
      %v1143 = vpop.f32.mrf.mxu0
      %v1144 = vadd.f32 0.0, %v1143
      %1145 = vmatmul.bf16.gmra.mxu0 %v1057
      %v1146 = vpop.f32.mrf.mxu0
      %v1147 = vadd.f32 0.0, %v1146
      %v1148 = vpop.f32.mrf.mxu0
      %v1149 = vadd.f32 0.0, %v1148
      %1150 = vdwg.mxu0
      %v1151 = vld [vmem:[#allocation2] sm:$0xff]
      %v1152 = vld [vmem:[#allocation2 + $0x8] sm:$0xff]
      %v1153 = vld [vmem:[#allocation2 + $0x10] sm:$0xff]
      %v1154 = vld [vmem:[#allocation2 + $0x18] sm:$0xff]
      %v1155 = vld [vmem:[#allocation2 + $0x20] sm:$0xff]
      %v1156 = vld [vmem:[#allocation2 + $0x28] sm:$0xff]
      %v1157 = vld [vmem:[#allocation2 + $0x30] sm:$0xff]
      %v1158 = vld [vmem:[#allocation2 + $0x38] sm:$0xff]
      %v1159 = vld [vmem:[#allocation2 + $0x40] sm:$0xff]
      %v1160 = vld [vmem:[#allocation2 + $0x48] sm:$0xff]
      %v1161 = vld [vmem:[#allocation2 + $0x50] sm:$0xff]
      %v1162 = vld [vmem:[#allocation2 + $0x58] sm:$0xff]
      %v1163 = vld [vmem:[#allocation2 + $0x60] sm:$0xff]
      %v1164 = vld [vmem:[#allocation2 + $0x68] sm:$0xff]
      %v1165 = vld [vmem:[#allocation2 + $0x70] sm:$0xff]
      %v1166 = vld [vmem:[#allocation2 + $0x78] sm:$0xff]
      %v1167 = vld [vmem:[#allocation2 + $0x80] sm:$0xff]
      %v1168 = vld [vmem:[#allocation2 + $0x88] sm:$0xff]
      %v1169 = vld [vmem:[#allocation2 + $0x90] sm:$0xff]
      %v1170 = vld [vmem:[#allocation2 + $0x98] sm:$0xff]
      %v1171 = vld [vmem:[#allocation2 + $0xa0] sm:$0xff]
      %v1172 = vld [vmem:[#allocation2 + $0xa8] sm:$0xff]
      %v1173 = vld [vmem:[#allocation2 + $0xb0] sm:$0xff]
      %v1174 = vld [vmem:[#allocation2 + $0xb8] sm:$0xff]
      %v1175 = vld [vmem:[#allocation2 + $0xc0] sm:$0xff]
      %v1176 = vld [vmem:[#allocation2 + $0xc8] sm:$0xff]
      %v1177 = vld [vmem:[#allocation2 + $0xd0] sm:$0xff]
      %v1178 = vld [vmem:[#allocation2 + $0xd8] sm:$0xff]
      %v1179 = vld [vmem:[#allocation2 + $0xe0] sm:$0xff]
      %v1180 = vld [vmem:[#allocation2 + $0xe8] sm:$0xff]
      %v1181 = vld [vmem:[#allocation2 + $0xf0] sm:$0xff]
      %v1182 = vld [vmem:[#allocation2 + $0xf8] sm:$0xff]
      %v1183 = vadd.f32 %v1151, %v1072
      %v1184 = vadd.f32 %v1152, %v1074
      %v1185 = vadd.f32 %v1153, %v1077
      %v1186 = vadd.f32 %v1154, %v1079
      %v1187 = vadd.f32 %v1155, %v1082
      %v1188 = vadd.f32 %v1156, %v1084
      %v1189 = vadd.f32 %v1157, %v1087
      %v1190 = vadd.f32 %v1158, %v1089
      %v1191 = vadd.f32 %v1159, %v1092
      %v1192 = vadd.f32 %v1160, %v1094
      %v1193 = vadd.f32 %v1161, %v1097
      %v1194 = vadd.f32 %v1162, %v1099
      %v1195 = vadd.f32 %v1163, %v1102
      %v1196 = vadd.f32 %v1164, %v1104
      %v1197 = vadd.f32 %v1165, %v1107
      %v1198 = vadd.f32 %v1166, %v1109
      %v1199 = vadd.f32 %v1167, %v1112
      %v1200 = vadd.f32 %v1168, %v1114
      %v1201 = vadd.f32 %v1169, %v1117
      %v1202 = vadd.f32 %v1170, %v1119
      %v1203 = vadd.f32 %v1171, %v1122
      %v1204 = vadd.f32 %v1172, %v1124
      %v1205 = vadd.f32 %v1173, %v1127
      %v1206 = vadd.f32 %v1174, %v1129
      %v1207 = vadd.f32 %v1175, %v1132
      %v1208 = vadd.f32 %v1176, %v1134
      %v1209 = vadd.f32 %v1177, %v1137
      %v1210 = vadd.f32 %v1178, %v1139
      %v1211 = vadd.f32 %v1179, %v1142
      %v1212 = vadd.f32 %v1180, %v1144
      %v1213 = vadd.f32 %v1181, %v1147
      %v1214 = vadd.f32 %v1182, %v1149
      %1215 = vst [vmem:[#allocation2] sm:$0xff] %v1183
      %1216 = vst [vmem:[#allocation2 + $0x8] sm:$0xff] %v1184
      %1217 = vst [vmem:[#allocation2 + $0x10] sm:$0xff] %v1185
      %1218 = vst [vmem:[#allocation2 + $0x18] sm:$0xff] %v1186
      %1219 = vst [vmem:[#allocation2 + $0x20] sm:$0xff] %v1187
      %1220 = vst [vmem:[#allocation2 + $0x28] sm:$0xff] %v1188
      %1221 = vst [vmem:[#allocation2 + $0x30] sm:$0xff] %v1189
      %1222 = vst [vmem:[#allocation2 + $0x38] sm:$0xff] %v1190
      %1223 = vst [vmem:[#allocation2 + $0x40] sm:$0xff] %v1191
      %1224 = vst [vmem:[#allocation2 + $0x48] sm:$0xff] %v1192
      %1225 = vst [vmem:[#allocation2 + $0x50] sm:$0xff] %v1193
      %1226 = vst [vmem:[#allocation2 + $0x58] sm:$0xff] %v1194
      %1227 = vst [vmem:[#allocation2 + $0x60] sm:$0xff] %v1195
      %1228 = vst [vmem:[#allocation2 + $0x68] sm:$0xff] %v1196
      %1229 = vst [vmem:[#allocation2 + $0x70] sm:$0xff] %v1197
      %1230 = vst [vmem:[#allocation2 + $0x78] sm:$0xff] %v1198
      %1231 = vst [vmem:[#allocation2 + $0x80] sm:$0xff] %v1199
      %1232 = vst [vmem:[#allocation2 + $0x88] sm:$0xff] %v1200
      %1233 = vst [vmem:[#allocation2 + $0x90] sm:$0xff] %v1201
      %1234 = vst [vmem:[#allocation2 + $0x98] sm:$0xff] %v1202
      %1235 = vst [vmem:[#allocation2 + $0xa0] sm:$0xff] %v1203
      %1236 = vst [vmem:[#allocation2 + $0xa8] sm:$0xff] %v1204
      %1237 = vst [vmem:[#allocation2 + $0xb0] sm:$0xff] %v1205
      %1238 = vst [vmem:[#allocation2 + $0xb8] sm:$0xff] %v1206
      %1239 = vst [vmem:[#allocation2 + $0xc0] sm:$0xff] %v1207
      %1240 = vst [vmem:[#allocation2 + $0xc8] sm:$0xff] %v1208
      %1241 = vst [vmem:[#allocation2 + $0xd0] sm:$0xff] %v1209
      %1242 = vst [vmem:[#allocation2 + $0xd8] sm:$0xff] %v1210
      %1243 = vst [vmem:[#allocation2 + $0xe0] sm:$0xff] %v1211
      %1244 = vst [vmem:[#allocation2 + $0xe8] sm:$0xff] %v1212
      %1245 = vst [vmem:[#allocation2 + $0xf0] sm:$0xff] %v1213
      %1246 = vst [vmem:[#allocation2 + $0xf8] sm:$0xff] %v1214
      %v1247 = vld [vmem:[%s224] sm:$0xe]
      %v1248 = vld [vmem:[%s224 + $0x4] sm:$0xf]
      %v1249 = vld [vmem:[%s224 + $0x8] sm:$0x1]
      %v1250 = vld [vmem:[%s224 + $0xc] sm:$0xe]
      %v1251 = vld [vmem:[%s224 + $0x10] sm:$0xf]
      %v1252 = vld [vmem:[%s224 + $0x14] sm:$0x1]
      %v1253 = vld [vmem:[%s224 + $0x18] sm:$0xe]
      %v1254 = vld [vmem:[%s224 + $0x1c] sm:$0xf]
      %v1255 = vld [vmem:[%s224 + $0x20] sm:$0x1]
      %v1256 = vld [vmem:[%s224 + $0x24] sm:$0xe]
      %v1257 = vld [vmem:[%s224 + $0x28] sm:$0xf]
      %v1258 = vld [vmem:[%s224 + $0x2c] sm:$0x1]
      %v1259 = vld [vmem:[%s224 + $0x30] sm:$0xe]
      %v1260 = vld [vmem:[%s224 + $0x34] sm:$0xf]
      %v1261 = vld [vmem:[%s224 + $0x38] sm:$0x1]
      %v1262 = vld [vmem:[%s224 + $0x3c] sm:$0xe]
      %v1263 = vld [vmem:[%s224 + $0x40] sm:$0xf]
      %v1264 = vld [vmem:[%s224 + $0x44] sm:$0x1]
      %v1265 = vld [vmem:[%s224 + $0x48] sm:$0xe]
      %v1266 = vld [vmem:[%s224 + $0x4c] sm:$0xf]
      %v1267 = vld [vmem:[%s224 + $0x50] sm:$0x1]
      %v1268 = vld [vmem:[%s224 + $0x54] sm:$0xe]
      %v1269 = vld [vmem:[%s224 + $0x58] sm:$0xf]
      %v1270 = vld [vmem:[%s224 + $0x5c] sm:$0x1]
      %v1271 = vld [vmem:[%s224 + $0x60] sm:$0xe]
      %v1272 = vld [vmem:[%s224 + $0x64] sm:$0xf]
      %v1273 = vld [vmem:[%s224 + $0x68] sm:$0x1]
      %v1274 = vld [vmem:[%s224 + $0x6c] sm:$0xe]
      %v1275 = vld [vmem:[%s224 + $0x70] sm:$0xf]
      %v1276 = vld [vmem:[%s224 + $0x74] sm:$0x1]
      %v1277 = vld [vmem:[%s224 + $0x78] sm:$0xe]
      %v1278 = vld [vmem:[%s224 + $0x7c] sm:$0xf]
      %v1279 = vld [vmem:[%s224 + $0x80] sm:$0x1]
      %v1280 = vld [vmem:[%s224 + $0x84] sm:$0xe]
      %v1281 = vld [vmem:[%s224 + $0x88] sm:$0xf]
      %v1282 = vld [vmem:[%s224 + $0x8c] sm:$0x1]
      %v1283 = vld [vmem:[%s224 + $0x90] sm:$0xe]
      %v1284 = vld [vmem:[%s224 + $0x94] sm:$0xf]
      %v1285 = vld [vmem:[%s224 + $0x98] sm:$0x1]
      %v1286 = vld [vmem:[%s224 + $0x9c] sm:$0xe]
      %v1287 = vld [vmem:[%s224 + $0xa0] sm:$0xf]
      %v1288 = vld [vmem:[%s224 + $0xa4] sm:$0x1]
      %v1289 = vld [vmem:[%s224 + $0xa8] sm:$0xe]
      %v1290 = vld [vmem:[%s224 + $0xac] sm:$0xf]
      %v1291 = vld [vmem:[%s224 + $0xb0] sm:$0x1]
      %v1292 = vld [vmem:[%s224 + $0xb4] sm:$0xe]
      %v1293 = vld [vmem:[%s224 + $0xb8] sm:$0xf]
      %v1294 = vld [vmem:[%s224 + $0xbc] sm:$0x1]
      %vm1343 = vcmask 1042432
      %vm1344 = vcmask 1046532
      %vm1345 = vmor %vm1343, %vm1344
      %v1346 = vrot.slane %v1247, 5
      %v1347 = vrot.slane %v1346, 4
      %v1348 = vrot.slane %v1248, 5
      %v1349 = vsel %vm1345, %v1347, %v1348
      %v1350 = vrot.slane %v1348, 4
      %v1351 = vrot.slane %v1249, 5
      %v1352 = vsel %vm1345, %v1350, %v1351
      %v1353 = vrot.slane %v1250, 5
      %v1354 = vrot.slane %v1353, 4
      %v1355 = vrot.slane %v1251, 5
      %v1356 = vsel %vm1345, %v1354, %v1355
      %v1357 = vrot.slane %v1355, 4
      %v1358 = vrot.slane %v1252, 5
      %v1359 = vsel %vm1345, %v1357, %v1358
      %v1360 = vrot.slane %v1253, 5
      %v1361 = vrot.slane %v1360, 4
      %v1362 = vrot.slane %v1254, 5
      %v1363 = vsel %vm1345, %v1361, %v1362
      %v1364 = vrot.slane %v1362, 4
      %v1365 = vrot.slane %v1255, 5
      %v1366 = vsel %vm1345, %v1364, %v1365
      %v1367 = vrot.slane %v1256, 5
      %v1368 = vrot.slane %v1367, 4
      %v1369 = vrot.slane %v1257, 5
      %v1370 = vsel %vm1345, %v1368, %v1369
      %v1371 = vrot.slane %v1369, 4
      %v1372 = vrot.slane %v1258, 5
      %v1373 = vsel %vm1345, %v1371, %v1372
      %v1374 = vrot.slane %v1259, 5
      %v1375 = vrot.slane %v1374, 4
      %v1376 = vrot.slane %v1260, 5
      %v1377 = vsel %vm1345, %v1375, %v1376
      %v1378 = vrot.slane %v1376, 4
      %v1379 = vrot.slane %v1261, 5
      %v1380 = vsel %vm1345, %v1378, %v1379
      %v1381 = vrot.slane %v1262, 5
      %v1382 = vrot.slane %v1381, 4
      %v1383 = vrot.slane %v1263, 5
      %v1384 = vsel %vm1345, %v1382, %v1383
      %v1385 = vrot.slane %v1383, 4
      %v1386 = vrot.slane %v1264, 5
      %v1387 = vsel %vm1345, %v1385, %v1386
      %v1388 = vrot.slane %v1265, 5
      %v1389 = vrot.slane %v1388, 4
      %v1390 = vrot.slane %v1266, 5
      %v1391 = vsel %vm1345, %v1389, %v1390
      %v1392 = vrot.slane %v1390, 4
      %v1393 = vrot.slane %v1267, 5
      %v1394 = vsel %vm1345, %v1392, %v1393
      %v1395 = vrot.slane %v1268, 5
      %v1396 = vrot.slane %v1395, 4
      %v1397 = vrot.slane %v1269, 5
      %v1398 = vsel %vm1345, %v1396, %v1397
      %v1399 = vrot.slane %v1397, 4
      %v1400 = vrot.slane %v1270, 5
      %v1401 = vsel %vm1345, %v1399, %v1400
      %v1402 = vrot.slane %v1271, 5
      %v1403 = vrot.slane %v1402, 4
      %v1404 = vrot.slane %v1272, 5
      %v1405 = vsel %vm1345, %v1403, %v1404
      %v1406 = vrot.slane %v1404, 4
      %v1407 = vrot.slane %v1273, 5
      %v1408 = vsel %vm1345, %v1406, %v1407
      %v1409 = vrot.slane %v1274, 5
      %v1410 = vrot.slane %v1409, 4
      %v1411 = vrot.slane %v1275, 5
      %v1412 = vsel %vm1345, %v1410, %v1411
      %v1413 = vrot.slane %v1411, 4
      %v1414 = vrot.slane %v1276, 5
      %v1415 = vsel %vm1345, %v1413, %v1414
      %v1416 = vrot.slane %v1277, 5
      %v1417 = vrot.slane %v1416, 4
      %v1418 = vrot.slane %v1278, 5
      %v1419 = vsel %vm1345, %v1417, %v1418
      %v1420 = vrot.slane %v1418, 4
      %v1421 = vrot.slane %v1279, 5
      %v1422 = vsel %vm1345, %v1420, %v1421
      %v1423 = vrot.slane %v1280, 5
      %v1424 = vrot.slane %v1423, 4
      %v1425 = vrot.slane %v1281, 5
      %v1426 = vsel %vm1345, %v1424, %v1425
      %v1427 = vrot.slane %v1425, 4
      %v1428 = vrot.slane %v1282, 5
      %v1429 = vsel %vm1345, %v1427, %v1428
      %v1430 = vrot.slane %v1283, 5
      %v1431 = vrot.slane %v1430, 4
      %v1432 = vrot.slane %v1284, 5
      %v1433 = vsel %vm1345, %v1431, %v1432
      %v1434 = vrot.slane %v1432, 4
      %v1435 = vrot.slane %v1285, 5
      %v1436 = vsel %vm1345, %v1434, %v1435
      %v1437 = vrot.slane %v1286, 5
      %v1438 = vrot.slane %v1437, 4
      %v1439 = vrot.slane %v1287, 5
      %v1440 = vsel %vm1345, %v1438, %v1439
      %v1441 = vrot.slane %v1439, 4
      %v1442 = vrot.slane %v1288, 5
      %v1443 = vsel %vm1345, %v1441, %v1442
      %v1444 = vrot.slane %v1289, 5
      %v1445 = vrot.slane %v1444, 4
      %v1446 = vrot.slane %v1290, 5
      %v1447 = vsel %vm1345, %v1445, %v1446
      %v1448 = vrot.slane %v1446, 4
      %v1449 = vrot.slane %v1291, 5
      %v1450 = vsel %vm1345, %v1448, %v1449
      %v1451 = vrot.slane %v1292, 5
      %v1452 = vrot.slane %v1451, 4
      %v1453 = vrot.slane %v1293, 5
      %v1454 = vsel %vm1345, %v1452, %v1453
      %v1455 = vrot.slane %v1453, 4
      %v1456 = vrot.slane %v1294, 5
      %v1457 = vsel %vm1345, %v1455, %v1456
      %s1458 = scalar_lea.vmem %s1, 4
      %v1459 = vld [vmem:[%s1458] sm:$0x3]
      %v1460 = vunpack.c.l.b16 %v1349
      %v1461 = vunpack.c.l.b16 %v1352
      %v1462 = vunpack.c.l.b16 %v1356
      %v1463 = vunpack.c.l.b16 %v1359
      %v1464 = vunpack.c.l.b16 %v1363
      %v1465 = vunpack.c.l.b16 %v1366
      %v1466 = vunpack.c.l.b16 %v1370
      %v1467 = vunpack.c.l.b16 %v1373
      %v1468 = vunpack.c.l.b16 %v1377
      %v1469 = vunpack.c.l.b16 %v1380
      %v1470 = vunpack.c.l.b16 %v1384
      %v1471 = vunpack.c.l.b16 %v1387
      %v1472 = vunpack.c.l.b16 %v1391
      %v1473 = vunpack.c.l.b16 %v1394
      %v1474 = vunpack.c.l.b16 %v1398
      %v1475 = vunpack.c.l.b16 %v1401
      %v1476 = vunpack.c.l.b16 %v1405
      %v1477 = vunpack.c.l.b16 %v1408
      %v1478 = vunpack.c.l.b16 %v1412
      %v1479 = vunpack.c.l.b16 %v1415
      %v1480 = vunpack.c.l.b16 %v1419
      %v1481 = vunpack.c.l.b16 %v1422
      %v1482 = vunpack.c.l.b16 %v1426
      %v1483 = vunpack.c.l.b16 %v1429
      %v1484 = vunpack.c.l.b16 %v1433
      %v1485 = vunpack.c.l.b16 %v1436
      %v1486 = vunpack.c.l.b16 %v1440
      %v1487 = vunpack.c.l.b16 %v1443
      %v1488 = vunpack.c.l.b16 %v1447
      %v1489 = vunpack.c.l.b16 %v1450
      %v1490 = vunpack.c.l.b16 %v1454
      %v1491 = vunpack.c.l.b16 %v1457
      %v1492 = vpack.c.b16 %v1461, %v1460
      %v1493 = vpack.c.b16 %v1463, %v1462
      %v1494 = vpack.c.b16 %v1465, %v1464
      %v1495 = vpack.c.b16 %v1467, %v1466
      %v1496 = vpack.c.b16 %v1469, %v1468
      %v1497 = vpack.c.b16 %v1471, %v1470
      %v1498 = vpack.c.b16 %v1473, %v1472
      %v1499 = vpack.c.b16 %v1475, %v1474
      %v1500 = vpack.c.b16 %v1477, %v1476
      %v1501 = vpack.c.b16 %v1479, %v1478
      %v1502 = vpack.c.b16 %v1481, %v1480
      %v1503 = vpack.c.b16 %v1483, %v1482
      %v1504 = vpack.c.b16 %v1485, %v1484
      %v1505 = vpack.c.b16 %v1487, %v1486
      %v1506 = vpack.c.b16 %v1489, %v1488
      %v1507 = vpack.c.b16 %v1491, %v1490
      %v1509 = vsel %vm352, %v1492, 0
      %v1512 = vsel %vm352, %v1493, 0
      %v1515 = vsel %vm352, %v1494, 0
      %v1518 = vsel %vm352, %v1495, 0
      %v1521 = vsel %vm352, %v1496, 0
      %v1524 = vsel %vm352, %v1497, 0
      %v1527 = vsel %vm352, %v1498, 0
      %v1530 = vsel %vm352, %v1499, 0
      %v1533 = vsel %vm352, %v1500, 0
      %v1536 = vsel %vm352, %v1501, 0
      %v1539 = vsel %vm352, %v1502, 0
      %v1542 = vsel %vm352, %v1503, 0
      %v1545 = vsel %vm352, %v1504, 0
      %v1548 = vsel %vm352, %v1505, 0
      %v1551 = vsel %vm352, %v1506, 0
      %v1554 = vsel %vm352, %v1507, 0
      %v1557 = vsel %vm401, %v1459, 0
      %1559 = vmatpush.bf16.msra.mxu0 0
      %1560 = vmatpush.bf16.msra.mxu0 0
      %1561 = vmatpush.bf16.msra.mxu0 0
      %1562 = vmatpush.bf16.msra.mxu0 0
      %1563 = vmatpush.bf16.msra.mxu0 0
      %1564 = vmatpush.bf16.msra.mxu0 0
      %1565 = vmatpush.bf16.msra.mxu0 0
      %1566 = vmatpush.bf16.msra.mxu0 %v1557
      %1567 = vmatmul.bf16.gmra.mxu0 %v1509
      %v1568 = vpop.f32.mrf.mxu0
      %v1569 = vadd.f32 0.0, %v1568
      %v1570 = vpop.f32.mrf.mxu0
      %v1571 = vadd.f32 0.0, %v1570
      %1572 = vmatmul.bf16.gmra.mxu0 %v1512
      %v1573 = vpop.f32.mrf.mxu0
      %v1574 = vadd.f32 0.0, %v1573
      %v1575 = vpop.f32.mrf.mxu0
      %v1576 = vadd.f32 0.0, %v1575
      %1577 = vmatmul.bf16.gmra.mxu0 %v1515
      %v1578 = vpop.f32.mrf.mxu0
      %v1579 = vadd.f32 0.0, %v1578
      %v1580 = vpop.f32.mrf.mxu0
      %v1581 = vadd.f32 0.0, %v1580
      %1582 = vmatmul.bf16.gmra.mxu0 %v1518
      %v1583 = vpop.f32.mrf.mxu0
      %v1584 = vadd.f32 0.0, %v1583
      %v1585 = vpop.f32.mrf.mxu0
      %v1586 = vadd.f32 0.0, %v1585
      %1587 = vmatmul.bf16.gmra.mxu0 %v1521
      %v1588 = vpop.f32.mrf.mxu0
      %v1589 = vadd.f32 0.0, %v1588
      %v1590 = vpop.f32.mrf.mxu0
      %v1591 = vadd.f32 0.0, %v1590
      %1592 = vmatmul.bf16.gmra.mxu0 %v1524
      %v1593 = vpop.f32.mrf.mxu0
      %v1594 = vadd.f32 0.0, %v1593
      %v1595 = vpop.f32.mrf.mxu0
      %v1596 = vadd.f32 0.0, %v1595
      %1597 = vmatmul.bf16.gmra.mxu0 %v1527
      %v1598 = vpop.f32.mrf.mxu0
      %v1599 = vadd.f32 0.0, %v1598
      %v1600 = vpop.f32.mrf.mxu0
      %v1601 = vadd.f32 0.0, %v1600
      %1602 = vmatmul.bf16.gmra.mxu0 %v1530
      %v1603 = vpop.f32.mrf.mxu0
      %v1604 = vadd.f32 0.0, %v1603
      %v1605 = vpop.f32.mrf.mxu0
      %v1606 = vadd.f32 0.0, %v1605
      %1607 = vmatmul.bf16.gmra.mxu0 %v1533
      %v1608 = vpop.f32.mrf.mxu0
      %v1609 = vadd.f32 0.0, %v1608
      %v1610 = vpop.f32.mrf.mxu0
      %v1611 = vadd.f32 0.0, %v1610
      %1612 = vmatmul.bf16.gmra.mxu0 %v1536
      %v1613 = vpop.f32.mrf.mxu0
      %v1614 = vadd.f32 0.0, %v1613
      %v1615 = vpop.f32.mrf.mxu0
      %v1616 = vadd.f32 0.0, %v1615
      %1617 = vmatmul.bf16.gmra.mxu0 %v1539
      %v1618 = vpop.f32.mrf.mxu0
      %v1619 = vadd.f32 0.0, %v1618
      %v1620 = vpop.f32.mrf.mxu0
      %v1621 = vadd.f32 0.0, %v1620
      %1622 = vmatmul.bf16.gmra.mxu0 %v1542
      %v1623 = vpop.f32.mrf.mxu0
      %v1624 = vadd.f32 0.0, %v1623
      %v1625 = vpop.f32.mrf.mxu0
      %v1626 = vadd.f32 0.0, %v1625
      %1627 = vmatmul.bf16.gmra.mxu0 %v1545
      %v1628 = vpop.f32.mrf.mxu0
      %v1629 = vadd.f32 0.0, %v1628
      %v1630 = vpop.f32.mrf.mxu0
      %v1631 = vadd.f32 0.0, %v1630
      %1632 = vmatmul.bf16.gmra.mxu0 %v1548
      %v1633 = vpop.f32.mrf.mxu0
      %v1634 = vadd.f32 0.0, %v1633
      %v1635 = vpop.f32.mrf.mxu0
      %v1636 = vadd.f32 0.0, %v1635
      %1637 = vmatmul.bf16.gmra.mxu0 %v1551
      %v1638 = vpop.f32.mrf.mxu0
      %v1639 = vadd.f32 0.0, %v1638
      %v1640 = vpop.f32.mrf.mxu0
      %v1641 = vadd.f32 0.0, %v1640
      %1642 = vmatmul.bf16.gmra.mxu0 %v1554
      %v1643 = vpop.f32.mrf.mxu0
      %v1644 = vadd.f32 0.0, %v1643
      %v1645 = vpop.f32.mrf.mxu0
      %v1646 = vadd.f32 0.0, %v1645
      %1647 = vdwg.mxu0
      %v1648 = vld [vmem:[#allocation2] sm:$0xff]
      %v1649 = vld [vmem:[#allocation2 + $0x8] sm:$0xff]
      %v1650 = vld [vmem:[#allocation2 + $0x10] sm:$0xff]
      %v1651 = vld [vmem:[#allocation2 + $0x18] sm:$0xff]
      %v1652 = vld [vmem:[#allocation2 + $0x20] sm:$0xff]
      %v1653 = vld [vmem:[#allocation2 + $0x28] sm:$0xff]
      %v1654 = vld [vmem:[#allocation2 + $0x30] sm:$0xff]
      %v1655 = vld [vmem:[#allocation2 + $0x38] sm:$0xff]
      %v1656 = vld [vmem:[#allocation2 + $0x40] sm:$0xff]
      %v1657 = vld [vmem:[#allocation2 + $0x48] sm:$0xff]
      %v1658 = vld [vmem:[#allocation2 + $0x50] sm:$0xff]
      %v1659 = vld [vmem:[#allocation2 + $0x58] sm:$0xff]
      %v1660 = vld [vmem:[#allocation2 + $0x60] sm:$0xff]
      %v1661 = vld [vmem:[#allocation2 + $0x68] sm:$0xff]
      %v1662 = vld [vmem:[#allocation2 + $0x70] sm:$0xff]
      %v1663 = vld [vmem:[#allocation2 + $0x78] sm:$0xff]
      %v1664 = vld [vmem:[#allocation2 + $0x80] sm:$0xff]
      %v1665 = vld [vmem:[#allocation2 + $0x88] sm:$0xff]
      %v1666 = vld [vmem:[#allocation2 + $0x90] sm:$0xff]
      %v1667 = vld [vmem:[#allocation2 + $0x98] sm:$0xff]
      %v1668 = vld [vmem:[#allocation2 + $0xa0] sm:$0xff]
      %v1669 = vld [vmem:[#allocation2 + $0xa8] sm:$0xff]
      %v1670 = vld [vmem:[#allocation2 + $0xb0] sm:$0xff]
      %v1671 = vld [vmem:[#allocation2 + $0xb8] sm:$0xff]
      %v1672 = vld [vmem:[#allocation2 + $0xc0] sm:$0xff]
      %v1673 = vld [vmem:[#allocation2 + $0xc8] sm:$0xff]
      %v1674 = vld [vmem:[#allocation2 + $0xd0] sm:$0xff]
      %v1675 = vld [vmem:[#allocation2 + $0xd8] sm:$0xff]
      %v1676 = vld [vmem:[#allocation2 + $0xe0] sm:$0xff]
      %v1677 = vld [vmem:[#allocation2 + $0xe8] sm:$0xff]
      %v1678 = vld [vmem:[#allocation2 + $0xf0] sm:$0xff]
      %v1679 = vld [vmem:[#allocation2 + $0xf8] sm:$0xff]
      %v1680 = vadd.f32 %v1648, %v1569
      %v1681 = vadd.f32 %v1649, %v1571
      %v1682 = vadd.f32 %v1650, %v1574
      %v1683 = vadd.f32 %v1651, %v1576
      %v1684 = vadd.f32 %v1652, %v1579
      %v1685 = vadd.f32 %v1653, %v1581
      %v1686 = vadd.f32 %v1654, %v1584
      %v1687 = vadd.f32 %v1655, %v1586
      %v1688 = vadd.f32 %v1656, %v1589
      %v1689 = vadd.f32 %v1657, %v1591
      %v1690 = vadd.f32 %v1658, %v1594
      %v1691 = vadd.f32 %v1659, %v1596
      %v1692 = vadd.f32 %v1660, %v1599
      %v1693 = vadd.f32 %v1661, %v1601
      %v1694 = vadd.f32 %v1662, %v1604
      %v1695 = vadd.f32 %v1663, %v1606
      %v1696 = vadd.f32 %v1664, %v1609
      %v1697 = vadd.f32 %v1665, %v1611
      %v1698 = vadd.f32 %v1666, %v1614
      %v1699 = vadd.f32 %v1667, %v1616
      %v1700 = vadd.f32 %v1668, %v1619
      %v1701 = vadd.f32 %v1669, %v1621
      %v1702 = vadd.f32 %v1670, %v1624
      %v1703 = vadd.f32 %v1671, %v1626
      %v1704 = vadd.f32 %v1672, %v1629
      %v1705 = vadd.f32 %v1673, %v1631
      %v1706 = vadd.f32 %v1674, %v1634
      %v1707 = vadd.f32 %v1675, %v1636
      %v1708 = vadd.f32 %v1676, %v1639
      %v1709 = vadd.f32 %v1677, %v1641
      %v1710 = vadd.f32 %v1678, %v1644
      %v1711 = vadd.f32 %v1679, %v1646
      %1712 = vst [vmem:[#allocation2] sm:$0xff] %v1680
      %1713 = vst [vmem:[#allocation2 + $0x8] sm:$0xff] %v1681
      %1714 = vst [vmem:[#allocation2 + $0x10] sm:$0xff] %v1682
      %1715 = vst [vmem:[#allocation2 + $0x18] sm:$0xff] %v1683
      %1716 = vst [vmem:[#allocation2 + $0x20] sm:$0xff] %v1684
      %1717 = vst [vmem:[#allocation2 + $0x28] sm:$0xff] %v1685
      %1718 = vst [vmem:[#allocation2 + $0x30] sm:$0xff] %v1686
      %1719 = vst [vmem:[#allocation2 + $0x38] sm:$0xff] %v1687
      %1720 = vst [vmem:[#allocation2 + $0x40] sm:$0xff] %v1688
      %1721 = vst [vmem:[#allocation2 + $0x48] sm:$0xff] %v1689
      %1722 = vst [vmem:[#allocation2 + $0x50] sm:$0xff] %v1690
      %1723 = vst [vmem:[#allocation2 + $0x58] sm:$0xff] %v1691
      %1724 = vst [vmem:[#allocation2 + $0x60] sm:$0xff] %v1692
      %1725 = vst [vmem:[#allocation2 + $0x68] sm:$0xff] %v1693
      %1726 = vst [vmem:[#allocation2 + $0x70] sm:$0xff] %v1694
      %1727 = vst [vmem:[#allocation2 + $0x78] sm:$0xff] %v1695
      %1728 = vst [vmem:[#allocation2 + $0x80] sm:$0xff] %v1696
      %1729 = vst [vmem:[#allocation2 + $0x88] sm:$0xff] %v1697
      %1730 = vst [vmem:[#allocation2 + $0x90] sm:$0xff] %v1698
      %1731 = vst [vmem:[#allocation2 + $0x98] sm:$0xff] %v1699
      %1732 = vst [vmem:[#allocation2 + $0xa0] sm:$0xff] %v1700
      %1733 = vst [vmem:[#allocation2 + $0xa8] sm:$0xff] %v1701
      %1734 = vst [vmem:[#allocation2 + $0xb0] sm:$0xff] %v1702
      %1735 = vst [vmem:[#allocation2 + $0xb8] sm:$0xff] %v1703
      %1736 = vst [vmem:[#allocation2 + $0xc0] sm:$0xff] %v1704
      %1737 = vst [vmem:[#allocation2 + $0xc8] sm:$0xff] %v1705
      %1738 = vst [vmem:[#allocation2 + $0xd0] sm:$0xff] %v1706
      %1739 = vst [vmem:[#allocation2 + $0xd8] sm:$0xff] %v1707
      %1740 = vst [vmem:[#allocation2 + $0xe0] sm:$0xff] %v1708
      %1741 = vst [vmem:[#allocation2 + $0xe8] sm:$0xff] %v1709
      %1742 = vst [vmem:[#allocation2 + $0xf0] sm:$0xff] %v1710
      %1743 = vst [vmem:[#allocation2 + $0xf8] sm:$0xff] %v1711
      %s1744 = scalar_lea.vmem %s224, 12
      %v1745 = vld [vmem:[%s1744] sm:$0xf]
      %v1746 = vld [vmem:[%s1744 + $0x4] sm:$0xf]
      %v1747 = vld [vmem:[%s1744 + $0xc] sm:$0xf]
      %v1748 = vld [vmem:[%s1744 + $0x10] sm:$0xf]
      %v1749 = vld [vmem:[%s1744 + $0x18] sm:$0xf]
      %v1750 = vld [vmem:[%s1744 + $0x1c] sm:$0xf]
      %v1751 = vld [vmem:[%s1744 + $0x24] sm:$0xf]
      %v1752 = vld [vmem:[%s1744 + $0x28] sm:$0xf]
      %v1753 = vld [vmem:[%s1744 + $0x30] sm:$0xf]
      %v1754 = vld [vmem:[%s1744 + $0x34] sm:$0xf]
      %v1755 = vld [vmem:[%s1744 + $0x3c] sm:$0xf]
      %v1756 = vld [vmem:[%s1744 + $0x40] sm:$0xf]
      %v1757 = vld [vmem:[%s1744 + $0x48] sm:$0xf]
      %v1758 = vld [vmem:[%s1744 + $0x4c] sm:$0xf]
      %v1759 = vld [vmem:[%s1744 + $0x54] sm:$0xf]
      %v1760 = vld [vmem:[%s1744 + $0x58] sm:$0xf]
      %v1761 = vld [vmem:[%s1744 + $0x60] sm:$0xf]
      %v1762 = vld [vmem:[%s1744 + $0x64] sm:$0xf]
      %v1763 = vld [vmem:[%s1744 + $0x6c] sm:$0xf]
      %v1764 = vld [vmem:[%s1744 + $0x70] sm:$0xf]
      %v1765 = vld [vmem:[%s1744 + $0x78] sm:$0xf]
      %v1766 = vld [vmem:[%s1744 + $0x7c] sm:$0xf]
      %v1767 = vld [vmem:[%s1744 + $0x84] sm:$0xf]
      %v1768 = vld [vmem:[%s1744 + $0x88] sm:$0xf]
      %v1769 = vld [vmem:[%s1744 + $0x90] sm:$0xf]
      %v1770 = vld [vmem:[%s1744 + $0x94] sm:$0xf]
      %v1771 = vld [vmem:[%s1744 + $0x9c] sm:$0xf]
      %v1772 = vld [vmem:[%s1744 + $0xa0] sm:$0xf]
      %v1773 = vld [vmem:[%s1744 + $0xa8] sm:$0xf]
      %v1774 = vld [vmem:[%s1744 + $0xac] sm:$0xf]
      %v1775 = vld [vmem:[%s1744 + $0xb4] sm:$0xf]
      %v1776 = vld [vmem:[%s1744 + $0xb8] sm:$0xf]
      %s1777 = scalar_lea.vmem %s1, 6
      %v1778 = vld [vmem:[%s1777] sm:$0x3]
      %v1811 = vunpack.c.l.b16 %v1745
      %v1812 = vunpack.c.l.b16 %v1746
      %v1813 = vunpack.c.l.b16 %v1747
      %v1814 = vunpack.c.l.b16 %v1748
      %v1815 = vunpack.c.l.b16 %v1749
      %v1816 = vunpack.c.l.b16 %v1750
      %v1817 = vunpack.c.l.b16 %v1751
      %v1818 = vunpack.c.l.b16 %v1752
      %v1819 = vunpack.c.l.b16 %v1753
      %v1820 = vunpack.c.l.b16 %v1754
      %v1821 = vunpack.c.l.b16 %v1755
      %v1822 = vunpack.c.l.b16 %v1756
      %v1823 = vunpack.c.l.b16 %v1757
      %v1824 = vunpack.c.l.b16 %v1758
      %v1825 = vunpack.c.l.b16 %v1759
      %v1826 = vunpack.c.l.b16 %v1760
      %v1827 = vunpack.c.l.b16 %v1761
      %v1828 = vunpack.c.l.b16 %v1762
      %v1829 = vunpack.c.l.b16 %v1763
      %v1830 = vunpack.c.l.b16 %v1764
      %v1831 = vunpack.c.l.b16 %v1765
      %v1832 = vunpack.c.l.b16 %v1766
      %v1833 = vunpack.c.l.b16 %v1767
      %v1834 = vunpack.c.l.b16 %v1768
      %v1835 = vunpack.c.l.b16 %v1769
      %v1836 = vunpack.c.l.b16 %v1770
      %v1837 = vunpack.c.l.b16 %v1771
      %v1838 = vunpack.c.l.b16 %v1772
      %v1839 = vunpack.c.l.b16 %v1773
      %v1840 = vunpack.c.l.b16 %v1774
      %v1841 = vunpack.c.l.b16 %v1775
      %v1842 = vunpack.c.l.b16 %v1776
      %v1843 = vpack.c.b16 %v1812, %v1811
      %v1844 = vpack.c.b16 %v1814, %v1813
      %v1845 = vpack.c.b16 %v1816, %v1815
      %v1846 = vpack.c.b16 %v1818, %v1817
      %v1847 = vpack.c.b16 %v1820, %v1819
      %v1848 = vpack.c.b16 %v1822, %v1821
      %v1849 = vpack.c.b16 %v1824, %v1823
      %v1850 = vpack.c.b16 %v1826, %v1825
      %v1851 = vpack.c.b16 %v1828, %v1827
      %v1852 = vpack.c.b16 %v1830, %v1829
      %v1853 = vpack.c.b16 %v1832, %v1831
      %v1854 = vpack.c.b16 %v1834, %v1833
      %v1855 = vpack.c.b16 %v1836, %v1835
      %v1856 = vpack.c.b16 %v1838, %v1837
      %v1857 = vpack.c.b16 %v1840, %v1839
      %v1858 = vpack.c.b16 %v1842, %v1841
      %v1860 = vsel %vm352, %v1843, 0
      %v1863 = vsel %vm352, %v1844, 0
      %v1866 = vsel %vm352, %v1845, 0
      %v1869 = vsel %vm352, %v1846, 0
      %v1872 = vsel %vm352, %v1847, 0
      %v1875 = vsel %vm352, %v1848, 0
      %v1878 = vsel %vm352, %v1849, 0
      %v1881 = vsel %vm352, %v1850, 0
      %v1884 = vsel %vm352, %v1851, 0
      %v1887 = vsel %vm352, %v1852, 0
      %v1890 = vsel %vm352, %v1853, 0
      %v1893 = vsel %vm352, %v1854, 0
      %v1896 = vsel %vm352, %v1855, 0
      %v1899 = vsel %vm352, %v1856, 0
      %v1902 = vsel %vm352, %v1857, 0
      %v1905 = vsel %vm352, %v1858, 0
      %v1908 = vsel %vm401, %v1778, 0
      %1910 = vmatpush.bf16.msra.mxu0 0
      %1911 = vmatpush.bf16.msra.mxu0 0
      %1912 = vmatpush.bf16.msra.mxu0 0
      %1913 = vmatpush.bf16.msra.mxu0 0
      %1914 = vmatpush.bf16.msra.mxu0 0
      %1915 = vmatpush.bf16.msra.mxu0 0
      %1916 = vmatpush.bf16.msra.mxu0 0
      %1917 = vmatpush.bf16.msra.mxu0 %v1908
      %1918 = vmatmul.bf16.gmra.mxu0 %v1860
      %v1919 = vpop.f32.mrf.mxu0
      %v1920 = vadd.f32 0.0, %v1919
      %v1921 = vpop.f32.mrf.mxu0
      %v1922 = vadd.f32 0.0, %v1921
      %1923 = vmatmul.bf16.gmra.mxu0 %v1863
      %v1924 = vpop.f32.mrf.mxu0
      %v1925 = vadd.f32 0.0, %v1924
      %v1926 = vpop.f32.mrf.mxu0
      %v1927 = vadd.f32 0.0, %v1926
      %1928 = vmatmul.bf16.gmra.mxu0 %v1866
      %v1929 = vpop.f32.mrf.mxu0
      %v1930 = vadd.f32 0.0, %v1929
      %v1931 = vpop.f32.mrf.mxu0
      %v1932 = vadd.f32 0.0, %v1931
      %1933 = vmatmul.bf16.gmra.mxu0 %v1869
      %v1934 = vpop.f32.mrf.mxu0
      %v1935 = vadd.f32 0.0, %v1934
      %v1936 = vpop.f32.mrf.mxu0
      %v1937 = vadd.f32 0.0, %v1936
      %1938 = vmatmul.bf16.gmra.mxu0 %v1872
      %v1939 = vpop.f32.mrf.mxu0
      %v1940 = vadd.f32 0.0, %v1939
      %v1941 = vpop.f32.mrf.mxu0
      %v1942 = vadd.f32 0.0, %v1941
      %1943 = vmatmul.bf16.gmra.mxu0 %v1875
      %v1944 = vpop.f32.mrf.mxu0
      %v1945 = vadd.f32 0.0, %v1944
      %v1946 = vpop.f32.mrf.mxu0
      %v1947 = vadd.f32 0.0, %v1946
      %1948 = vmatmul.bf16.gmra.mxu0 %v1878
      %v1949 = vpop.f32.mrf.mxu0
      %v1950 = vadd.f32 0.0, %v1949
      %v1951 = vpop.f32.mrf.mxu0
      %v1952 = vadd.f32 0.0, %v1951
      %1953 = vmatmul.bf16.gmra.mxu0 %v1881
      %v1954 = vpop.f32.mrf.mxu0
      %v1955 = vadd.f32 0.0, %v1954
      %v1956 = vpop.f32.mrf.mxu0
      %v1957 = vadd.f32 0.0, %v1956
      %1958 = vmatmul.bf16.gmra.mxu0 %v1884
      %v1959 = vpop.f32.mrf.mxu0
      %v1960 = vadd.f32 0.0, %v1959
      %v1961 = vpop.f32.mrf.mxu0
      %v1962 = vadd.f32 0.0, %v1961
      %1963 = vmatmul.bf16.gmra.mxu0 %v1887
      %v1964 = vpop.f32.mrf.mxu0
      %v1965 = vadd.f32 0.0, %v1964
      %v1966 = vpop.f32.mrf.mxu0
      %v1967 = vadd.f32 0.0, %v1966
      %1968 = vmatmul.bf16.gmra.mxu0 %v1890
      %v1969 = vpop.f32.mrf.mxu0
      %v1970 = vadd.f32 0.0, %v1969
      %v1971 = vpop.f32.mrf.mxu0
      %v1972 = vadd.f32 0.0, %v1971
      %1973 = vmatmul.bf16.gmra.mxu0 %v1893
      %v1974 = vpop.f32.mrf.mxu0
      %v1975 = vadd.f32 0.0, %v1974
      %v1976 = vpop.f32.mrf.mxu0
      %v1977 = vadd.f32 0.0, %v1976
      %1978 = vmatmul.bf16.gmra.mxu0 %v1896
      %v1979 = vpop.f32.mrf.mxu0
      %v1980 = vadd.f32 0.0, %v1979
      %v1981 = vpop.f32.mrf.mxu0
      %v1982 = vadd.f32 0.0, %v1981
      %1983 = vmatmul.bf16.gmra.mxu0 %v1899
      %v1984 = vpop.f32.mrf.mxu0
      %v1985 = vadd.f32 0.0, %v1984
      %v1986 = vpop.f32.mrf.mxu0
      %v1987 = vadd.f32 0.0, %v1986
      %1988 = vmatmul.bf16.gmra.mxu0 %v1902
      %v1989 = vpop.f32.mrf.mxu0
      %v1990 = vadd.f32 0.0, %v1989
      %v1991 = vpop.f32.mrf.mxu0
      %v1992 = vadd.f32 0.0, %v1991
      %1993 = vmatmul.bf16.gmra.mxu0 %v1905
      %v1994 = vpop.f32.mrf.mxu0
      %v1995 = vadd.f32 0.0, %v1994
      %v1996 = vpop.f32.mrf.mxu0
      %v1997 = vadd.f32 0.0, %v1996
      %1998 = vdwg.mxu0
      %v1999 = vld [vmem:[#allocation2] sm:$0xff]
      %v2000 = vld [vmem:[#allocation2 + $0x8] sm:$0xff]
      %v2001 = vld [vmem:[#allocation2 + $0x10] sm:$0xff]
      %v2002 = vld [vmem:[#allocation2 + $0x18] sm:$0xff]
      %v2003 = vld [vmem:[#allocation2 + $0x20] sm:$0xff]
      %v2004 = vld [vmem:[#allocation2 + $0x28] sm:$0xff]
      %v2005 = vld [vmem:[#allocation2 + $0x30] sm:$0xff]
      %v2006 = vld [vmem:[#allocation2 + $0x38] sm:$0xff]
      %v2007 = vld [vmem:[#allocation2 + $0x40] sm:$0xff]
      %v2008 = vld [vmem:[#allocation2 + $0x48] sm:$0xff]
      %v2009 = vld [vmem:[#allocation2 + $0x50] sm:$0xff]
      %v2010 = vld [vmem:[#allocation2 + $0x58] sm:$0xff]
      %v2011 = vld [vmem:[#allocation2 + $0x60] sm:$0xff]
      %v2012 = vld [vmem:[#allocation2 + $0x68] sm:$0xff]
      %v2013 = vld [vmem:[#allocation2 + $0x70] sm:$0xff]
      %v2014 = vld [vmem:[#allocation2 + $0x78] sm:$0xff]
      %v2015 = vld [vmem:[#allocation2 + $0x80] sm:$0xff]
      %v2016 = vld [vmem:[#allocation2 + $0x88] sm:$0xff]
      %v2017 = vld [vmem:[#allocation2 + $0x90] sm:$0xff]
      %v2018 = vld [vmem:[#allocation2 + $0x98] sm:$0xff]
      %v2019 = vld [vmem:[#allocation2 + $0xa0] sm:$0xff]
      %v2020 = vld [vmem:[#allocation2 + $0xa8] sm:$0xff]
      %v2021 = vld [vmem:[#allocation2 + $0xb0] sm:$0xff]
      %v2022 = vld [vmem:[#allocation2 + $0xb8] sm:$0xff]
      %v2023 = vld [vmem:[#allocation2 + $0xc0] sm:$0xff]
      %v2024 = vld [vmem:[#allocation2 + $0xc8] sm:$0xff]
      %v2025 = vld [vmem:[#allocation2 + $0xd0] sm:$0xff]
      %v2026 = vld [vmem:[#allocation2 + $0xd8] sm:$0xff]
      %v2027 = vld [vmem:[#allocation2 + $0xe0] sm:$0xff]
      %v2028 = vld [vmem:[#allocation2 + $0xe8] sm:$0xff]
      %v2029 = vld [vmem:[#allocation2 + $0xf0] sm:$0xff]
      %v2030 = vld [vmem:[#allocation2 + $0xf8] sm:$0xff]
      %v2031 = vadd.f32 %v1999, %v1920
      %v2032 = vadd.f32 %v2000, %v1922
      %v2033 = vadd.f32 %v2001, %v1925
      %v2034 = vadd.f32 %v2002, %v1927
      %v2035 = vadd.f32 %v2003, %v1930
      %v2036 = vadd.f32 %v2004, %v1932
      %v2037 = vadd.f32 %v2005, %v1935
      %v2038 = vadd.f32 %v2006, %v1937
      %v2039 = vadd.f32 %v2007, %v1940
      %v2040 = vadd.f32 %v2008, %v1942
      %v2041 = vadd.f32 %v2009, %v1945
      %v2042 = vadd.f32 %v2010, %v1947
      %v2043 = vadd.f32 %v2011, %v1950
      %v2044 = vadd.f32 %v2012, %v1952
      %v2045 = vadd.f32 %v2013, %v1955
      %v2046 = vadd.f32 %v2014, %v1957
      %v2047 = vadd.f32 %v2015, %v1960
      %v2048 = vadd.f32 %v2016, %v1962
      %v2049 = vadd.f32 %v2017, %v1965
      %v2050 = vadd.f32 %v2018, %v1967
      %v2051 = vadd.f32 %v2019, %v1970
      %v2052 = vadd.f32 %v2020, %v1972
      %v2053 = vadd.f32 %v2021, %v1975
      %v2054 = vadd.f32 %v2022, %v1977
      %v2055 = vadd.f32 %v2023, %v1980
      %v2056 = vadd.f32 %v2024, %v1982
      %v2057 = vadd.f32 %v2025, %v1985
      %v2058 = vadd.f32 %v2026, %v1987
      %v2059 = vadd.f32 %v2027, %v1990
      %v2060 = vadd.f32 %v2028, %v1992
      %v2061 = vadd.f32 %v2029, %v1995
      %v2062 = vadd.f32 %v2030, %v1997
      %2063 = vst [vmem:[#allocation2] sm:$0xff] %v2031
      %2064 = vst [vmem:[#allocation2 + $0x8] sm:$0xff] %v2032
      %2065 = vst [vmem:[#allocation2 + $0x10] sm:$0xff] %v2033
      %2066 = vst [vmem:[#allocation2 + $0x18] sm:$0xff] %v2034
      %2067 = vst [vmem:[#allocation2 + $0x20] sm:$0xff] %v2035
      %2068 = vst [vmem:[#allocation2 + $0x28] sm:$0xff] %v2036
      %2069 = vst [vmem:[#allocation2 + $0x30] sm:$0xff] %v2037
      %2070 = vst [vmem:[#allocation2 + $0x38] sm:$0xff] %v2038
      %2071 = vst [vmem:[#allocation2 + $0x40] sm:$0xff] %v2039
      %2072 = vst [vmem:[#allocation2 + $0x48] sm:$0xff] %v2040
      %2073 = vst [vmem:[#allocation2 + $0x50] sm:$0xff] %v2041
      %2074 = vst [vmem:[#allocation2 + $0x58] sm:$0xff] %v2042
      %2075 = vst [vmem:[#allocation2 + $0x60] sm:$0xff] %v2043
      %2076 = vst [vmem:[#allocation2 + $0x68] sm:$0xff] %v2044
      %2077 = vst [vmem:[#allocation2 + $0x70] sm:$0xff] %v2045
      %2078 = vst [vmem:[#allocation2 + $0x78] sm:$0xff] %v2046
      %2079 = vst [vmem:[#allocation2 + $0x80] sm:$0xff] %v2047
      %2080 = vst [vmem:[#allocation2 + $0x88] sm:$0xff] %v2048
      %2081 = vst [vmem:[#allocation2 + $0x90] sm:$0xff] %v2049
      %2082 = vst [vmem:[#allocation2 + $0x98] sm:$0xff] %v2050
      %2083 = vst [vmem:[#allocation2 + $0xa0] sm:$0xff] %v2051
      %2084 = vst [vmem:[#allocation2 + $0xa8] sm:$0xff] %v2052
      %2085 = vst [vmem:[#allocation2 + $0xb0] sm:$0xff] %v2053
      %2086 = vst [vmem:[#allocation2 + $0xb8] sm:$0xff] %v2054
      %2087 = vst [vmem:[#allocation2 + $0xc0] sm:$0xff] %v2055
      %2088 = vst [vmem:[#allocation2 + $0xc8] sm:$0xff] %v2056
      %2089 = vst [vmem:[#allocation2 + $0xd0] sm:$0xff] %v2057
      %2090 = vst [vmem:[#allocation2 + $0xd8] sm:$0xff] %v2058
      %2091 = vst [vmem:[#allocation2 + $0xe0] sm:$0xff] %v2059
      %2092 = vst [vmem:[#allocation2 + $0xe8] sm:$0xff] %v2060
      %2093 = vst [vmem:[#allocation2 + $0xf0] sm:$0xff] %v2061
      %2094 = vst [vmem:[#allocation2 + $0xf8] sm:$0xff] %v2062
      %v2095 = vld [vmem:[%s1744] sm:$0xf]
      %v2096 = vld [vmem:[%s1744 + $0x4] sm:$0xf]
      %v2097 = vld [vmem:[%s1744 + $0x8] sm:$0x1]
      %v2098 = vld [vmem:[%s1744 + $0xc] sm:$0xf]
      %v2099 = vld [vmem:[%s1744 + $0x10] sm:$0xf]
      %v2100 = vld [vmem:[%s1744 + $0x14] sm:$0x1]
      %v2101 = vld [vmem:[%s1744 + $0x18] sm:$0xf]
      %v2102 = vld [vmem:[%s1744 + $0x1c] sm:$0xf]
      %v2103 = vld [vmem:[%s1744 + $0x20] sm:$0x1]
      %v2104 = vld [vmem:[%s1744 + $0x24] sm:$0xf]
      %v2105 = vld [vmem:[%s1744 + $0x28] sm:$0xf]
      %v2106 = vld [vmem:[%s1744 + $0x2c] sm:$0x1]
      %v2107 = vld [vmem:[%s1744 + $0x30] sm:$0xf]
      %v2108 = vld [vmem:[%s1744 + $0x34] sm:$0xf]
      %v2109 = vld [vmem:[%s1744 + $0x38] sm:$0x1]
      %v2110 = vld [vmem:[%s1744 + $0x3c] sm:$0xf]
      %v2111 = vld [vmem:[%s1744 + $0x40] sm:$0xf]
      %v2112 = vld [vmem:[%s1744 + $0x44] sm:$0x1]
      %v2113 = vld [vmem:[%s1744 + $0x48] sm:$0xf]
      %v2114 = vld [vmem:[%s1744 + $0x4c] sm:$0xf]
      %v2115 = vld [vmem:[%s1744 + $0x50] sm:$0x1]
      %v2116 = vld [vmem:[%s1744 + $0x54] sm:$0xf]
      %v2117 = vld [vmem:[%s1744 + $0x58] sm:$0xf]
      %v2118 = vld [vmem:[%s1744 + $0x5c] sm:$0x1]
      %v2119 = vld [vmem:[%s1744 + $0x60] sm:$0xf]
      %v2120 = vld [vmem:[%s1744 + $0x64] sm:$0xf]
      %v2121 = vld [vmem:[%s1744 + $0x68] sm:$0x1]
      %v2122 = vld [vmem:[%s1744 + $0x6c] sm:$0xf]
      %v2123 = vld [vmem:[%s1744 + $0x70] sm:$0xf]
      %v2124 = vld [vmem:[%s1744 + $0x74] sm:$0x1]
      %v2125 = vld [vmem:[%s1744 + $0x78] sm:$0xf]
      %v2126 = vld [vmem:[%s1744 + $0x7c] sm:$0xf]
      %v2127 = vld [vmem:[%s1744 + $0x80] sm:$0x1]
      %v2128 = vld [vmem:[%s1744 + $0x84] sm:$0xf]
      %v2129 = vld [vmem:[%s1744 + $0x88] sm:$0xf]
      %v2130 = vld [vmem:[%s1744 + $0x8c] sm:$0x1]
      %v2131 = vld [vmem:[%s1744 + $0x90] sm:$0xf]
      %v2132 = vld [vmem:[%s1744 + $0x94] sm:$0xf]
      %v2133 = vld [vmem:[%s1744 + $0x98] sm:$0x1]
      %v2134 = vld [vmem:[%s1744 + $0x9c] sm:$0xf]
      %v2135 = vld [vmem:[%s1744 + $0xa0] sm:$0xf]
      %v2136 = vld [vmem:[%s1744 + $0xa4] sm:$0x1]
      %v2137 = vld [vmem:[%s1744 + $0xa8] sm:$0xf]
      %v2138 = vld [vmem:[%s1744 + $0xac] sm:$0xf]
      %v2139 = vld [vmem:[%s1744 + $0xb0] sm:$0x1]
      %v2140 = vld [vmem:[%s1744 + $0xb4] sm:$0xf]
      %v2141 = vld [vmem:[%s1744 + $0xb8] sm:$0xf]
      %v2142 = vld [vmem:[%s1744 + $0xbc] sm:$0x1]
      %v2144 = vshrl.u32 %v2095, 16
      %v2146 = vrot.slane %v2144, 4
      %v2147 = vshll.u32 %v2095, 16
      %v2149 = vrot.slane %v2147, 5
      %v2150 = vor.u32 %v2146, %v2149
      %v2151 = vrot.slane %v2150, 4
      %v2153 = vshll.u32 %v2096, 16
      %v2155 = vrot.slane %v2153, 5
      %v2156 = vsel %vm576, %v2151, %v2155
      %v2157 = vshrl.u32 %v2096, 16
      %v2159 = vrot.slane %v2157, 4
      %v2160 = vor.u32 %v2159, %v2155
      %v2161 = vrot.slane %v2160, 4
      %v2163 = vshll.u32 %v2097, 16
      %v2165 = vrot.slane %v2163, 5
      %v2166 = vsel %vm576, %v2161, %v2165
      %v2168 = vshrl.u32 %v2098, 16
      %v2170 = vrot.slane %v2168, 4
      %v2171 = vshll.u32 %v2098, 16
      %v2173 = vrot.slane %v2171, 5
      %v2174 = vor.u32 %v2170, %v2173
      %v2175 = vrot.slane %v2174, 4
      %v2177 = vshll.u32 %v2099, 16
      %v2179 = vrot.slane %v2177, 5
      %v2180 = vsel %vm576, %v2175, %v2179
      %v2181 = vshrl.u32 %v2099, 16
      %v2183 = vrot.slane %v2181, 4
      %v2184 = vor.u32 %v2183, %v2179
      %v2185 = vrot.slane %v2184, 4
      %v2187 = vshll.u32 %v2100, 16
      %v2189 = vrot.slane %v2187, 5
      %v2190 = vsel %vm576, %v2185, %v2189
      %v2192 = vshrl.u32 %v2101, 16
      %v2194 = vrot.slane %v2192, 4
      %v2195 = vshll.u32 %v2101, 16
      %v2197 = vrot.slane %v2195, 5
      %v2198 = vor.u32 %v2194, %v2197
      %v2199 = vrot.slane %v2198, 4
      %v2201 = vshll.u32 %v2102, 16
      %v2203 = vrot.slane %v2201, 5
      %v2204 = vsel %vm576, %v2199, %v2203
      %v2205 = vshrl.u32 %v2102, 16
      %v2207 = vrot.slane %v2205, 4
      %v2208 = vor.u32 %v2207, %v2203
      %v2209 = vrot.slane %v2208, 4
      %v2211 = vshll.u32 %v2103, 16
      %v2213 = vrot.slane %v2211, 5
      %v2214 = vsel %vm576, %v2209, %v2213
      %v2216 = vshrl.u32 %v2104, 16
      %v2218 = vrot.slane %v2216, 4
      %v2219 = vshll.u32 %v2104, 16
      %v2221 = vrot.slane %v2219, 5
      %v2222 = vor.u32 %v2218, %v2221
      %v2223 = vrot.slane %v2222, 4
      %v2225 = vshll.u32 %v2105, 16
      %v2227 = vrot.slane %v2225, 5
      %v2228 = vsel %vm576, %v2223, %v2227
      %v2229 = vshrl.u32 %v2105, 16
      %v2231 = vrot.slane %v2229, 4
      %v2232 = vor.u32 %v2231, %v2227
      %v2233 = vrot.slane %v2232, 4
      %v2235 = vshll.u32 %v2106, 16
      %v2237 = vrot.slane %v2235, 5
      %v2238 = vsel %vm576, %v2233, %v2237
      %v2240 = vshrl.u32 %v2107, 16
      %v2242 = vrot.slane %v2240, 4
      %v2243 = vshll.u32 %v2107, 16
      %v2245 = vrot.slane %v2243, 5
      %v2246 = vor.u32 %v2242, %v2245
      %v2247 = vrot.slane %v2246, 4
      %v2249 = vshll.u32 %v2108, 16
      %v2251 = vrot.slane %v2249, 5
      %v2252 = vsel %vm576, %v2247, %v2251
      %v2253 = vshrl.u32 %v2108, 16
      %v2255 = vrot.slane %v2253, 4
      %v2256 = vor.u32 %v2255, %v2251
      %v2257 = vrot.slane %v2256, 4
      %v2259 = vshll.u32 %v2109, 16
      %v2261 = vrot.slane %v2259, 5
      %v2262 = vsel %vm576, %v2257, %v2261
      %v2264 = vshrl.u32 %v2110, 16
      %v2266 = vrot.slane %v2264, 4
      %v2267 = vshll.u32 %v2110, 16
      %v2269 = vrot.slane %v2267, 5
      %v2270 = vor.u32 %v2266, %v2269
      %v2271 = vrot.slane %v2270, 4
      %v2273 = vshll.u32 %v2111, 16
      %v2275 = vrot.slane %v2273, 5
      %v2276 = vsel %vm576, %v2271, %v2275
      %v2277 = vshrl.u32 %v2111, 16
      %v2279 = vrot.slane %v2277, 4
      %v2280 = vor.u32 %v2279, %v2275
      %v2281 = vrot.slane %v2280, 4
      %v2283 = vshll.u32 %v2112, 16
      %v2285 = vrot.slane %v2283, 5
      %v2286 = vsel %vm576, %v2281, %v2285
      %v2288 = vshrl.u32 %v2113, 16
      %v2290 = vrot.slane %v2288, 4
      %v2291 = vshll.u32 %v2113, 16
      %v2293 = vrot.slane %v2291, 5
      %v2294 = vor.u32 %v2290, %v2293
      %v2295 = vrot.slane %v2294, 4
      %v2297 = vshll.u32 %v2114, 16
      %v2299 = vrot.slane %v2297, 5
      %v2300 = vsel %vm576, %v2295, %v2299
      %v2301 = vshrl.u32 %v2114, 16
      %v2303 = vrot.slane %v2301, 4
      %v2304 = vor.u32 %v2303, %v2299
      %v2305 = vrot.slane %v2304, 4
      %v2307 = vshll.u32 %v2115, 16
      %v2309 = vrot.slane %v2307, 5
      %v2310 = vsel %vm576, %v2305, %v2309
      %v2312 = vshrl.u32 %v2116, 16
      %v2314 = vrot.slane %v2312, 4
      %v2315 = vshll.u32 %v2116, 16
      %v2317 = vrot.slane %v2315, 5
      %v2318 = vor.u32 %v2314, %v2317
      %v2319 = vrot.slane %v2318, 4
      %v2321 = vshll.u32 %v2117, 16
      %v2323 = vrot.slane %v2321, 5
      %v2324 = vsel %vm576, %v2319, %v2323
      %v2325 = vshrl.u32 %v2117, 16
      %v2327 = vrot.slane %v2325, 4
      %v2328 = vor.u32 %v2327, %v2323
      %v2329 = vrot.slane %v2328, 4
      %v2331 = vshll.u32 %v2118, 16
      %v2333 = vrot.slane %v2331, 5
      %v2334 = vsel %vm576, %v2329, %v2333
      %v2336 = vshrl.u32 %v2119, 16
      %v2338 = vrot.slane %v2336, 4
      %v2339 = vshll.u32 %v2119, 16
      %v2341 = vrot.slane %v2339, 5
      %v2342 = vor.u32 %v2338, %v2341
      %v2343 = vrot.slane %v2342, 4
      %v2345 = vshll.u32 %v2120, 16
      %v2347 = vrot.slane %v2345, 5
      %v2348 = vsel %vm576, %v2343, %v2347
      %v2349 = vshrl.u32 %v2120, 16
      %v2351 = vrot.slane %v2349, 4
      %v2352 = vor.u32 %v2351, %v2347
      %v2353 = vrot.slane %v2352, 4
      %v2355 = vshll.u32 %v2121, 16
      %v2357 = vrot.slane %v2355, 5
      %v2358 = vsel %vm576, %v2353, %v2357
      %v2360 = vshrl.u32 %v2122, 16
      %v2362 = vrot.slane %v2360, 4
      %v2363 = vshll.u32 %v2122, 16
      %v2365 = vrot.slane %v2363, 5
      %v2366 = vor.u32 %v2362, %v2365
      %v2367 = vrot.slane %v2366, 4
      %v2369 = vshll.u32 %v2123, 16
      %v2371 = vrot.slane %v2369, 5
      %v2372 = vsel %vm576, %v2367, %v2371
      %v2373 = vshrl.u32 %v2123, 16
      %v2375 = vrot.slane %v2373, 4
      %v2376 = vor.u32 %v2375, %v2371
      %v2377 = vrot.slane %v2376, 4
      %v2379 = vshll.u32 %v2124, 16
      %v2381 = vrot.slane %v2379, 5
      %v2382 = vsel %vm576, %v2377, %v2381
      %v2384 = vshrl.u32 %v2125, 16
      %v2386 = vrot.slane %v2384, 4
      %v2387 = vshll.u32 %v2125, 16
      %v2389 = vrot.slane %v2387, 5
      %v2390 = vor.u32 %v2386, %v2389
      %v2391 = vrot.slane %v2390, 4
      %v2393 = vshll.u32 %v2126, 16
      %v2395 = vrot.slane %v2393, 5
      %v2396 = vsel %vm576, %v2391, %v2395
      %v2397 = vshrl.u32 %v2126, 16
      %v2399 = vrot.slane %v2397, 4
      %v2400 = vor.u32 %v2399, %v2395
      %v2401 = vrot.slane %v2400, 4
      %v2403 = vshll.u32 %v2127, 16
      %v2405 = vrot.slane %v2403, 5
      %v2406 = vsel %vm576, %v2401, %v2405
      %v2408 = vshrl.u32 %v2128, 16
      %v2410 = vrot.slane %v2408, 4
      %v2411 = vshll.u32 %v2128, 16
      %v2413 = vrot.slane %v2411, 5
      %v2414 = vor.u32 %v2410, %v2413
      %v2415 = vrot.slane %v2414, 4
      %v2417 = vshll.u32 %v2129, 16
      %v2419 = vrot.slane %v2417, 5
      %v2420 = vsel %vm576, %v2415, %v2419
      %v2421 = vshrl.u32 %v2129, 16
      %v2423 = vrot.slane %v2421, 4
      %v2424 = vor.u32 %v2423, %v2419
      %v2425 = vrot.slane %v2424, 4
      %v2427 = vshll.u32 %v2130, 16
      %v2429 = vrot.slane %v2427, 5
      %v2430 = vsel %vm576, %v2425, %v2429
      %v2432 = vshrl.u32 %v2131, 16
      %v2434 = vrot.slane %v2432, 4
      %v2435 = vshll.u32 %v2131, 16
      %v2437 = vrot.slane %v2435, 5
      %v2438 = vor.u32 %v2434, %v2437
      %v2439 = vrot.slane %v2438, 4
      %v2441 = vshll.u32 %v2132, 16
      %v2443 = vrot.slane %v2441, 5
      %v2444 = vsel %vm576, %v2439, %v2443
      %v2445 = vshrl.u32 %v2132, 16
      %v2447 = vrot.slane %v2445, 4
      %v2448 = vor.u32 %v2447, %v2443
      %v2449 = vrot.slane %v2448, 4
      %v2451 = vshll.u32 %v2133, 16
      %v2453 = vrot.slane %v2451, 5
      %v2454 = vsel %vm576, %v2449, %v2453
      %v2456 = vshrl.u32 %v2134, 16
      %v2458 = vrot.slane %v2456, 4
      %v2459 = vshll.u32 %v2134, 16
      %v2461 = vrot.slane %v2459, 5
      %v2462 = vor.u32 %v2458, %v2461
      %v2463 = vrot.slane %v2462, 4
      %v2465 = vshll.u32 %v2135, 16
      %v2467 = vrot.slane %v2465, 5
      %v2468 = vsel %vm576, %v2463, %v2467
      %v2469 = vshrl.u32 %v2135, 16
      %v2471 = vrot.slane %v2469, 4
      %v2472 = vor.u32 %v2471, %v2467
      %v2473 = vrot.slane %v2472, 4
      %v2475 = vshll.u32 %v2136, 16
      %v2477 = vrot.slane %v2475, 5
      %v2478 = vsel %vm576, %v2473, %v2477
      %v2480 = vshrl.u32 %v2137, 16
      %v2482 = vrot.slane %v2480, 4
      %v2483 = vshll.u32 %v2137, 16
      %v2485 = vrot.slane %v2483, 5
      %v2486 = vor.u32 %v2482, %v2485
      %v2487 = vrot.slane %v2486, 4
      %v2489 = vshll.u32 %v2138, 16
      %v2491 = vrot.slane %v2489, 5
      %v2492 = vsel %vm576, %v2487, %v2491
      %v2493 = vshrl.u32 %v2138, 16
      %v2495 = vrot.slane %v2493, 4
      %v2496 = vor.u32 %v2495, %v2491
      %v2497 = vrot.slane %v2496, 4
      %v2499 = vshll.u32 %v2139, 16
      %v2501 = vrot.slane %v2499, 5
      %v2502 = vsel %vm576, %v2497, %v2501
      %v2504 = vshrl.u32 %v2140, 16
      %v2506 = vrot.slane %v2504, 4
      %v2507 = vshll.u32 %v2140, 16
      %v2509 = vrot.slane %v2507, 5
      %v2510 = vor.u32 %v2506, %v2509
      %v2511 = vrot.slane %v2510, 4
      %v2513 = vshll.u32 %v2141, 16
      %v2515 = vrot.slane %v2513, 5
      %v2516 = vsel %vm576, %v2511, %v2515
      %v2517 = vshrl.u32 %v2141, 16
      %v2519 = vrot.slane %v2517, 4
      %v2520 = vor.u32 %v2519, %v2515
      %v2521 = vrot.slane %v2520, 4
      %v2523 = vshll.u32 %v2142, 16
      %v2525 = vrot.slane %v2523, 5
      %v2526 = vsel %vm576, %v2521, %v2525
      %s2527 = scalar_lea.vmem %s1, 8
      %v2528 = vld [vmem:[%s2527] sm:$0x3]
      %v2529 = vunpack.c.l.b16 %v2156
      %v2530 = vunpack.c.l.b16 %v2166
      %v2531 = vunpack.c.l.b16 %v2180
      %v2532 = vunpack.c.l.b16 %v2190
      %v2533 = vunpack.c.l.b16 %v2204
      %v2534 = vunpack.c.l.b16 %v2214
      %v2535 = vunpack.c.l.b16 %v2228
      %v2536 = vunpack.c.l.b16 %v2238
      %v2537 = vunpack.c.l.b16 %v2252
      %v2538 = vunpack.c.l.b16 %v2262
      %v2539 = vunpack.c.l.b16 %v2276
      %v2540 = vunpack.c.l.b16 %v2286
      %v2541 = vunpack.c.l.b16 %v2300
      %v2542 = vunpack.c.l.b16 %v2310
      %v2543 = vunpack.c.l.b16 %v2324
      %v2544 = vunpack.c.l.b16 %v2334
      %v2545 = vunpack.c.l.b16 %v2348
      %v2546 = vunpack.c.l.b16 %v2358
      %v2547 = vunpack.c.l.b16 %v2372
      %v2548 = vunpack.c.l.b16 %v2382
      %v2549 = vunpack.c.l.b16 %v2396
      %v2550 = vunpack.c.l.b16 %v2406
      %v2551 = vunpack.c.l.b16 %v2420
      %v2552 = vunpack.c.l.b16 %v2430
      %v2553 = vunpack.c.l.b16 %v2444
      %v2554 = vunpack.c.l.b16 %v2454
      %v2555 = vunpack.c.l.b16 %v2468
      %v2556 = vunpack.c.l.b16 %v2478
      %v2557 = vunpack.c.l.b16 %v2492
      %v2558 = vunpack.c.l.b16 %v2502
      %v2559 = vunpack.c.l.b16 %v2516
      %v2560 = vunpack.c.l.b16 %v2526
      %v2561 = vpack.c.b16 %v2530, %v2529
      %v2562 = vpack.c.b16 %v2532, %v2531
      %v2563 = vpack.c.b16 %v2534, %v2533
      %v2564 = vpack.c.b16 %v2536, %v2535
      %v2565 = vpack.c.b16 %v2538, %v2537
      %v2566 = vpack.c.b16 %v2540, %v2539
      %v2567 = vpack.c.b16 %v2542, %v2541
      %v2568 = vpack.c.b16 %v2544, %v2543
      %v2569 = vpack.c.b16 %v2546, %v2545
      %v2570 = vpack.c.b16 %v2548, %v2547
      %v2571 = vpack.c.b16 %v2550, %v2549
      %v2572 = vpack.c.b16 %v2552, %v2551
      %v2573 = vpack.c.b16 %v2554, %v2553
      %v2574 = vpack.c.b16 %v2556, %v2555
      %v2575 = vpack.c.b16 %v2558, %v2557
      %v2576 = vpack.c.b16 %v2560, %v2559
      %v2578 = vsel %vm352, %v2561, 0
      %v2581 = vsel %vm352, %v2562, 0
      %v2584 = vsel %vm352, %v2563, 0
      %v2587 = vsel %vm352, %v2564, 0
      %v2590 = vsel %vm352, %v2565, 0
      %v2593 = vsel %vm352, %v2566, 0
      %v2596 = vsel %vm352, %v2567, 0
      %v2599 = vsel %vm352, %v2568, 0
      %v2602 = vsel %vm352, %v2569, 0
      %v2605 = vsel %vm352, %v2570, 0
      %v2608 = vsel %vm352, %v2571, 0
      %v2611 = vsel %vm352, %v2572, 0
      %v2614 = vsel %vm352, %v2573, 0
      %v2617 = vsel %vm352, %v2574, 0
      %v2620 = vsel %vm352, %v2575, 0
      %v2623 = vsel %vm352, %v2576, 0
      %v2626 = vsel %vm401, %v2528, 0
      %2628 = vmatpush.bf16.msra.mxu0 0
      %2629 = vmatpush.bf16.msra.mxu0 0
      %2630 = vmatpush.bf16.msra.mxu0 0
      %2631 = vmatpush.bf16.msra.mxu0 0
      %2632 = vmatpush.bf16.msra.mxu0 0
      %2633 = vmatpush.bf16.msra.mxu0 0
      %2634 = vmatpush.bf16.msra.mxu0 0
      %2635 = vmatpush.bf16.msra.mxu0 %v2626
      %2636 = vmatmul.bf16.gmra.mxu0 %v2578
      %v2637 = vpop.f32.mrf.mxu0
      %v2638 = vadd.f32 0.0, %v2637
      %v2639 = vpop.f32.mrf.mxu0
      %v2640 = vadd.f32 0.0, %v2639
      %2641 = vmatmul.bf16.gmra.mxu0 %v2581
      %v2642 = vpop.f32.mrf.mxu0
      %v2643 = vadd.f32 0.0, %v2642
      %v2644 = vpop.f32.mrf.mxu0
      %v2645 = vadd.f32 0.0, %v2644
      %2646 = vmatmul.bf16.gmra.mxu0 %v2584
      %v2647 = vpop.f32.mrf.mxu0
      %v2648 = vadd.f32 0.0, %v2647
      %v2649 = vpop.f32.mrf.mxu0
      %v2650 = vadd.f32 0.0, %v2649
      %2651 = vmatmul.bf16.gmra.mxu0 %v2587
      %v2652 = vpop.f32.mrf.mxu0
      %v2653 = vadd.f32 0.0, %v2652
      %v2654 = vpop.f32.mrf.mxu0
      %v2655 = vadd.f32 0.0, %v2654
      %2656 = vmatmul.bf16.gmra.mxu0 %v2590
      %v2657 = vpop.f32.mrf.mxu0
      %v2658 = vadd.f32 0.0, %v2657
      %v2659 = vpop.f32.mrf.mxu0
      %v2660 = vadd.f32 0.0, %v2659
      %2661 = vmatmul.bf16.gmra.mxu0 %v2593
      %v2662 = vpop.f32.mrf.mxu0
      %v2663 = vadd.f32 0.0, %v2662
      %v2664 = vpop.f32.mrf.mxu0
      %v2665 = vadd.f32 0.0, %v2664
      %2666 = vmatmul.bf16.gmra.mxu0 %v2596
      %v2667 = vpop.f32.mrf.mxu0
      %v2668 = vadd.f32 0.0, %v2667
      %v2669 = vpop.f32.mrf.mxu0
      %v2670 = vadd.f32 0.0, %v2669
      %2671 = vmatmul.bf16.gmra.mxu0 %v2599
      %v2672 = vpop.f32.mrf.mxu0
      %v2673 = vadd.f32 0.0, %v2672
      %v2674 = vpop.f32.mrf.mxu0
      %v2675 = vadd.f32 0.0, %v2674
      %2676 = vmatmul.bf16.gmra.mxu0 %v2602
      %v2677 = vpop.f32.mrf.mxu0
      %v2678 = vadd.f32 0.0, %v2677
      %v2679 = vpop.f32.mrf.mxu0
      %v2680 = vadd.f32 0.0, %v2679
      %2681 = vmatmul.bf16.gmra.mxu0 %v2605
      %v2682 = vpop.f32.mrf.mxu0
      %v2683 = vadd.f32 0.0, %v2682
      %v2684 = vpop.f32.mrf.mxu0
      %v2685 = vadd.f32 0.0, %v2684
      %2686 = vmatmul.bf16.gmra.mxu0 %v2608
      %v2687 = vpop.f32.mrf.mxu0
      %v2688 = vadd.f32 0.0, %v2687
      %v2689 = vpop.f32.mrf.mxu0
      %v2690 = vadd.f32 0.0, %v2689
      %2691 = vmatmul.bf16.gmra.mxu0 %v2611
      %v2692 = vpop.f32.mrf.mxu0
      %v2693 = vadd.f32 0.0, %v2692
      %v2694 = vpop.f32.mrf.mxu0
      %v2695 = vadd.f32 0.0, %v2694
      %2696 = vmatmul.bf16.gmra.mxu0 %v2614
      %v2697 = vpop.f32.mrf.mxu0
      %v2698 = vadd.f32 0.0, %v2697
      %v2699 = vpop.f32.mrf.mxu0
      %v2700 = vadd.f32 0.0, %v2699
      %2701 = vmatmul.bf16.gmra.mxu0 %v2617
      %v2702 = vpop.f32.mrf.mxu0
      %v2703 = vadd.f32 0.0, %v2702
      %v2704 = vpop.f32.mrf.mxu0
      %v2705 = vadd.f32 0.0, %v2704
      %2706 = vmatmul.bf16.gmra.mxu0 %v2620
      %v2707 = vpop.f32.mrf.mxu0
      %v2708 = vadd.f32 0.0, %v2707
      %v2709 = vpop.f32.mrf.mxu0
      %v2710 = vadd.f32 0.0, %v2709
      %2711 = vmatmul.bf16.gmra.mxu0 %v2623
      %v2712 = vpop.f32.mrf.mxu0
      %v2713 = vadd.f32 0.0, %v2712
      %v2714 = vpop.f32.mrf.mxu0
      %v2715 = vadd.f32 0.0, %v2714
      %2716 = vdwg.mxu0
      %v2717 = vld [vmem:[#allocation2] sm:$0xff]
      %v2718 = vld [vmem:[#allocation2 + $0x8] sm:$0xff]
      %v2719 = vld [vmem:[#allocation2 + $0x10] sm:$0xff]
      %v2720 = vld [vmem:[#allocation2 + $0x18] sm:$0xff]
      %v2721 = vld [vmem:[#allocation2 + $0x20] sm:$0xff]
      %v2722 = vld [vmem:[#allocation2 + $0x28] sm:$0xff]
      %v2723 = vld [vmem:[#allocation2 + $0x30] sm:$0xff]
      %v2724 = vld [vmem:[#allocation2 + $0x38] sm:$0xff]
      %v2725 = vld [vmem:[#allocation2 + $0x40] sm:$0xff]
      %v2726 = vld [vmem:[#allocation2 + $0x48] sm:$0xff]
      %v2727 = vld [vmem:[#allocation2 + $0x50] sm:$0xff]
      %v2728 = vld [vmem:[#allocation2 + $0x58] sm:$0xff]
      %v2729 = vld [vmem:[#allocation2 + $0x60] sm:$0xff]
      %v2730 = vld [vmem:[#allocation2 + $0x68] sm:$0xff]
      %v2731 = vld [vmem:[#allocation2 + $0x70] sm:$0xff]
      %v2732 = vld [vmem:[#allocation2 + $0x78] sm:$0xff]
      %v2733 = vld [vmem:[#allocation2 + $0x80] sm:$0xff]
      %v2734 = vld [vmem:[#allocation2 + $0x88] sm:$0xff]
      %v2735 = vld [vmem:[#allocation2 + $0x90] sm:$0xff]
      %v2736 = vld [vmem:[#allocation2 + $0x98] sm:$0xff]
      %v2737 = vld [vmem:[#allocation2 + $0xa0] sm:$0xff]
      %v2738 = vld [vmem:[#allocation2 + $0xa8] sm:$0xff]
      %v2739 = vld [vmem:[#allocation2 + $0xb0] sm:$0xff]
      %v2740 = vld [vmem:[#allocation2 + $0xb8] sm:$0xff]
      %v2741 = vld [vmem:[#allocation2 + $0xc0] sm:$0xff]
      %v2742 = vld [vmem:[#allocation2 + $0xc8] sm:$0xff]
      %v2743 = vld [vmem:[#allocation2 + $0xd0] sm:$0xff]
      %v2744 = vld [vmem:[#allocation2 + $0xd8] sm:$0xff]
      %v2745 = vld [vmem:[#allocation2 + $0xe0] sm:$0xff]
      %v2746 = vld [vmem:[#allocation2 + $0xe8] sm:$0xff]
      %v2747 = vld [vmem:[#allocation2 + $0xf0] sm:$0xff]
      %v2748 = vld [vmem:[#allocation2 + $0xf8] sm:$0xff]
      %v2749 = vadd.f32 %v2717, %v2638
      %v2750 = vadd.f32 %v2718, %v2640
      %v2751 = vadd.f32 %v2719, %v2643
      %v2752 = vadd.f32 %v2720, %v2645
      %v2753 = vadd.f32 %v2721, %v2648
      %v2754 = vadd.f32 %v2722, %v2650
      %v2755 = vadd.f32 %v2723, %v2653
      %v2756 = vadd.f32 %v2724, %v2655
      %v2757 = vadd.f32 %v2725, %v2658
      %v2758 = vadd.f32 %v2726, %v2660
      %v2759 = vadd.f32 %v2727, %v2663
      %v2760 = vadd.f32 %v2728, %v2665
      %v2761 = vadd.f32 %v2729, %v2668
      %v2762 = vadd.f32 %v2730, %v2670
      %v2763 = vadd.f32 %v2731, %v2673
      %v2764 = vadd.f32 %v2732, %v2675
      %v2765 = vadd.f32 %v2733, %v2678
      %v2766 = vadd.f32 %v2734, %v2680
      %v2767 = vadd.f32 %v2735, %v2683
      %v2768 = vadd.f32 %v2736, %v2685
      %v2769 = vadd.f32 %v2737, %v2688
      %v2770 = vadd.f32 %v2738, %v2690
      %v2771 = vadd.f32 %v2739, %v2693
      %v2772 = vadd.f32 %v2740, %v2695
      %v2773 = vadd.f32 %v2741, %v2698
      %v2774 = vadd.f32 %v2742, %v2700
      %v2775 = vadd.f32 %v2743, %v2703
      %v2776 = vadd.f32 %v2744, %v2705
      %v2777 = vadd.f32 %v2745, %v2708
      %v2778 = vadd.f32 %v2746, %v2710
      %v2779 = vadd.f32 %v2747, %v2713
      %v2780 = vadd.f32 %v2748, %v2715
      %2781 = vst [vmem:[#allocation2] sm:$0xff] %v2749
      %2782 = vst [vmem:[#allocation2 + $0x8] sm:$0xff] %v2750
      %2783 = vst [vmem:[#allocation2 + $0x10] sm:$0xff] %v2751
      %2784 = vst [vmem:[#allocation2 + $0x18] sm:$0xff] %v2752
      %2785 = vst [vmem:[#allocation2 + $0x20] sm:$0xff] %v2753
      %2786 = vst [vmem:[#allocation2 + $0x28] sm:$0xff] %v2754
      %2787 = vst [vmem:[#allocation2 + $0x30] sm:$0xff] %v2755
      %2788 = vst [vmem:[#allocation2 + $0x38] sm:$0xff] %v2756
      %2789 = vst [vmem:[#allocation2 + $0x40] sm:$0xff] %v2757
      %2790 = vst [vmem:[#allocation2 + $0x48] sm:$0xff] %v2758
      %2791 = vst [vmem:[#allocation2 + $0x50] sm:$0xff] %v2759
      %2792 = vst [vmem:[#allocation2 + $0x58] sm:$0xff] %v2760
      %2793 = vst [vmem:[#allocation2 + $0x60] sm:$0xff] %v2761
      %2794 = vst [vmem:[#allocation2 + $0x68] sm:$0xff] %v2762
      %2795 = vst [vmem:[#allocation2 + $0x70] sm:$0xff] %v2763
      %2796 = vst [vmem:[#allocation2 + $0x78] sm:$0xff] %v2764
      %2797 = vst [vmem:[#allocation2 + $0x80] sm:$0xff] %v2765
      %2798 = vst [vmem:[#allocation2 + $0x88] sm:$0xff] %v2766
      %2799 = vst [vmem:[#allocation2 + $0x90] sm:$0xff] %v2767
      %2800 = vst [vmem:[#allocation2 + $0x98] sm:$0xff] %v2768
      %2801 = vst [vmem:[#allocation2 + $0xa0] sm:$0xff] %v2769
      %2802 = vst [vmem:[#allocation2 + $0xa8] sm:$0xff] %v2770
      %2803 = vst [vmem:[#allocation2 + $0xb0] sm:$0xff] %v2771
      %2804 = vst [vmem:[#allocation2 + $0xb8] sm:$0xff] %v2772
      %2805 = vst [vmem:[#allocation2 + $0xc0] sm:$0xff] %v2773
      %2806 = vst [vmem:[#allocation2 + $0xc8] sm:$0xff] %v2774
      %2807 = vst [vmem:[#allocation2 + $0xd0] sm:$0xff] %v2775
      %2808 = vst [vmem:[#allocation2 + $0xd8] sm:$0xff] %v2776
      %2809 = vst [vmem:[#allocation2 + $0xe0] sm:$0xff] %v2777
      %2810 = vst [vmem:[#allocation2 + $0xe8] sm:$0xff] %v2778
      %2811 = vst [vmem:[#allocation2 + $0xf0] sm:$0xff] %v2779
      %2812 = vst [vmem:[#allocation2 + $0xf8] sm:$0xff] %v2780
      %v2813 = vld [vmem:[%s1744] sm:$0xe]
      %v2814 = vld [vmem:[%s1744 + $0x4] sm:$0xf]
      %v2815 = vld [vmem:[%s1744 + $0x8] sm:$0x1]
      %v2816 = vld [vmem:[%s1744 + $0xc] sm:$0xe]
      %v2817 = vld [vmem:[%s1744 + $0x10] sm:$0xf]
      %v2818 = vld [vmem:[%s1744 + $0x14] sm:$0x1]
      %v2819 = vld [vmem:[%s1744 + $0x18] sm:$0xe]
      %v2820 = vld [vmem:[%s1744 + $0x1c] sm:$0xf]
      %v2821 = vld [vmem:[%s1744 + $0x20] sm:$0x1]
      %v2822 = vld [vmem:[%s1744 + $0x24] sm:$0xe]
      %v2823 = vld [vmem:[%s1744 + $0x28] sm:$0xf]
      %v2824 = vld [vmem:[%s1744 + $0x2c] sm:$0x1]
      %v2825 = vld [vmem:[%s1744 + $0x30] sm:$0xe]
      %v2826 = vld [vmem:[%s1744 + $0x34] sm:$0xf]
      %v2827 = vld [vmem:[%s1744 + $0x38] sm:$0x1]
      %v2828 = vld [vmem:[%s1744 + $0x3c] sm:$0xe]
      %v2829 = vld [vmem:[%s1744 + $0x40] sm:$0xf]
      %v2830 = vld [vmem:[%s1744 + $0x44] sm:$0x1]
      %v2831 = vld [vmem:[%s1744 + $0x48] sm:$0xe]
      %v2832 = vld [vmem:[%s1744 + $0x4c] sm:$0xf]
      %v2833 = vld [vmem:[%s1744 + $0x50] sm:$0x1]
      %v2834 = vld [vmem:[%s1744 + $0x54] sm:$0xe]
      %v2835 = vld [vmem:[%s1744 + $0x58] sm:$0xf]
      %v2836 = vld [vmem:[%s1744 + $0x5c] sm:$0x1]
      %v2837 = vld [vmem:[%s1744 + $0x60] sm:$0xe]
      %v2838 = vld [vmem:[%s1744 + $0x64] sm:$0xf]
      %v2839 = vld [vmem:[%s1744 + $0x68] sm:$0x1]
      %v2840 = vld [vmem:[%s1744 + $0x6c] sm:$0xe]
      %v2841 = vld [vmem:[%s1744 + $0x70] sm:$0xf]
      %v2842 = vld [vmem:[%s1744 + $0x74] sm:$0x1]
      %v2843 = vld [vmem:[%s1744 + $0x78] sm:$0xe]
      %v2844 = vld [vmem:[%s1744 + $0x7c] sm:$0xf]
      %v2845 = vld [vmem:[%s1744 + $0x80] sm:$0x1]
      %v2846 = vld [vmem:[%s1744 + $0x84] sm:$0xe]
      %v2847 = vld [vmem:[%s1744 + $0x88] sm:$0xf]
      %v2848 = vld [vmem:[%s1744 + $0x8c] sm:$0x1]
      %v2849 = vld [vmem:[%s1744 + $0x90] sm:$0xe]
      %v2850 = vld [vmem:[%s1744 + $0x94] sm:$0xf]
      %v2851 = vld [vmem:[%s1744 + $0x98] sm:$0x1]
      %v2852 = vld [vmem:[%s1744 + $0x9c] sm:$0xe]
      %v2853 = vld [vmem:[%s1744 + $0xa0] sm:$0xf]
      %v2854 = vld [vmem:[%s1744 + $0xa4] sm:$0x1]
      %v2855 = vld [vmem:[%s1744 + $0xa8] sm:$0xe]
      %v2856 = vld [vmem:[%s1744 + $0xac] sm:$0xf]
      %v2857 = vld [vmem:[%s1744 + $0xb0] sm:$0x1]
      %v2858 = vld [vmem:[%s1744 + $0xb4] sm:$0xe]
      %v2859 = vld [vmem:[%s1744 + $0xb8] sm:$0xf]
      %v2860 = vld [vmem:[%s1744 + $0xbc] sm:$0x1]
      %v2909 = vrot.slane %v2813, 5
      %v2910 = vrot.slane %v2909, 4
      %v2911 = vrot.slane %v2814, 5
      %v2912 = vsel %vm1345, %v2910, %v2911
      %v2913 = vrot.slane %v2911, 4
      %v2914 = vrot.slane %v2815, 5
      %v2915 = vsel %vm1345, %v2913, %v2914
      %v2916 = vrot.slane %v2816, 5
      %v2917 = vrot.slane %v2916, 4
      %v2918 = vrot.slane %v2817, 5
      %v2919 = vsel %vm1345, %v2917, %v2918
      %v2920 = vrot.slane %v2918, 4
      %v2921 = vrot.slane %v2818, 5
      %v2922 = vsel %vm1345, %v2920, %v2921
      %v2923 = vrot.slane %v2819, 5
      %v2924 = vrot.slane %v2923, 4
      %v2925 = vrot.slane %v2820, 5
      %v2926 = vsel %vm1345, %v2924, %v2925
      %v2927 = vrot.slane %v2925, 4
      %v2928 = vrot.slane %v2821, 5
      %v2929 = vsel %vm1345, %v2927, %v2928
      %v2930 = vrot.slane %v2822, 5
      %v2931 = vrot.slane %v2930, 4
      %v2932 = vrot.slane %v2823, 5
      %v2933 = vsel %vm1345, %v2931, %v2932
      %v2934 = vrot.slane %v2932, 4
      %v2935 = vrot.slane %v2824, 5
      %v2936 = vsel %vm1345, %v2934, %v2935
      %v2937 = vrot.slane %v2825, 5
      %v2938 = vrot.slane %v2937, 4
      %v2939 = vrot.slane %v2826, 5
      %v2940 = vsel %vm1345, %v2938, %v2939
      %v2941 = vrot.slane %v2939, 4
      %v2942 = vrot.slane %v2827, 5
      %v2943 = vsel %vm1345, %v2941, %v2942
      %v2944 = vrot.slane %v2828, 5
      %v2945 = vrot.slane %v2944, 4
      %v2946 = vrot.slane %v2829, 5
      %v2947 = vsel %vm1345, %v2945, %v2946
      %v2948 = vrot.slane %v2946, 4
      %v2949 = vrot.slane %v2830, 5
      %v2950 = vsel %vm1345, %v2948, %v2949
      %v2951 = vrot.slane %v2831, 5
      %v2952 = vrot.slane %v2951, 4
      %v2953 = vrot.slane %v2832, 5
      %v2954 = vsel %vm1345, %v2952, %v2953
      %v2955 = vrot.slane %v2953, 4
      %v2956 = vrot.slane %v2833, 5
      %v2957 = vsel %vm1345, %v2955, %v2956
      %v2958 = vrot.slane %v2834, 5
      %v2959 = vrot.slane %v2958, 4
      %v2960 = vrot.slane %v2835, 5
      %v2961 = vsel %vm1345, %v2959, %v2960
      %v2962 = vrot.slane %v2960, 4
      %v2963 = vrot.slane %v2836, 5
      %v2964 = vsel %vm1345, %v2962, %v2963
      %v2965 = vrot.slane %v2837, 5
      %v2966 = vrot.slane %v2965, 4
      %v2967 = vrot.slane %v2838, 5
      %v2968 = vsel %vm1345, %v2966, %v2967
      %v2969 = vrot.slane %v2967, 4
      %v2970 = vrot.slane %v2839, 5
      %v2971 = vsel %vm1345, %v2969, %v2970
      %v2972 = vrot.slane %v2840, 5
      %v2973 = vrot.slane %v2972, 4
      %v2974 = vrot.slane %v2841, 5
      %v2975 = vsel %vm1345, %v2973, %v2974
      %v2976 = vrot.slane %v2974, 4
      %v2977 = vrot.slane %v2842, 5
      %v2978 = vsel %vm1345, %v2976, %v2977
      %v2979 = vrot.slane %v2843, 5
      %v2980 = vrot.slane %v2979, 4
      %v2981 = vrot.slane %v2844, 5
      %v2982 = vsel %vm1345, %v2980, %v2981
      %v2983 = vrot.slane %v2981, 4
      %v2984 = vrot.slane %v2845, 5
      %v2985 = vsel %vm1345, %v2983, %v2984
      %v2986 = vrot.slane %v2846, 5
      %v2987 = vrot.slane %v2986, 4
      %v2988 = vrot.slane %v2847, 5
      %v2989 = vsel %vm1345, %v2987, %v2988
      %v2990 = vrot.slane %v2988, 4
      %v2991 = vrot.slane %v2848, 5
      %v2992 = vsel %vm1345, %v2990, %v2991
      %v2993 = vrot.slane %v2849, 5
      %v2994 = vrot.slane %v2993, 4
      %v2995 = vrot.slane %v2850, 5
      %v2996 = vsel %vm1345, %v2994, %v2995
      %v2997 = vrot.slane %v2995, 4
      %v2998 = vrot.slane %v2851, 5
      %v2999 = vsel %vm1345, %v2997, %v2998
      %v3000 = vrot.slane %v2852, 5
      %v3001 = vrot.slane %v3000, 4
      %v3002 = vrot.slane %v2853, 5
      %v3003 = vsel %vm1345, %v3001, %v3002
      %v3004 = vrot.slane %v3002, 4
      %v3005 = vrot.slane %v2854, 5
      %v3006 = vsel %vm1345, %v3004, %v3005
      %v3007 = vrot.slane %v2855, 5
      %v3008 = vrot.slane %v3007, 4
      %v3009 = vrot.slane %v2856, 5
      %v3010 = vsel %vm1345, %v3008, %v3009
      %v3011 = vrot.slane %v3009, 4
      %v3012 = vrot.slane %v2857, 5
      %v3013 = vsel %vm1345, %v3011, %v3012
      %v3014 = vrot.slane %v2858, 5
      %v3015 = vrot.slane %v3014, 4
      %v3016 = vrot.slane %v2859, 5
      %v3017 = vsel %vm1345, %v3015, %v3016
      %v3018 = vrot.slane %v3016, 4
      %v3019 = vrot.slane %v2860, 5
      %v3020 = vsel %vm1345, %v3018, %v3019
      %s3021 = scalar_lea.vmem %s1, 10
      %v3022 = vld [vmem:[%s3021] sm:$0x3]
      %v3023 = vunpack.c.l.b16 %v2912
      %v3024 = vunpack.c.l.b16 %v2915
      %v3025 = vunpack.c.l.b16 %v2919
      %v3026 = vunpack.c.l.b16 %v2922
      %v3027 = vunpack.c.l.b16 %v2926
      %v3028 = vunpack.c.l.b16 %v2929
      %v3029 = vunpack.c.l.b16 %v2933
      %v3030 = vunpack.c.l.b16 %v2936
      %v3031 = vunpack.c.l.b16 %v2940
      %v3032 = vunpack.c.l.b16 %v2943
      %v3033 = vunpack.c.l.b16 %v2947
      %v3034 = vunpack.c.l.b16 %v2950
      %v3035 = vunpack.c.l.b16 %v2954
      %v3036 = vunpack.c.l.b16 %v2957
      %v3037 = vunpack.c.l.b16 %v2961
      %v3038 = vunpack.c.l.b16 %v2964
      %v3039 = vunpack.c.l.b16 %v2968
      %v3040 = vunpack.c.l.b16 %v2971
      %v3041 = vunpack.c.l.b16 %v2975
      %v3042 = vunpack.c.l.b16 %v2978
      %v3043 = vunpack.c.l.b16 %v2982
      %v3044 = vunpack.c.l.b16 %v2985
      %v3045 = vunpack.c.l.b16 %v2989
      %v3046 = vunpack.c.l.b16 %v2992
      %v3047 = vunpack.c.l.b16 %v2996
      %v3048 = vunpack.c.l.b16 %v2999
      %v3049 = vunpack.c.l.b16 %v3003
      %v3050 = vunpack.c.l.b16 %v3006
      %v3051 = vunpack.c.l.b16 %v3010
      %v3052 = vunpack.c.l.b16 %v3013
      %v3053 = vunpack.c.l.b16 %v3017
      %v3054 = vunpack.c.l.b16 %v3020
      %v3055 = vpack.c.b16 %v3024, %v3023
      %v3056 = vpack.c.b16 %v3026, %v3025
      %v3057 = vpack.c.b16 %v3028, %v3027
      %v3058 = vpack.c.b16 %v3030, %v3029
      %v3059 = vpack.c.b16 %v3032, %v3031
      %v3060 = vpack.c.b16 %v3034, %v3033
      %v3061 = vpack.c.b16 %v3036, %v3035
      %v3062 = vpack.c.b16 %v3038, %v3037
      %v3063 = vpack.c.b16 %v3040, %v3039
      %v3064 = vpack.c.b16 %v3042, %v3041
      %v3065 = vpack.c.b16 %v3044, %v3043
      %v3066 = vpack.c.b16 %v3046, %v3045
      %v3067 = vpack.c.b16 %v3048, %v3047
      %v3068 = vpack.c.b16 %v3050, %v3049
      %v3069 = vpack.c.b16 %v3052, %v3051
      %v3070 = vpack.c.b16 %v3054, %v3053
      %v3072 = vsel %vm352, %v3055, 0
      %v3075 = vsel %vm352, %v3056, 0
      %v3078 = vsel %vm352, %v3057, 0
      %v3081 = vsel %vm352, %v3058, 0
      %v3084 = vsel %vm352, %v3059, 0
      %v3087 = vsel %vm352, %v3060, 0
      %v3090 = vsel %vm352, %v3061, 0
      %v3093 = vsel %vm352, %v3062, 0
      %v3096 = vsel %vm352, %v3063, 0
      %v3099 = vsel %vm352, %v3064, 0
      %v3102 = vsel %vm352, %v3065, 0
      %v3105 = vsel %vm352, %v3066, 0
      %v3108 = vsel %vm352, %v3067, 0
      %v3111 = vsel %vm352, %v3068, 0
      %v3114 = vsel %vm352, %v3069, 0
      %v3117 = vsel %vm352, %v3070, 0
      %v3120 = vsel %vm401, %v3022, 0
      %3122 = vmatpush.bf16.msra.mxu0 0
      %3123 = vmatpush.bf16.msra.mxu0 0
      %3124 = vmatpush.bf16.msra.mxu0 0
      %3125 = vmatpush.bf16.msra.mxu0 0
      %3126 = vmatpush.bf16.msra.mxu0 0
      %3127 = vmatpush.bf16.msra.mxu0 0
      %3128 = vmatpush.bf16.msra.mxu0 0
      %3129 = vmatpush.bf16.msra.mxu0 %v3120
      %3130 = vmatmul.bf16.gmra.mxu0 %v3072
      %v3131 = vpop.f32.mrf.mxu0
      %v3132 = vadd.f32 0.0, %v3131
      %v3133 = vpop.f32.mrf.mxu0
      %v3134 = vadd.f32 0.0, %v3133
      %3135 = vmatmul.bf16.gmra.mxu0 %v3075
      %v3136 = vpop.f32.mrf.mxu0
      %v3137 = vadd.f32 0.0, %v3136
      %v3138 = vpop.f32.mrf.mxu0
      %v3139 = vadd.f32 0.0, %v3138
      %3140 = vmatmul.bf16.gmra.mxu0 %v3078
      %v3141 = vpop.f32.mrf.mxu0
      %v3142 = vadd.f32 0.0, %v3141
      %v3143 = vpop.f32.mrf.mxu0
      %v3144 = vadd.f32 0.0, %v3143
      %3145 = vmatmul.bf16.gmra.mxu0 %v3081
      %v3146 = vpop.f32.mrf.mxu0
      %v3147 = vadd.f32 0.0, %v3146
      %v3148 = vpop.f32.mrf.mxu0
      %v3149 = vadd.f32 0.0, %v3148
      %3150 = vmatmul.bf16.gmra.mxu0 %v3084
      %v3151 = vpop.f32.mrf.mxu0
      %v3152 = vadd.f32 0.0, %v3151
      %v3153 = vpop.f32.mrf.mxu0
      %v3154 = vadd.f32 0.0, %v3153
      %3155 = vmatmul.bf16.gmra.mxu0 %v3087
      %v3156 = vpop.f32.mrf.mxu0
      %v3157 = vadd.f32 0.0, %v3156
      %v3158 = vpop.f32.mrf.mxu0
      %v3159 = vadd.f32 0.0, %v3158
      %3160 = vmatmul.bf16.gmra.mxu0 %v3090
      %v3161 = vpop.f32.mrf.mxu0
      %v3162 = vadd.f32 0.0, %v3161
      %v3163 = vpop.f32.mrf.mxu0
      %v3164 = vadd.f32 0.0, %v3163
      %3165 = vmatmul.bf16.gmra.mxu0 %v3093
      %v3166 = vpop.f32.mrf.mxu0
      %v3167 = vadd.f32 0.0, %v3166
      %v3168 = vpop.f32.mrf.mxu0
      %v3169 = vadd.f32 0.0, %v3168
      %3170 = vmatmul.bf16.gmra.mxu0 %v3096
      %v3171 = vpop.f32.mrf.mxu0
      %v3172 = vadd.f32 0.0, %v3171
      %v3173 = vpop.f32.mrf.mxu0
      %v3174 = vadd.f32 0.0, %v3173
      %3175 = vmatmul.bf16.gmra.mxu0 %v3099
      %v3176 = vpop.f32.mrf.mxu0
      %v3177 = vadd.f32 0.0, %v3176
      %v3178 = vpop.f32.mrf.mxu0
      %v3179 = vadd.f32 0.0, %v3178
      %3180 = vmatmul.bf16.gmra.mxu0 %v3102
      %v3181 = vpop.f32.mrf.mxu0
      %v3182 = vadd.f32 0.0, %v3181
      %v3183 = vpop.f32.mrf.mxu0
      %v3184 = vadd.f32 0.0, %v3183
      %3185 = vmatmul.bf16.gmra.mxu0 %v3105
      %v3186 = vpop.f32.mrf.mxu0
      %v3187 = vadd.f32 0.0, %v3186
      %v3188 = vpop.f32.mrf.mxu0
      %v3189 = vadd.f32 0.0, %v3188
      %3190 = vmatmul.bf16.gmra.mxu0 %v3108
      %v3191 = vpop.f32.mrf.mxu0
      %v3192 = vadd.f32 0.0, %v3191
      %v3193 = vpop.f32.mrf.mxu0
      %v3194 = vadd.f32 0.0, %v3193
      %3195 = vmatmul.bf16.gmra.mxu0 %v3111
      %v3196 = vpop.f32.mrf.mxu0
      %v3197 = vadd.f32 0.0, %v3196
      %v3198 = vpop.f32.mrf.mxu0
      %v3199 = vadd.f32 0.0, %v3198
      %3200 = vmatmul.bf16.gmra.mxu0 %v3114
      %v3201 = vpop.f32.mrf.mxu0
      %v3202 = vadd.f32 0.0, %v3201
      %v3203 = vpop.f32.mrf.mxu0
      %v3204 = vadd.f32 0.0, %v3203
      %3205 = vmatmul.bf16.gmra.mxu0 %v3117
      %v3206 = vpop.f32.mrf.mxu0
      %v3207 = vadd.f32 0.0, %v3206
      %v3208 = vpop.f32.mrf.mxu0
      %v3209 = vadd.f32 0.0, %v3208
      %3210 = vdwg.mxu0
      %v3211 = vld [vmem:[#allocation2] sm:$0xff]
      %v3212 = vld [vmem:[#allocation2 + $0x8] sm:$0xff]
      %v3213 = vld [vmem:[#allocation2 + $0x10] sm:$0xff]
      %v3214 = vld [vmem:[#allocation2 + $0x18] sm:$0xff]
      %v3215 = vld [vmem:[#allocation2 + $0x20] sm:$0xff]
      %v3216 = vld [vmem:[#allocation2 + $0x28] sm:$0xff]
      %v3217 = vld [vmem:[#allocation2 + $0x30] sm:$0xff]
      %v3218 = vld [vmem:[#allocation2 + $0x38] sm:$0xff]
      %v3219 = vld [vmem:[#allocation2 + $0x40] sm:$0xff]
      %v3220 = vld [vmem:[#allocation2 + $0x48] sm:$0xff]
      %v3221 = vld [vmem:[#allocation2 + $0x50] sm:$0xff]
      %v3222 = vld [vmem:[#allocation2 + $0x58] sm:$0xff]
      %v3223 = vld [vmem:[#allocation2 + $0x60] sm:$0xff]
      %v3224 = vld [vmem:[#allocation2 + $0x68] sm:$0xff]
      %v3225 = vld [vmem:[#allocation2 + $0x70] sm:$0xff]
      %v3226 = vld [vmem:[#allocation2 + $0x78] sm:$0xff]
      %v3227 = vld [vmem:[#allocation2 + $0x80] sm:$0xff]
      %v3228 = vld [vmem:[#allocation2 + $0x88] sm:$0xff]
      %v3229 = vld [vmem:[#allocation2 + $0x90] sm:$0xff]
      %v3230 = vld [vmem:[#allocation2 + $0x98] sm:$0xff]
      %v3231 = vld [vmem:[#allocation2 + $0xa0] sm:$0xff]
      %v3232 = vld [vmem:[#allocation2 + $0xa8] sm:$0xff]
      %v3233 = vld [vmem:[#allocation2 + $0xb0] sm:$0xff]
      %v3234 = vld [vmem:[#allocation2 + $0xb8] sm:$0xff]
      %v3235 = vld [vmem:[#allocation2 + $0xc0] sm:$0xff]
      %v3236 = vld [vmem:[#allocation2 + $0xc8] sm:$0xff]
      %v3237 = vld [vmem:[#allocation2 + $0xd0] sm:$0xff]
      %v3238 = vld [vmem:[#allocation2 + $0xd8] sm:$0xff]
      %v3239 = vld [vmem:[#allocation2 + $0xe0] sm:$0xff]
      %v3240 = vld [vmem:[#allocation2 + $0xe8] sm:$0xff]
      %v3241 = vld [vmem:[#allocation2 + $0xf0] sm:$0xff]
      %v3242 = vld [vmem:[#allocation2 + $0xf8] sm:$0xff]
      %v3243 = vadd.f32 %v3211, %v3132
      %v3244 = vadd.f32 %v3212, %v3134
      %v3245 = vadd.f32 %v3213, %v3137
      %v3246 = vadd.f32 %v3214, %v3139
      %v3247 = vadd.f32 %v3215, %v3142
      %v3248 = vadd.f32 %v3216, %v3144
      %v3249 = vadd.f32 %v3217, %v3147
      %v3250 = vadd.f32 %v3218, %v3149
      %v3251 = vadd.f32 %v3219, %v3152
      %v3252 = vadd.f32 %v3220, %v3154
      %v3253 = vadd.f32 %v3221, %v3157
      %v3254 = vadd.f32 %v3222, %v3159
      %v3255 = vadd.f32 %v3223, %v3162
      %v3256 = vadd.f32 %v3224, %v3164
      %v3257 = vadd.f32 %v3225, %v3167
      %v3258 = vadd.f32 %v3226, %v3169
      %v3259 = vadd.f32 %v3227, %v3172
      %v3260 = vadd.f32 %v3228, %v3174
      %v3261 = vadd.f32 %v3229, %v3177
      %v3262 = vadd.f32 %v3230, %v3179
      %v3263 = vadd.f32 %v3231, %v3182
      %v3264 = vadd.f32 %v3232, %v3184
      %v3265 = vadd.f32 %v3233, %v3187
      %v3266 = vadd.f32 %v3234, %v3189
      %v3267 = vadd.f32 %v3235, %v3192
      %v3268 = vadd.f32 %v3236, %v3194
      %v3269 = vadd.f32 %v3237, %v3197
      %v3270 = vadd.f32 %v3238, %v3199
      %v3271 = vadd.f32 %v3239, %v3202
      %v3272 = vadd.f32 %v3240, %v3204
      %v3273 = vadd.f32 %v3241, %v3207
      %v3274 = vadd.f32 %v3242, %v3209
      %3275 = vst [vmem:[#allocation2] sm:$0xff] %v3243
      %3276 = vst [vmem:[#allocation2 + $0x8] sm:$0xff] %v3244
      %3277 = vst [vmem:[#allocation2 + $0x10] sm:$0xff] %v3245
      %3278 = vst [vmem:[#allocation2 + $0x18] sm:$0xff] %v3246
      %3279 = vst [vmem:[#allocation2 + $0x20] sm:$0xff] %v3247
      %3280 = vst [vmem:[#allocation2 + $0x28] sm:$0xff] %v3248
      %3281 = vst [vmem:[#allocation2 + $0x30] sm:$0xff] %v3249
      %3282 = vst [vmem:[#allocation2 + $0x38] sm:$0xff] %v3250
      %3283 = vst [vmem:[#allocation2 + $0x40] sm:$0xff] %v3251
      %3284 = vst [vmem:[#allocation2 + $0x48] sm:$0xff] %v3252
      %3285 = vst [vmem:[#allocation2 + $0x50] sm:$0xff] %v3253
      %3286 = vst [vmem:[#allocation2 + $0x58] sm:$0xff] %v3254
      %3287 = vst [vmem:[#allocation2 + $0x60] sm:$0xff] %v3255
      %3288 = vst [vmem:[#allocation2 + $0x68] sm:$0xff] %v3256
      %3289 = vst [vmem:[#allocation2 + $0x70] sm:$0xff] %v3257
      %3290 = vst [vmem:[#allocation2 + $0x78] sm:$0xff] %v3258
      %3291 = vst [vmem:[#allocation2 + $0x80] sm:$0xff] %v3259
      %3292 = vst [vmem:[#allocation2 + $0x88] sm:$0xff] %v3260
      %3293 = vst [vmem:[#allocation2 + $0x90] sm:$0xff] %v3261
      %3294 = vst [vmem:[#allocation2 + $0x98] sm:$0xff] %v3262
      %3295 = vst [vmem:[#allocation2 + $0xa0] sm:$0xff] %v3263
      %3296 = vst [vmem:[#allocation2 + $0xa8] sm:$0xff] %v3264
      %3297 = vst [vmem:[#allocation2 + $0xb0] sm:$0xff] %v3265
      %3298 = vst [vmem:[#allocation2 + $0xb8] sm:$0xff] %v3266
      %3299 = vst [vmem:[#allocation2 + $0xc0] sm:$0xff] %v3267
      %3300 = vst [vmem:[#allocation2 + $0xc8] sm:$0xff] %v3268
      %3301 = vst [vmem:[#allocation2 + $0xd0] sm:$0xff] %v3269
      %3302 = vst [vmem:[#allocation2 + $0xd8] sm:$0xff] %v3270
      %3303 = vst [vmem:[#allocation2 + $0xe0] sm:$0xff] %v3271
      %3304 = vst [vmem:[#allocation2 + $0xe8] sm:$0xff] %v3272
      %3305 = vst [vmem:[#allocation2 + $0xf0] sm:$0xff] %v3273
      %3306 = vst [vmem:[#allocation2 + $0xf8] sm:$0xff] %v3274
      %s3307 = scalar_lea.vmem %s224, 24
      %v3308 = vld [vmem:[%s3307] sm:$0xf]
      %v3309 = vld [vmem:[%s3307 + $0x4] sm:$0xf]
      %v3310 = vld [vmem:[%s3307 + $0xc] sm:$0xf]
      %v3311 = vld [vmem:[%s3307 + $0x10] sm:$0xf]
      %v3312 = vld [vmem:[%s3307 + $0x18] sm:$0xf]
      %v3313 = vld [vmem:[%s3307 + $0x1c] sm:$0xf]
      %v3314 = vld [vmem:[%s3307 + $0x24] sm:$0xf]
      %v3315 = vld [vmem:[%s3307 + $0x28] sm:$0xf]
      %v3316 = vld [vmem:[%s3307 + $0x30] sm:$0xf]
      %v3317 = vld [vmem:[%s3307 + $0x34] sm:$0xf]
      %v3318 = vld [vmem:[%s3307 + $0x3c] sm:$0xf]
      %v3319 = vld [vmem:[%s3307 + $0x40] sm:$0xf]
      %v3320 = vld [vmem:[%s3307 + $0x48] sm:$0xf]
      %v3321 = vld [vmem:[%s3307 + $0x4c] sm:$0xf]
      %v3322 = vld [vmem:[%s3307 + $0x54] sm:$0xf]
      %v3323 = vld [vmem:[%s3307 + $0x58] sm:$0xf]
      %v3324 = vld [vmem:[%s3307 + $0x60] sm:$0xf]
      %v3325 = vld [vmem:[%s3307 + $0x64] sm:$0xf]
      %v3326 = vld [vmem:[%s3307 + $0x6c] sm:$0xf]
      %v3327 = vld [vmem:[%s3307 + $0x70] sm:$0xf]
      %v3328 = vld [vmem:[%s3307 + $0x78] sm:$0xf]
      %v3329 = vld [vmem:[%s3307 + $0x7c] sm:$0xf]
      %v3330 = vld [vmem:[%s3307 + $0x84] sm:$0xf]
      %v3331 = vld [vmem:[%s3307 + $0x88] sm:$0xf]
      %v3332 = vld [vmem:[%s3307 + $0x90] sm:$0xf]
      %v3333 = vld [vmem:[%s3307 + $0x94] sm:$0xf]
      %v3334 = vld [vmem:[%s3307 + $0x9c] sm:$0xf]
      %v3335 = vld [vmem:[%s3307 + $0xa0] sm:$0xf]
      %v3336 = vld [vmem:[%s3307 + $0xa8] sm:$0xf]
      %v3337 = vld [vmem:[%s3307 + $0xac] sm:$0xf]
      %v3338 = vld [vmem:[%s3307 + $0xb4] sm:$0xf]
      %v3339 = vld [vmem:[%s3307 + $0xb8] sm:$0xf]
      %s3340 = scalar_lea.vmem %s1, 12
      %v3341 = vld [vmem:[%s3340] sm:$0x3]
      %v3374 = vunpack.c.l.b16 %v3308
      %v3375 = vunpack.c.l.b16 %v3309
      %v3376 = vunpack.c.l.b16 %v3310
      %v3377 = vunpack.c.l.b16 %v3311
      %v3378 = vunpack.c.l.b16 %v3312
      %v3379 = vunpack.c.l.b16 %v3313
      %v3380 = vunpack.c.l.b16 %v3314
      %v3381 = vunpack.c.l.b16 %v3315
      %v3382 = vunpack.c.l.b16 %v3316
      %v3383 = vunpack.c.l.b16 %v3317
      %v3384 = vunpack.c.l.b16 %v3318
      %v3385 = vunpack.c.l.b16 %v3319
      %v3386 = vunpack.c.l.b16 %v3320
      %v3387 = vunpack.c.l.b16 %v3321
      %v3388 = vunpack.c.l.b16 %v3322
      %v3389 = vunpack.c.l.b16 %v3323
      %v3390 = vunpack.c.l.b16 %v3324
      %v3391 = vunpack.c.l.b16 %v3325
      %v3392 = vunpack.c.l.b16 %v3326
      %v3393 = vunpack.c.l.b16 %v3327
      %v3394 = vunpack.c.l.b16 %v3328
      %v3395 = vunpack.c.l.b16 %v3329
      %v3396 = vunpack.c.l.b16 %v3330
      %v3397 = vunpack.c.l.b16 %v3331
      %v3398 = vunpack.c.l.b16 %v3332
      %v3399 = vunpack.c.l.b16 %v3333
      %v3400 = vunpack.c.l.b16 %v3334
      %v3401 = vunpack.c.l.b16 %v3335
      %v3402 = vunpack.c.l.b16 %v3336
      %v3403 = vunpack.c.l.b16 %v3337
      %v3404 = vunpack.c.l.b16 %v3338
      %v3405 = vunpack.c.l.b16 %v3339
      %v3406 = vpack.c.b16 %v3375, %v3374
      %v3407 = vpack.c.b16 %v3377, %v3376
      %v3408 = vpack.c.b16 %v3379, %v3378
      %v3409 = vpack.c.b16 %v3381, %v3380
      %v3410 = vpack.c.b16 %v3383, %v3382
      %v3411 = vpack.c.b16 %v3385, %v3384
      %v3412 = vpack.c.b16 %v3387, %v3386
      %v3413 = vpack.c.b16 %v3389, %v3388
      %v3414 = vpack.c.b16 %v3391, %v3390
      %v3415 = vpack.c.b16 %v3393, %v3392
      %v3416 = vpack.c.b16 %v3395, %v3394
      %v3417 = vpack.c.b16 %v3397, %v3396
      %v3418 = vpack.c.b16 %v3399, %v3398
      %v3419 = vpack.c.b16 %v3401, %v3400
      %v3420 = vpack.c.b16 %v3403, %v3402
      %v3421 = vpack.c.b16 %v3405, %v3404
      %v3423 = vsel %vm352, %v3406, 0
      %v3426 = vsel %vm352, %v3407, 0
      %v3429 = vsel %vm352, %v3408, 0
      %v3432 = vsel %vm352, %v3409, 0
      %v3435 = vsel %vm352, %v3410, 0
      %v3438 = vsel %vm352, %v3411, 0
      %v3441 = vsel %vm352, %v3412, 0
      %v3444 = vsel %vm352, %v3413, 0
      %v3447 = vsel %vm352, %v3414, 0
      %v3450 = vsel %vm352, %v3415, 0
      %v3453 = vsel %vm352, %v3416, 0
      %v3456 = vsel %vm352, %v3417, 0
      %v3459 = vsel %vm352, %v3418, 0
      %v3462 = vsel %vm352, %v3419, 0
      %v3465 = vsel %vm352, %v3420, 0
      %v3468 = vsel %vm352, %v3421, 0
      %v3471 = vsel %vm401, %v3341, 0
      %3473 = vmatpush.bf16.msra.mxu0 0
      %3474 = vmatpush.bf16.msra.mxu0 0
      %3475 = vmatpush.bf16.msra.mxu0 0
      %3476 = vmatpush.bf16.msra.mxu0 0
      %3477 = vmatpush.bf16.msra.mxu0 0
      %3478 = vmatpush.bf16.msra.mxu0 0
      %3479 = vmatpush.bf16.msra.mxu0 0
      %3480 = vmatpush.bf16.msra.mxu0 %v3471
      %3481 = vmatmul.bf16.gmra.mxu0 %v3423
      %v3482 = vpop.f32.mrf.mxu0
      %v3483 = vadd.f32 0.0, %v3482
      %v3484 = vpop.f32.mrf.mxu0
      %v3485 = vadd.f32 0.0, %v3484
      %3486 = vmatmul.bf16.gmra.mxu0 %v3426
      %v3487 = vpop.f32.mrf.mxu0
      %v3488 = vadd.f32 0.0, %v3487
      %v3489 = vpop.f32.mrf.mxu0
      %v3490 = vadd.f32 0.0, %v3489
      %3491 = vmatmul.bf16.gmra.mxu0 %v3429
      %v3492 = vpop.f32.mrf.mxu0
      %v3493 = vadd.f32 0.0, %v3492
      %v3494 = vpop.f32.mrf.mxu0
      %v3495 = vadd.f32 0.0, %v3494
      %3496 = vmatmul.bf16.gmra.mxu0 %v3432
      %v3497 = vpop.f32.mrf.mxu0
      %v3498 = vadd.f32 0.0, %v3497
      %v3499 = vpop.f32.mrf.mxu0
      %v3500 = vadd.f32 0.0, %v3499
      %3501 = vmatmul.bf16.gmra.mxu0 %v3435
      %v3502 = vpop.f32.mrf.mxu0
      %v3503 = vadd.f32 0.0, %v3502
      %v3504 = vpop.f32.mrf.mxu0
      %v3505 = vadd.f32 0.0, %v3504
      %3506 = vmatmul.bf16.gmra.mxu0 %v3438
      %v3507 = vpop.f32.mrf.mxu0
      %v3508 = vadd.f32 0.0, %v3507
      %v3509 = vpop.f32.mrf.mxu0
      %v3510 = vadd.f32 0.0, %v3509
      %3511 = vmatmul.bf16.gmra.mxu0 %v3441
      %v3512 = vpop.f32.mrf.mxu0
      %v3513 = vadd.f32 0.0, %v3512
      %v3514 = vpop.f32.mrf.mxu0
      %v3515 = vadd.f32 0.0, %v3514
      %3516 = vmatmul.bf16.gmra.mxu0 %v3444
      %v3517 = vpop.f32.mrf.mxu0
      %v3518 = vadd.f32 0.0, %v3517
      %v3519 = vpop.f32.mrf.mxu0
      %v3520 = vadd.f32 0.0, %v3519
      %3521 = vmatmul.bf16.gmra.mxu0 %v3447
      %v3522 = vpop.f32.mrf.mxu0
      %v3523 = vadd.f32 0.0, %v3522
      %v3524 = vpop.f32.mrf.mxu0
      %v3525 = vadd.f32 0.0, %v3524
      %3526 = vmatmul.bf16.gmra.mxu0 %v3450
      %v3527 = vpop.f32.mrf.mxu0
      %v3528 = vadd.f32 0.0, %v3527
      %v3529 = vpop.f32.mrf.mxu0
      %v3530 = vadd.f32 0.0, %v3529
      %3531 = vmatmul.bf16.gmra.mxu0 %v3453
      %v3532 = vpop.f32.mrf.mxu0
      %v3533 = vadd.f32 0.0, %v3532
      %v3534 = vpop.f32.mrf.mxu0
      %v3535 = vadd.f32 0.0, %v3534
      %3536 = vmatmul.bf16.gmra.mxu0 %v3456
      %v3537 = vpop.f32.mrf.mxu0
      %v3538 = vadd.f32 0.0, %v3537
      %v3539 = vpop.f32.mrf.mxu0
      %v3540 = vadd.f32 0.0, %v3539
      %3541 = vmatmul.bf16.gmra.mxu0 %v3459
      %v3542 = vpop.f32.mrf.mxu0
      %v3543 = vadd.f32 0.0, %v3542
      %v3544 = vpop.f32.mrf.mxu0
      %v3545 = vadd.f32 0.0, %v3544
      %3546 = vmatmul.bf16.gmra.mxu0 %v3462
      %v3547 = vpop.f32.mrf.mxu0
      %v3548 = vadd.f32 0.0, %v3547
      %v3549 = vpop.f32.mrf.mxu0
      %v3550 = vadd.f32 0.0, %v3549
      %3551 = vmatmul.bf16.gmra.mxu0 %v3465
      %v3552 = vpop.f32.mrf.mxu0
      %v3553 = vadd.f32 0.0, %v3552
      %v3554 = vpop.f32.mrf.mxu0
      %v3555 = vadd.f32 0.0, %v3554
      %3556 = vmatmul.bf16.gmra.mxu0 %v3468
      %v3557 = vpop.f32.mrf.mxu0
      %v3558 = vadd.f32 0.0, %v3557
      %v3559 = vpop.f32.mrf.mxu0
      %v3560 = vadd.f32 0.0, %v3559
      %3561 = vdwg.mxu0
      %v3562 = vld [vmem:[#allocation2] sm:$0xff]
      %v3563 = vld [vmem:[#allocation2 + $0x8] sm:$0xff]
      %v3564 = vld [vmem:[#allocation2 + $0x10] sm:$0xff]
      %v3565 = vld [vmem:[#allocation2 + $0x18] sm:$0xff]
      %v3566 = vld [vmem:[#allocation2 + $0x20] sm:$0xff]
      %v3567 = vld [vmem:[#allocation2 + $0x28] sm:$0xff]
      %v3568 = vld [vmem:[#allocation2 + $0x30] sm:$0xff]
      %v3569 = vld [vmem:[#allocation2 + $0x38] sm:$0xff]
      %v3570 = vld [vmem:[#allocation2 + $0x40] sm:$0xff]
      %v3571 = vld [vmem:[#allocation2 + $0x48] sm:$0xff]
      %v3572 = vld [vmem:[#allocation2 + $0x50] sm:$0xff]
      %v3573 = vld [vmem:[#allocation2 + $0x58] sm:$0xff]
      %v3574 = vld [vmem:[#allocation2 + $0x60] sm:$0xff]
      %v3575 = vld [vmem:[#allocation2 + $0x68] sm:$0xff]
      %v3576 = vld [vmem:[#allocation2 + $0x70] sm:$0xff]
      %v3577 = vld [vmem:[#allocation2 + $0x78] sm:$0xff]
      %v3578 = vld [vmem:[#allocation2 + $0x80] sm:$0xff]
      %v3579 = vld [vmem:[#allocation2 + $0x88] sm:$0xff]
      %v3580 = vld [vmem:[#allocation2 + $0x90] sm:$0xff]
      %v3581 = vld [vmem:[#allocation2 + $0x98] sm:$0xff]
      %v3582 = vld [vmem:[#allocation2 + $0xa0] sm:$0xff]
      %v3583 = vld [vmem:[#allocation2 + $0xa8] sm:$0xff]
      %v3584 = vld [vmem:[#allocation2 + $0xb0] sm:$0xff]
      %v3585 = vld [vmem:[#allocation2 + $0xb8] sm:$0xff]
      %v3586 = vld [vmem:[#allocation2 + $0xc0] sm:$0xff]
      %v3587 = vld [vmem:[#allocation2 + $0xc8] sm:$0xff]
      %v3588 = vld [vmem:[#allocation2 + $0xd0] sm:$0xff]
      %v3589 = vld [vmem:[#allocation2 + $0xd8] sm:$0xff]
      %v3590 = vld [vmem:[#allocation2 + $0xe0] sm:$0xff]
      %v3591 = vld [vmem:[#allocation2 + $0xe8] sm:$0xff]
      %v3592 = vld [vmem:[#allocation2 + $0xf0] sm:$0xff]
      %v3593 = vld [vmem:[#allocation2 + $0xf8] sm:$0xff]
      %v3594 = vadd.f32 %v3562, %v3483
      %v3595 = vadd.f32 %v3563, %v3485
      %v3596 = vadd.f32 %v3564, %v3488
      %v3597 = vadd.f32 %v3565, %v3490
      %v3598 = vadd.f32 %v3566, %v3493
      %v3599 = vadd.f32 %v3567, %v3495
      %v3600 = vadd.f32 %v3568, %v3498
      %v3601 = vadd.f32 %v3569, %v3500
      %v3602 = vadd.f32 %v3570, %v3503
      %v3603 = vadd.f32 %v3571, %v3505
      %v3604 = vadd.f32 %v3572, %v3508
      %v3605 = vadd.f32 %v3573, %v3510
      %v3606 = vadd.f32 %v3574, %v3513
      %v3607 = vadd.f32 %v3575, %v3515
      %v3608 = vadd.f32 %v3576, %v3518
      %v3609 = vadd.f32 %v3577, %v3520
      %v3610 = vadd.f32 %v3578, %v3523
      %v3611 = vadd.f32 %v3579, %v3525
      %v3612 = vadd.f32 %v3580, %v3528
      %v3613 = vadd.f32 %v3581, %v3530
      %v3614 = vadd.f32 %v3582, %v3533
      %v3615 = vadd.f32 %v3583, %v3535
      %v3616 = vadd.f32 %v3584, %v3538
      %v3617 = vadd.f32 %v3585, %v3540
      %v3618 = vadd.f32 %v3586, %v3543
      %v3619 = vadd.f32 %v3587, %v3545
      %v3620 = vadd.f32 %v3588, %v3548
      %v3621 = vadd.f32 %v3589, %v3550
      %v3622 = vadd.f32 %v3590, %v3553
      %v3623 = vadd.f32 %v3591, %v3555
      %v3624 = vadd.f32 %v3592, %v3558
      %v3625 = vadd.f32 %v3593, %v3560
      %3626 = vst [vmem:[#allocation2] sm:$0xff] %v3594
      %3627 = vst [vmem:[#allocation2 + $0x8] sm:$0xff] %v3595
      %3628 = vst [vmem:[#allocation2 + $0x10] sm:$0xff] %v3596
      %3629 = vst [vmem:[#allocation2 + $0x18] sm:$0xff] %v3597
      %3630 = vst [vmem:[#allocation2 + $0x20] sm:$0xff] %v3598
      %3631 = vst [vmem:[#allocation2 + $0x28] sm:$0xff] %v3599
      %3632 = vst [vmem:[#allocation2 + $0x30] sm:$0xff] %v3600
      %3633 = vst [vmem:[#allocation2 + $0x38] sm:$0xff] %v3601
      %3634 = vst [vmem:[#allocation2 + $0x40] sm:$0xff] %v3602
      %3635 = vst [vmem:[#allocation2 + $0x48] sm:$0xff] %v3603
      %3636 = vst [vmem:[#allocation2 + $0x50] sm:$0xff] %v3604
      %3637 = vst [vmem:[#allocation2 + $0x58] sm:$0xff] %v3605
      %3638 = vst [vmem:[#allocation2 + $0x60] sm:$0xff] %v3606
      %3639 = vst [vmem:[#allocation2 + $0x68] sm:$0xff] %v3607
      %3640 = vst [vmem:[#allocation2 + $0x70] sm:$0xff] %v3608
      %3641 = vst [vmem:[#allocation2 + $0x78] sm:$0xff] %v3609
      %3642 = vst [vmem:[#allocation2 + $0x80] sm:$0xff] %v3610
      %3643 = vst [vmem:[#allocation2 + $0x88] sm:$0xff] %v3611
      %3644 = vst [vmem:[#allocation2 + $0x90] sm:$0xff] %v3612
      %3645 = vst [vmem:[#allocation2 + $0x98] sm:$0xff] %v3613
      %3646 = vst [vmem:[#allocation2 + $0xa0] sm:$0xff] %v3614
      %3647 = vst [vmem:[#allocation2 + $0xa8] sm:$0xff] %v3615
      %3648 = vst [vmem:[#allocation2 + $0xb0] sm:$0xff] %v3616
      %3649 = vst [vmem:[#allocation2 + $0xb8] sm:$0xff] %v3617
      %3650 = vst [vmem:[#allocation2 + $0xc0] sm:$0xff] %v3618
      %3651 = vst [vmem:[#allocation2 + $0xc8] sm:$0xff] %v3619
      %3652 = vst [vmem:[#allocation2 + $0xd0] sm:$0xff] %v3620
      %3653 = vst [vmem:[#allocation2 + $0xd8] sm:$0xff] %v3621
      %3654 = vst [vmem:[#allocation2 + $0xe0] sm:$0xff] %v3622
      %3655 = vst [vmem:[#allocation2 + $0xe8] sm:$0xff] %v3623
      %3656 = vst [vmem:[#allocation2 + $0xf0] sm:$0xff] %v3624
      %3657 = vst [vmem:[#allocation2 + $0xf8] sm:$0xff] %v3625
      %v3658 = vld [vmem:[%s3307] sm:$0xf]
      %v3659 = vld [vmem:[%s3307 + $0x4] sm:$0xf]
      %v3660 = vld [vmem:[%s3307 + $0x8] sm:$0x1]
      %v3661 = vld [vmem:[%s3307 + $0xc] sm:$0xf]
      %v3662 = vld [vmem:[%s3307 + $0x10] sm:$0xf]
      %v3663 = vld [vmem:[%s3307 + $0x14] sm:$0x1]
      %v3664 = vld [vmem:[%s3307 + $0x18] sm:$0xf]
      %v3665 = vld [vmem:[%s3307 + $0x1c] sm:$0xf]
      %v3666 = vld [vmem:[%s3307 + $0x20] sm:$0x1]
      %v3667 = vld [vmem:[%s3307 + $0x24] sm:$0xf]
      %v3668 = vld [vmem:[%s3307 + $0x28] sm:$0xf]
      %v3669 = vld [vmem:[%s3307 + $0x2c] sm:$0x1]
      %v3670 = vld [vmem:[%s3307 + $0x30] sm:$0xf]
      %v3671 = vld [vmem:[%s3307 + $0x34] sm:$0xf]
      %v3672 = vld [vmem:[%s3307 + $0x38] sm:$0x1]
      %v3673 = vld [vmem:[%s3307 + $0x3c] sm:$0xf]
      %v3674 = vld [vmem:[%s3307 + $0x40] sm:$0xf]
      %v3675 = vld [vmem:[%s3307 + $0x44] sm:$0x1]
      %v3676 = vld [vmem:[%s3307 + $0x48] sm:$0xf]
      %v3677 = vld [vmem:[%s3307 + $0x4c] sm:$0xf]
      %v3678 = vld [vmem:[%s3307 + $0x50] sm:$0x1]
      %v3679 = vld [vmem:[%s3307 + $0x54] sm:$0xf]
      %v3680 = vld [vmem:[%s3307 + $0x58] sm:$0xf]
      %v3681 = vld [vmem:[%s3307 + $0x5c] sm:$0x1]
      %v3682 = vld [vmem:[%s3307 + $0x60] sm:$0xf]
      %v3683 = vld [vmem:[%s3307 + $0x64] sm:$0xf]
      %v3684 = vld [vmem:[%s3307 + $0x68] sm:$0x1]
      %v3685 = vld [vmem:[%s3307 + $0x6c] sm:$0xf]
      %v3686 = vld [vmem:[%s3307 + $0x70] sm:$0xf]
      %v3687 = vld [vmem:[%s3307 + $0x74] sm:$0x1]
      %v3688 = vld [vmem:[%s3307 + $0x78] sm:$0xf]
      %v3689 = vld [vmem:[%s3307 + $0x7c] sm:$0xf]
      %v3690 = vld [vmem:[%s3307 + $0x80] sm:$0x1]
      %v3691 = vld [vmem:[%s3307 + $0x84] sm:$0xf]
      %v3692 = vld [vmem:[%s3307 + $0x88] sm:$0xf]
      %v3693 = vld [vmem:[%s3307 + $0x8c] sm:$0x1]
      %v3694 = vld [vmem:[%s3307 + $0x90] sm:$0xf]
      %v3695 = vld [vmem:[%s3307 + $0x94] sm:$0xf]
      %v3696 = vld [vmem:[%s3307 + $0x98] sm:$0x1]
      %v3697 = vld [vmem:[%s3307 + $0x9c] sm:$0xf]
      %v3698 = vld [vmem:[%s3307 + $0xa0] sm:$0xf]
      %v3699 = vld [vmem:[%s3307 + $0xa4] sm:$0x1]
      %v3700 = vld [vmem:[%s3307 + $0xa8] sm:$0xf]
      %v3701 = vld [vmem:[%s3307 + $0xac] sm:$0xf]
      %v3702 = vld [vmem:[%s3307 + $0xb0] sm:$0x1]
      %v3703 = vld [vmem:[%s3307 + $0xb4] sm:$0xf]
      %v3704 = vld [vmem:[%s3307 + $0xb8] sm:$0xf]
      %v3705 = vld [vmem:[%s3307 + $0xbc] sm:$0x1]
      %v3707 = vshrl.u32 %v3658, 16
      %v3709 = vrot.slane %v3707, 4
      %v3710 = vshll.u32 %v3658, 16
      %v3712 = vrot.slane %v3710, 5
      %v3713 = vor.u32 %v3709, %v3712
      %v3714 = vrot.slane %v3713, 4
      %v3716 = vshll.u32 %v3659, 16
      %v3718 = vrot.slane %v3716, 5
      %v3719 = vsel %vm576, %v3714, %v3718
      %v3720 = vshrl.u32 %v3659, 16
      %v3722 = vrot.slane %v3720, 4
      %v3723 = vor.u32 %v3722, %v3718
      %v3724 = vrot.slane %v3723, 4
      %v3726 = vshll.u32 %v3660, 16
      %v3728 = vrot.slane %v3726, 5
      %v3729 = vsel %vm576, %v3724, %v3728
      %v3731 = vshrl.u32 %v3661, 16
      %v3733 = vrot.slane %v3731, 4
      %v3734 = vshll.u32 %v3661, 16
      %v3736 = vrot.slane %v3734, 5
      %v3737 = vor.u32 %v3733, %v3736
      %v3738 = vrot.slane %v3737, 4
      %v3740 = vshll.u32 %v3662, 16
      %v3742 = vrot.slane %v3740, 5
      %v3743 = vsel %vm576, %v3738, %v3742
      %v3744 = vshrl.u32 %v3662, 16
      %v3746 = vrot.slane %v3744, 4
      %v3747 = vor.u32 %v3746, %v3742
      %v3748 = vrot.slane %v3747, 4
      %v3750 = vshll.u32 %v3663, 16
      %v3752 = vrot.slane %v3750, 5
      %v3753 = vsel %vm576, %v3748, %v3752
      %v3755 = vshrl.u32 %v3664, 16
      %v3757 = vrot.slane %v3755, 4
      %v3758 = vshll.u32 %v3664, 16
      %v3760 = vrot.slane %v3758, 5
      %v3761 = vor.u32 %v3757, %v3760
      %v3762 = vrot.slane %v3761, 4
      %v3764 = vshll.u32 %v3665, 16
      %v3766 = vrot.slane %v3764, 5
      %v3767 = vsel %vm576, %v3762, %v3766
      %v3768 = vshrl.u32 %v3665, 16
      %v3770 = vrot.slane %v3768, 4
      %v3771 = vor.u32 %v3770, %v3766
      %v3772 = vrot.slane %v3771, 4
      %v3774 = vshll.u32 %v3666, 16
      %v3776 = vrot.slane %v3774, 5
      %v3777 = vsel %vm576, %v3772, %v3776
      %v3779 = vshrl.u32 %v3667, 16
      %v3781 = vrot.slane %v3779, 4
      %v3782 = vshll.u32 %v3667, 16
      %v3784 = vrot.slane %v3782, 5
      %v3785 = vor.u32 %v3781, %v3784
      %v3786 = vrot.slane %v3785, 4
      %v3788 = vshll.u32 %v3668, 16
      %v3790 = vrot.slane %v3788, 5
      %v3791 = vsel %vm576, %v3786, %v3790
      %v3792 = vshrl.u32 %v3668, 16
      %v3794 = vrot.slane %v3792, 4
      %v3795 = vor.u32 %v3794, %v3790
      %v3796 = vrot.slane %v3795, 4
      %v3798 = vshll.u32 %v3669, 16
      %v3800 = vrot.slane %v3798, 5
      %v3801 = vsel %vm576, %v3796, %v3800
      %v3803 = vshrl.u32 %v3670, 16
      %v3805 = vrot.slane %v3803, 4
      %v3806 = vshll.u32 %v3670, 16
      %v3808 = vrot.slane %v3806, 5
      %v3809 = vor.u32 %v3805, %v3808
      %v3810 = vrot.slane %v3809, 4
      %v3812 = vshll.u32 %v3671, 16
      %v3814 = vrot.slane %v3812, 5
      %v3815 = vsel %vm576, %v3810, %v3814
      %v3816 = vshrl.u32 %v3671, 16
      %v3818 = vrot.slane %v3816, 4
      %v3819 = vor.u32 %v3818, %v3814
      %v3820 = vrot.slane %v3819, 4
      %v3822 = vshll.u32 %v3672, 16
      %v3824 = vrot.slane %v3822, 5
      %v3825 = vsel %vm576, %v3820, %v3824
      %v3827 = vshrl.u32 %v3673, 16
      %v3829 = vrot.slane %v3827, 4
      %v3830 = vshll.u32 %v3673, 16
      %v3832 = vrot.slane %v3830, 5
      %v3833 = vor.u32 %v3829, %v3832
      %v3834 = vrot.slane %v3833, 4
      %v3836 = vshll.u32 %v3674, 16
      %v3838 = vrot.slane %v3836, 5
      %v3839 = vsel %vm576, %v3834, %v3838
      %v3840 = vshrl.u32 %v3674, 16
      %v3842 = vrot.slane %v3840, 4
      %v3843 = vor.u32 %v3842, %v3838
      %v3844 = vrot.slane %v3843, 4
      %v3846 = vshll.u32 %v3675, 16
      %v3848 = vrot.slane %v3846, 5
      %v3849 = vsel %vm576, %v3844, %v3848
      %v3851 = vshrl.u32 %v3676, 16
      %v3853 = vrot.slane %v3851, 4
      %v3854 = vshll.u32 %v3676, 16
      %v3856 = vrot.slane %v3854, 5
      %v3857 = vor.u32 %v3853, %v3856
      %v3858 = vrot.slane %v3857, 4
      %v3860 = vshll.u32 %v3677, 16
      %v3862 = vrot.slane %v3860, 5
      %v3863 = vsel %vm576, %v3858, %v3862
      %v3864 = vshrl.u32 %v3677, 16
      %v3866 = vrot.slane %v3864, 4
      %v3867 = vor.u32 %v3866, %v3862
      %v3868 = vrot.slane %v3867, 4
      %v3870 = vshll.u32 %v3678, 16
      %v3872 = vrot.slane %v3870, 5
      %v3873 = vsel %vm576, %v3868, %v3872
      %v3875 = vshrl.u32 %v3679, 16
      %v3877 = vrot.slane %v3875, 4
      %v3878 = vshll.u32 %v3679, 16
      %v3880 = vrot.slane %v3878, 5
      %v3881 = vor.u32 %v3877, %v3880
      %v3882 = vrot.slane %v3881, 4
      %v3884 = vshll.u32 %v3680, 16
      %v3886 = vrot.slane %v3884, 5
      %v3887 = vsel %vm576, %v3882, %v3886
      %v3888 = vshrl.u32 %v3680, 16
      %v3890 = vrot.slane %v3888, 4
      %v3891 = vor.u32 %v3890, %v3886
      %v3892 = vrot.slane %v3891, 4
      %v3894 = vshll.u32 %v3681, 16
      %v3896 = vrot.slane %v3894, 5
      %v3897 = vsel %vm576, %v3892, %v3896
      %v3899 = vshrl.u32 %v3682, 16
      %v3901 = vrot.slane %v3899, 4
      %v3902 = vshll.u32 %v3682, 16
      %v3904 = vrot.slane %v3902, 5
      %v3905 = vor.u32 %v3901, %v3904
      %v3906 = vrot.slane %v3905, 4
      %v3908 = vshll.u32 %v3683, 16
      %v3910 = vrot.slane %v3908, 5
      %v3911 = vsel %vm576, %v3906, %v3910
      %v3912 = vshrl.u32 %v3683, 16
      %v3914 = vrot.slane %v3912, 4
      %v3915 = vor.u32 %v3914, %v3910
      %v3916 = vrot.slane %v3915, 4
      %v3918 = vshll.u32 %v3684, 16
      %v3920 = vrot.slane %v3918, 5
      %v3921 = vsel %vm576, %v3916, %v3920
      %v3923 = vshrl.u32 %v3685, 16
      %v3925 = vrot.slane %v3923, 4
      %v3926 = vshll.u32 %v3685, 16
      %v3928 = vrot.slane %v3926, 5
      %v3929 = vor.u32 %v3925, %v3928
      %v3930 = vrot.slane %v3929, 4
      %v3932 = vshll.u32 %v3686, 16
      %v3934 = vrot.slane %v3932, 5
      %v3935 = vsel %vm576, %v3930, %v3934
      %v3936 = vshrl.u32 %v3686, 16
      %v3938 = vrot.slane %v3936, 4
      %v3939 = vor.u32 %v3938, %v3934
      %v3940 = vrot.slane %v3939, 4
      %v3942 = vshll.u32 %v3687, 16
      %v3944 = vrot.slane %v3942, 5
      %v3945 = vsel %vm576, %v3940, %v3944
      %v3947 = vshrl.u32 %v3688, 16
      %v3949 = vrot.slane %v3947, 4
      %v3950 = vshll.u32 %v3688, 16
      %v3952 = vrot.slane %v3950, 5
      %v3953 = vor.u32 %v3949, %v3952
      %v3954 = vrot.slane %v3953, 4
      %v3956 = vshll.u32 %v3689, 16
      %v3958 = vrot.slane %v3956, 5
      %v3959 = vsel %vm576, %v3954, %v3958
      %v3960 = vshrl.u32 %v3689, 16
      %v3962 = vrot.slane %v3960, 4
      %v3963 = vor.u32 %v3962, %v3958
      %v3964 = vrot.slane %v3963, 4
      %v3966 = vshll.u32 %v3690, 16
      %v3968 = vrot.slane %v3966, 5
      %v3969 = vsel %vm576, %v3964, %v3968
      %v3971 = vshrl.u32 %v3691, 16
      %v3973 = vrot.slane %v3971, 4
      %v3974 = vshll.u32 %v3691, 16
      %v3976 = vrot.slane %v3974, 5
      %v3977 = vor.u32 %v3973, %v3976
      %v3978 = vrot.slane %v3977, 4
      %v3980 = vshll.u32 %v3692, 16
      %v3982 = vrot.slane %v3980, 5
      %v3983 = vsel %vm576, %v3978, %v3982
      %v3984 = vshrl.u32 %v3692, 16
      %v3986 = vrot.slane %v3984, 4
      %v3987 = vor.u32 %v3986, %v3982
      %v3988 = vrot.slane %v3987, 4
      %v3990 = vshll.u32 %v3693, 16
      %v3992 = vrot.slane %v3990, 5
      %v3993 = vsel %vm576, %v3988, %v3992
      %v3995 = vshrl.u32 %v3694, 16
      %v3997 = vrot.slane %v3995, 4
      %v3998 = vshll.u32 %v3694, 16
      %v4000 = vrot.slane %v3998, 5
      %v4001 = vor.u32 %v3997, %v4000
      %v4002 = vrot.slane %v4001, 4
      %v4004 = vshll.u32 %v3695, 16
      %v4006 = vrot.slane %v4004, 5
      %v4007 = vsel %vm576, %v4002, %v4006
      %v4008 = vshrl.u32 %v3695, 16
      %v4010 = vrot.slane %v4008, 4
      %v4011 = vor.u32 %v4010, %v4006
      %v4012 = vrot.slane %v4011, 4
      %v4014 = vshll.u32 %v3696, 16
      %v4016 = vrot.slane %v4014, 5
      %v4017 = vsel %vm576, %v4012, %v4016
      %v4019 = vshrl.u32 %v3697, 16
      %v4021 = vrot.slane %v4019, 4
      %v4022 = vshll.u32 %v3697, 16
      %v4024 = vrot.slane %v4022, 5
      %v4025 = vor.u32 %v4021, %v4024
      %v4026 = vrot.slane %v4025, 4
      %v4028 = vshll.u32 %v3698, 16
      %v4030 = vrot.slane %v4028, 5
      %v4031 = vsel %vm576, %v4026, %v4030
      %v4032 = vshrl.u32 %v3698, 16
      %v4034 = vrot.slane %v4032, 4
      %v4035 = vor.u32 %v4034, %v4030
      %v4036 = vrot.slane %v4035, 4
      %v4038 = vshll.u32 %v3699, 16
      %v4040 = vrot.slane %v4038, 5
      %v4041 = vsel %vm576, %v4036, %v4040
      %v4043 = vshrl.u32 %v3700, 16
      %v4045 = vrot.slane %v4043, 4
      %v4046 = vshll.u32 %v3700, 16
      %v4048 = vrot.slane %v4046, 5
      %v4049 = vor.u32 %v4045, %v4048
      %v4050 = vrot.slane %v4049, 4
      %v4052 = vshll.u32 %v3701, 16
      %v4054 = vrot.slane %v4052, 5
      %v4055 = vsel %vm576, %v4050, %v4054
      %v4056 = vshrl.u32 %v3701, 16
      %v4058 = vrot.slane %v4056, 4
      %v4059 = vor.u32 %v4058, %v4054
      %v4060 = vrot.slane %v4059, 4
      %v4062 = vshll.u32 %v3702, 16
      %v4064 = vrot.slane %v4062, 5
      %v4065 = vsel %vm576, %v4060, %v4064
      %v4067 = vshrl.u32 %v3703, 16
      %v4069 = vrot.slane %v4067, 4
      %v4070 = vshll.u32 %v3703, 16
      %v4072 = vrot.slane %v4070, 5
      %v4073 = vor.u32 %v4069, %v4072
      %v4074 = vrot.slane %v4073, 4
      %v4076 = vshll.u32 %v3704, 16
      %v4078 = vrot.slane %v4076, 5
      %v4079 = vsel %vm576, %v4074, %v4078
      %v4080 = vshrl.u32 %v3704, 16
      %v4082 = vrot.slane %v4080, 4
      %v4083 = vor.u32 %v4082, %v4078
      %v4084 = vrot.slane %v4083, 4
      %v4086 = vshll.u32 %v3705, 16
      %v4088 = vrot.slane %v4086, 5
      %v4089 = vsel %vm576, %v4084, %v4088
      %s4090 = scalar_lea.vmem %s1, 14
      %v4091 = vld [vmem:[%s4090] sm:$0x3]
      %v4092 = vunpack.c.l.b16 %v3719
      %v4093 = vunpack.c.l.b16 %v3729
      %v4094 = vunpack.c.l.b16 %v3743
      %v4095 = vunpack.c.l.b16 %v3753
      %v4096 = vunpack.c.l.b16 %v3767
      %v4097 = vunpack.c.l.b16 %v3777
      %v4098 = vunpack.c.l.b16 %v3791
      %v4099 = vunpack.c.l.b16 %v3801
      %v4100 = vunpack.c.l.b16 %v3815
      %v4101 = vunpack.c.l.b16 %v3825
      %v4102 = vunpack.c.l.b16 %v3839
      %v4103 = vunpack.c.l.b16 %v3849
      %v4104 = vunpack.c.l.b16 %v3863
      %v4105 = vunpack.c.l.b16 %v3873
      %v4106 = vunpack.c.l.b16 %v3887
      %v4107 = vunpack.c.l.b16 %v3897
      %v4108 = vunpack.c.l.b16 %v3911
      %v4109 = vunpack.c.l.b16 %v3921
      %v4110 = vunpack.c.l.b16 %v3935
      %v4111 = vunpack.c.l.b16 %v3945
      %v4112 = vunpack.c.l.b16 %v3959
      %v4113 = vunpack.c.l.b16 %v3969
      %v4114 = vunpack.c.l.b16 %v3983
      %v4115 = vunpack.c.l.b16 %v3993
      %v4116 = vunpack.c.l.b16 %v4007
      %v4117 = vunpack.c.l.b16 %v4017
      %v4118 = vunpack.c.l.b16 %v4031
      %v4119 = vunpack.c.l.b16 %v4041
      %v4120 = vunpack.c.l.b16 %v4055
      %v4121 = vunpack.c.l.b16 %v4065
      %v4122 = vunpack.c.l.b16 %v4079
      %v4123 = vunpack.c.l.b16 %v4089
      %v4124 = vpack.c.b16 %v4093, %v4092
      %v4125 = vpack.c.b16 %v4095, %v4094
      %v4126 = vpack.c.b16 %v4097, %v4096
      %v4127 = vpack.c.b16 %v4099, %v4098
      %v4128 = vpack.c.b16 %v4101, %v4100
      %v4129 = vpack.c.b16 %v4103, %v4102
      %v4130 = vpack.c.b16 %v4105, %v4104
      %v4131 = vpack.c.b16 %v4107, %v4106
      %v4132 = vpack.c.b16 %v4109, %v4108
      %v4133 = vpack.c.b16 %v4111, %v4110
      %v4134 = vpack.c.b16 %v4113, %v4112
      %v4135 = vpack.c.b16 %v4115, %v4114
      %v4136 = vpack.c.b16 %v4117, %v4116
      %v4137 = vpack.c.b16 %v4119, %v4118
      %v4138 = vpack.c.b16 %v4121, %v4120
      %v4139 = vpack.c.b16 %v4123, %v4122
      %v4141 = vsel %vm352, %v4124, 0
      %v4144 = vsel %vm352, %v4125, 0
      %v4147 = vsel %vm352, %v4126, 0
      %v4150 = vsel %vm352, %v4127, 0
      %v4153 = vsel %vm352, %v4128, 0
      %v4156 = vsel %vm352, %v4129, 0
      %v4159 = vsel %vm352, %v4130, 0
      %v4162 = vsel %vm352, %v4131, 0
      %v4165 = vsel %vm352, %v4132, 0
      %v4168 = vsel %vm352, %v4133, 0
      %v4171 = vsel %vm352, %v4134, 0
      %v4174 = vsel %vm352, %v4135, 0
      %v4177 = vsel %vm352, %v4136, 0
      %v4180 = vsel %vm352, %v4137, 0
      %v4183 = vsel %vm352, %v4138, 0
      %v4186 = vsel %vm352, %v4139, 0
      %v4189 = vsel %vm401, %v4091, 0
      %4191 = vmatpush.bf16.msra.mxu0 0
      %4192 = vmatpush.bf16.msra.mxu0 0
      %4193 = vmatpush.bf16.msra.mxu0 0
      %4194 = vmatpush.bf16.msra.mxu0 0
      %4195 = vmatpush.bf16.msra.mxu0 0
      %4196 = vmatpush.bf16.msra.mxu0 0
      %4197 = vmatpush.bf16.msra.mxu0 0
      %4198 = vmatpush.bf16.msra.mxu0 %v4189
      %4199 = vmatmul.bf16.gmra.mxu0 %v4141
      %v4200 = vpop.f32.mrf.mxu0
      %v4201 = vadd.f32 0.0, %v4200
      %v4202 = vpop.f32.mrf.mxu0
      %v4203 = vadd.f32 0.0, %v4202
      %4204 = vmatmul.bf16.gmra.mxu0 %v4144
      %v4205 = vpop.f32.mrf.mxu0
      %v4206 = vadd.f32 0.0, %v4205
      %v4207 = vpop.f32.mrf.mxu0
      %v4208 = vadd.f32 0.0, %v4207
      %4209 = vmatmul.bf16.gmra.mxu0 %v4147
      %v4210 = vpop.f32.mrf.mxu0
      %v4211 = vadd.f32 0.0, %v4210
      %v4212 = vpop.f32.mrf.mxu0
      %v4213 = vadd.f32 0.0, %v4212
      %4214 = vmatmul.bf16.gmra.mxu0 %v4150
      %v4215 = vpop.f32.mrf.mxu0
      %v4216 = vadd.f32 0.0, %v4215
      %v4217 = vpop.f32.mrf.mxu0
      %v4218 = vadd.f32 0.0, %v4217
      %4219 = vmatmul.bf16.gmra.mxu0 %v4153
      %v4220 = vpop.f32.mrf.mxu0
      %v4221 = vadd.f32 0.0, %v4220
      %v4222 = vpop.f32.mrf.mxu0
      %v4223 = vadd.f32 0.0, %v4222
      %4224 = vmatmul.bf16.gmra.mxu0 %v4156
      %v4225 = vpop.f32.mrf.mxu0
      %v4226 = vadd.f32 0.0, %v4225
      %v4227 = vpop.f32.mrf.mxu0
      %v4228 = vadd.f32 0.0, %v4227
      %4229 = vmatmul.bf16.gmra.mxu0 %v4159
      %v4230 = vpop.f32.mrf.mxu0
      %v4231 = vadd.f32 0.0, %v4230
      %v4232 = vpop.f32.mrf.mxu0
      %v4233 = vadd.f32 0.0, %v4232
      %4234 = vmatmul.bf16.gmra.mxu0 %v4162
      %v4235 = vpop.f32.mrf.mxu0
      %v4236 = vadd.f32 0.0, %v4235
      %v4237 = vpop.f32.mrf.mxu0
      %v4238 = vadd.f32 0.0, %v4237
      %4239 = vmatmul.bf16.gmra.mxu0 %v4165
      %v4240 = vpop.f32.mrf.mxu0
      %v4241 = vadd.f32 0.0, %v4240
      %v4242 = vpop.f32.mrf.mxu0
      %v4243 = vadd.f32 0.0, %v4242
      %4244 = vmatmul.bf16.gmra.mxu0 %v4168
      %v4245 = vpop.f32.mrf.mxu0
      %v4246 = vadd.f32 0.0, %v4245
      %v4247 = vpop.f32.mrf.mxu0
      %v4248 = vadd.f32 0.0, %v4247
      %4249 = vmatmul.bf16.gmra.mxu0 %v4171
      %v4250 = vpop.f32.mrf.mxu0
      %v4251 = vadd.f32 0.0, %v4250
      %v4252 = vpop.f32.mrf.mxu0
      %v4253 = vadd.f32 0.0, %v4252
      %4254 = vmatmul.bf16.gmra.mxu0 %v4174
      %v4255 = vpop.f32.mrf.mxu0
      %v4256 = vadd.f32 0.0, %v4255
      %v4257 = vpop.f32.mrf.mxu0
      %v4258 = vadd.f32 0.0, %v4257
      %4259 = vmatmul.bf16.gmra.mxu0 %v4177
      %v4260 = vpop.f32.mrf.mxu0
      %v4261 = vadd.f32 0.0, %v4260
      %v4262 = vpop.f32.mrf.mxu0
      %v4263 = vadd.f32 0.0, %v4262
      %4264 = vmatmul.bf16.gmra.mxu0 %v4180
      %v4265 = vpop.f32.mrf.mxu0
      %v4266 = vadd.f32 0.0, %v4265
      %v4267 = vpop.f32.mrf.mxu0
      %v4268 = vadd.f32 0.0, %v4267
      %4269 = vmatmul.bf16.gmra.mxu0 %v4183
      %v4270 = vpop.f32.mrf.mxu0
      %v4271 = vadd.f32 0.0, %v4270
      %v4272 = vpop.f32.mrf.mxu0
      %v4273 = vadd.f32 0.0, %v4272
      %4274 = vmatmul.bf16.gmra.mxu0 %v4186
      %v4275 = vpop.f32.mrf.mxu0
      %v4276 = vadd.f32 0.0, %v4275
      %v4277 = vpop.f32.mrf.mxu0
      %v4278 = vadd.f32 0.0, %v4277
      %4279 = vdwg.mxu0
      %v4280 = vld [vmem:[#allocation2] sm:$0xff]
      %v4281 = vld [vmem:[#allocation2 + $0x8] sm:$0xff]
      %v4282 = vld [vmem:[#allocation2 + $0x10] sm:$0xff]
      %v4283 = vld [vmem:[#allocation2 + $0x18] sm:$0xff]
      %v4284 = vld [vmem:[#allocation2 + $0x20] sm:$0xff]
      %v4285 = vld [vmem:[#allocation2 + $0x28] sm:$0xff]
      %v4286 = vld [vmem:[#allocation2 + $0x30] sm:$0xff]
      %v4287 = vld [vmem:[#allocation2 + $0x38] sm:$0xff]
      %v4288 = vld [vmem:[#allocation2 + $0x40] sm:$0xff]
      %v4289 = vld [vmem:[#allocation2 + $0x48] sm:$0xff]
      %v4290 = vld [vmem:[#allocation2 + $0x50] sm:$0xff]
      %v4291 = vld [vmem:[#allocation2 + $0x58] sm:$0xff]
      %v4292 = vld [vmem:[#allocation2 + $0x60] sm:$0xff]
      %v4293 = vld [vmem:[#allocation2 + $0x68] sm:$0xff]
      %v4294 = vld [vmem:[#allocation2 + $0x70] sm:$0xff]
      %v4295 = vld [vmem:[#allocation2 + $0x78] sm:$0xff]
      %v4296 = vld [vmem:[#allocation2 + $0x80] sm:$0xff]
      %v4297 = vld [vmem:[#allocation2 + $0x88] sm:$0xff]
      %v4298 = vld [vmem:[#allocation2 + $0x90] sm:$0xff]
      %v4299 = vld [vmem:[#allocation2 + $0x98] sm:$0xff]
      %v4300 = vld [vmem:[#allocation2 + $0xa0] sm:$0xff]
      %v4301 = vld [vmem:[#allocation2 + $0xa8] sm:$0xff]
      %v4302 = vld [vmem:[#allocation2 + $0xb0] sm:$0xff]
      %v4303 = vld [vmem:[#allocation2 + $0xb8] sm:$0xff]
      %v4304 = vld [vmem:[#allocation2 + $0xc0] sm:$0xff]
      %v4305 = vld [vmem:[#allocation2 + $0xc8] sm:$0xff]
      %v4306 = vld [vmem:[#allocation2 + $0xd0] sm:$0xff]
      %v4307 = vld [vmem:[#allocation2 + $0xd8] sm:$0xff]
      %v4308 = vld [vmem:[#allocation2 + $0xe0] sm:$0xff]
      %v4309 = vld [vmem:[#allocation2 + $0xe8] sm:$0xff]
      %v4310 = vld [vmem:[#allocation2 + $0xf0] sm:$0xff]
      %v4311 = vld [vmem:[#allocation2 + $0xf8] sm:$0xff]
      %v4312 = vadd.f32 %v4280, %v4201
      %v4313 = vadd.f32 %v4281, %v4203
      %v4314 = vadd.f32 %v4282, %v4206
      %v4315 = vadd.f32 %v4283, %v4208
      %v4316 = vadd.f32 %v4284, %v4211
      %v4317 = vadd.f32 %v4285, %v4213
      %v4318 = vadd.f32 %v4286, %v4216
      %v4319 = vadd.f32 %v4287, %v4218
      %v4320 = vadd.f32 %v4288, %v4221
      %v4321 = vadd.f32 %v4289, %v4223
      %v4322 = vadd.f32 %v4290, %v4226
      %v4323 = vadd.f32 %v4291, %v4228
      %v4324 = vadd.f32 %v4292, %v4231
      %v4325 = vadd.f32 %v4293, %v4233
      %v4326 = vadd.f32 %v4294, %v4236
      %v4327 = vadd.f32 %v4295, %v4238
      %v4328 = vadd.f32 %v4296, %v4241
      %v4329 = vadd.f32 %v4297, %v4243
      %v4330 = vadd.f32 %v4298, %v4246
      %v4331 = vadd.f32 %v4299, %v4248
      %v4332 = vadd.f32 %v4300, %v4251
      %v4333 = vadd.f32 %v4301, %v4253
      %v4334 = vadd.f32 %v4302, %v4256
      %v4335 = vadd.f32 %v4303, %v4258
      %v4336 = vadd.f32 %v4304, %v4261
      %v4337 = vadd.f32 %v4305, %v4263
      %v4338 = vadd.f32 %v4306, %v4266
      %v4339 = vadd.f32 %v4307, %v4268
      %v4340 = vadd.f32 %v4308, %v4271
      %v4341 = vadd.f32 %v4309, %v4273
      %v4342 = vadd.f32 %v4310, %v4276
      %v4343 = vadd.f32 %v4311, %v4278
      %4344 = vst [vmem:[#allocation2] sm:$0xff] %v4312
      %4345 = vst [vmem:[#allocation2 + $0x8] sm:$0xff] %v4313
      %4346 = vst [vmem:[#allocation2 + $0x10] sm:$0xff] %v4314
      %4347 = vst [vmem:[#allocation2 + $0x18] sm:$0xff] %v4315
      %4348 = vst [vmem:[#allocation2 + $0x20] sm:$0xff] %v4316
      %4349 = vst [vmem:[#allocation2 + $0x28] sm:$0xff] %v4317
      %4350 = vst [vmem:[#allocation2 + $0x30] sm:$0xff] %v4318
      %4351 = vst [vmem:[#allocation2 + $0x38] sm:$0xff] %v4319
      %4352 = vst [vmem:[#allocation2 + $0x40] sm:$0xff] %v4320
      %4353 = vst [vmem:[#allocation2 + $0x48] sm:$0xff] %v4321
      %4354 = vst [vmem:[#allocation2 + $0x50] sm:$0xff] %v4322
      %4355 = vst [vmem:[#allocation2 + $0x58] sm:$0xff] %v4323
      %4356 = vst [vmem:[#allocation2 + $0x60] sm:$0xff] %v4324
      %4357 = vst [vmem:[#allocation2 + $0x68] sm:$0xff] %v4325
      %4358 = vst [vmem:[#allocation2 + $0x70] sm:$0xff] %v4326
      %4359 = vst [vmem:[#allocation2 + $0x78] sm:$0xff] %v4327
      %4360 = vst [vmem:[#allocation2 + $0x80] sm:$0xff] %v4328
      %4361 = vst [vmem:[#allocation2 + $0x88] sm:$0xff] %v4329
      %4362 = vst [vmem:[#allocation2 + $0x90] sm:$0xff] %v4330
      %4363 = vst [vmem:[#allocation2 + $0x98] sm:$0xff] %v4331
      %4364 = vst [vmem:[#allocation2 + $0xa0] sm:$0xff] %v4332
      %4365 = vst [vmem:[#allocation2 + $0xa8] sm:$0xff] %v4333
      %4366 = vst [vmem:[#allocation2 + $0xb0] sm:$0xff] %v4334
      %4367 = vst [vmem:[#allocation2 + $0xb8] sm:$0xff] %v4335
      %4368 = vst [vmem:[#allocation2 + $0xc0] sm:$0xff] %v4336
      %4369 = vst [vmem:[#allocation2 + $0xc8] sm:$0xff] %v4337
      %4370 = vst [vmem:[#allocation2 + $0xd0] sm:$0xff] %v4338
      %4371 = vst [vmem:[#allocation2 + $0xd8] sm:$0xff] %v4339
      %4372 = vst [vmem:[#allocation2 + $0xe0] sm:$0xff] %v4340
      %4373 = vst [vmem:[#allocation2 + $0xe8] sm:$0xff] %v4341
      %4374 = vst [vmem:[#allocation2 + $0xf0] sm:$0xff] %v4342
      %4375 = vst [vmem:[#allocation2 + $0xf8] sm:$0xff] %v4343
      %v4376 = vld [vmem:[%s3307] sm:$0xe]
      %v4377 = vld [vmem:[%s3307 + $0x4] sm:$0xf]
      %v4378 = vld [vmem:[%s3307 + $0x8] sm:$0x1]
      %v4379 = vld [vmem:[%s3307 + $0xc] sm:$0xe]
      %v4380 = vld [vmem:[%s3307 + $0x10] sm:$0xf]
      %v4381 = vld [vmem:[%s3307 + $0x14] sm:$0x1]
      %v4382 = vld [vmem:[%s3307 + $0x18] sm:$0xe]
      %v4383 = vld [vmem:[%s3307 + $0x1c] sm:$0xf]
      %v4384 = vld [vmem:[%s3307 + $0x20] sm:$0x1]
      %v4385 = vld [vmem:[%s3307 + $0x24] sm:$0xe]
      %v4386 = vld [vmem:[%s3307 + $0x28] sm:$0xf]
      %v4387 = vld [vmem:[%s3307 + $0x2c] sm:$0x1]
      %v4388 = vld [vmem:[%s3307 + $0x30] sm:$0xe]
      %v4389 = vld [vmem:[%s3307 + $0x34] sm:$0xf]
      %v4390 = vld [vmem:[%s3307 + $0x38] sm:$0x1]
      %v4391 = vld [vmem:[%s3307 + $0x3c] sm:$0xe]
      %v4392 = vld [vmem:[%s3307 + $0x40] sm:$0xf]
      %v4393 = vld [vmem:[%s3307 + $0x44] sm:$0x1]
      %v4394 = vld [vmem:[%s3307 + $0x48] sm:$0xe]
      %v4395 = vld [vmem:[%s3307 + $0x4c] sm:$0xf]
      %v4396 = vld [vmem:[%s3307 + $0x50] sm:$0x1]
      %v4397 = vld [vmem:[%s3307 + $0x54] sm:$0xe]
      %v4398 = vld [vmem:[%s3307 + $0x58] sm:$0xf]
      %v4399 = vld [vmem:[%s3307 + $0x5c] sm:$0x1]
      %v4400 = vld [vmem:[%s3307 + $0x60] sm:$0xe]
      %v4401 = vld [vmem:[%s3307 + $0x64] sm:$0xf]
      %v4402 = vld [vmem:[%s3307 + $0x68] sm:$0x1]
      %v4403 = vld [vmem:[%s3307 + $0x6c] sm:$0xe]
      %v4404 = vld [vmem:[%s3307 + $0x70] sm:$0xf]
      %v4405 = vld [vmem:[%s3307 + $0x74] sm:$0x1]
      %v4406 = vld [vmem:[%s3307 + $0x78] sm:$0xe]
      %v4407 = vld [vmem:[%s3307 + $0x7c] sm:$0xf]
      %v4408 = vld [vmem:[%s3307 + $0x80] sm:$0x1]
      %v4409 = vld [vmem:[%s3307 + $0x84] sm:$0xe]
      %v4410 = vld [vmem:[%s3307 + $0x88] sm:$0xf]
      %v4411 = vld [vmem:[%s3307 + $0x8c] sm:$0x1]
      %v4412 = vld [vmem:[%s3307 + $0x90] sm:$0xe]
      %v4413 = vld [vmem:[%s3307 + $0x94] sm:$0xf]
      %v4414 = vld [vmem:[%s3307 + $0x98] sm:$0x1]
      %v4415 = vld [vmem:[%s3307 + $0x9c] sm:$0xe]
      %v4416 = vld [vmem:[%s3307 + $0xa0] sm:$0xf]
      %v4417 = vld [vmem:[%s3307 + $0xa4] sm:$0x1]
      %v4418 = vld [vmem:[%s3307 + $0xa8] sm:$0xe]
      %v4419 = vld [vmem:[%s3307 + $0xac] sm:$0xf]
      %v4420 = vld [vmem:[%s3307 + $0xb0] sm:$0x1]
      %v4421 = vld [vmem:[%s3307 + $0xb4] sm:$0xe]
      %v4422 = vld [vmem:[%s3307 + $0xb8] sm:$0xf]
      %v4423 = vld [vmem:[%s3307 + $0xbc] sm:$0x1]
      %v4472 = vrot.slane %v4376, 5
      %v4473 = vrot.slane %v4472, 4
      %v4474 = vrot.slane %v4377, 5
      %v4475 = vsel %vm1345, %v4473, %v4474
      %v4476 = vrot.slane %v4474, 4
      %v4477 = vrot.slane %v4378, 5
      %v4478 = vsel %vm1345, %v4476, %v4477
      %v4479 = vrot.slane %v4379, 5
      %v4480 = vrot.slane %v4479, 4
      %v4481 = vrot.slane %v4380, 5
      %v4482 = vsel %vm1345, %v4480, %v4481
      %v4483 = vrot.slane %v4481, 4
      %v4484 = vrot.slane %v4381, 5
      %v4485 = vsel %vm1345, %v4483, %v4484
      %v4486 = vrot.slane %v4382, 5
      %v4487 = vrot.slane %v4486, 4
      %v4488 = vrot.slane %v4383, 5
      %v4489 = vsel %vm1345, %v4487, %v4488
      %v4490 = vrot.slane %v4488, 4
      %v4491 = vrot.slane %v4384, 5
      %v4492 = vsel %vm1345, %v4490, %v4491
      %v4493 = vrot.slane %v4385, 5
      %v4494 = vrot.slane %v4493, 4
      %v4495 = vrot.slane %v4386, 5
      %v4496 = vsel %vm1345, %v4494, %v4495
      %v4497 = vrot.slane %v4495, 4
      %v4498 = vrot.slane %v4387, 5
      %v4499 = vsel %vm1345, %v4497, %v4498
      %v4500 = vrot.slane %v4388, 5
      %v4501 = vrot.slane %v4500, 4
      %v4502 = vrot.slane %v4389, 5
      %v4503 = vsel %vm1345, %v4501, %v4502
      %v4504 = vrot.slane %v4502, 4
      %v4505 = vrot.slane %v4390, 5
      %v4506 = vsel %vm1345, %v4504, %v4505
      %v4507 = vrot.slane %v4391, 5
      %v4508 = vrot.slane %v4507, 4
      %v4509 = vrot.slane %v4392, 5
      %v4510 = vsel %vm1345, %v4508, %v4509
      %v4511 = vrot.slane %v4509, 4
      %v4512 = vrot.slane %v4393, 5
      %v4513 = vsel %vm1345, %v4511, %v4512
      %v4514 = vrot.slane %v4394, 5
      %v4515 = vrot.slane %v4514, 4
      %v4516 = vrot.slane %v4395, 5
      %v4517 = vsel %vm1345, %v4515, %v4516
      %v4518 = vrot.slane %v4516, 4
      %v4519 = vrot.slane %v4396, 5
      %v4520 = vsel %vm1345, %v4518, %v4519
      %v4521 = vrot.slane %v4397, 5
      %v4522 = vrot.slane %v4521, 4
      %v4523 = vrot.slane %v4398, 5
      %v4524 = vsel %vm1345, %v4522, %v4523
      %v4525 = vrot.slane %v4523, 4
      %v4526 = vrot.slane %v4399, 5
      %v4527 = vsel %vm1345, %v4525, %v4526
      %v4528 = vrot.slane %v4400, 5
      %v4529 = vrot.slane %v4528, 4
      %v4530 = vrot.slane %v4401, 5
      %v4531 = vsel %vm1345, %v4529, %v4530
      %v4532 = vrot.slane %v4530, 4
      %v4533 = vrot.slane %v4402, 5
      %v4534 = vsel %vm1345, %v4532, %v4533
      %v4535 = vrot.slane %v4403, 5
      %v4536 = vrot.slane %v4535, 4
      %v4537 = vrot.slane %v4404, 5
      %v4538 = vsel %vm1345, %v4536, %v4537
      %v4539 = vrot.slane %v4537, 4
      %v4540 = vrot.slane %v4405, 5
      %v4541 = vsel %vm1345, %v4539, %v4540
      %v4542 = vrot.slane %v4406, 5
      %v4543 = vrot.slane %v4542, 4
      %v4544 = vrot.slane %v4407, 5
      %v4545 = vsel %vm1345, %v4543, %v4544
      %v4546 = vrot.slane %v4544, 4
      %v4547 = vrot.slane %v4408, 5
      %v4548 = vsel %vm1345, %v4546, %v4547
      %v4549 = vrot.slane %v4409, 5
      %v4550 = vrot.slane %v4549, 4
      %v4551 = vrot.slane %v4410, 5
      %v4552 = vsel %vm1345, %v4550, %v4551
      %v4553 = vrot.slane %v4551, 4
      %v4554 = vrot.slane %v4411, 5
      %v4555 = vsel %vm1345, %v4553, %v4554
      %v4556 = vrot.slane %v4412, 5
      %v4557 = vrot.slane %v4556, 4
      %v4558 = vrot.slane %v4413, 5
      %v4559 = vsel %vm1345, %v4557, %v4558
      %v4560 = vrot.slane %v4558, 4
      %v4561 = vrot.slane %v4414, 5
      %v4562 = vsel %vm1345, %v4560, %v4561
      %v4563 = vrot.slane %v4415, 5
      %v4564 = vrot.slane %v4563, 4
      %v4565 = vrot.slane %v4416, 5
      %v4566 = vsel %vm1345, %v4564, %v4565
      %v4567 = vrot.slane %v4565, 4
      %v4568 = vrot.slane %v4417, 5
      %v4569 = vsel %vm1345, %v4567, %v4568
      %v4570 = vrot.slane %v4418, 5
      %v4571 = vrot.slane %v4570, 4
      %v4572 = vrot.slane %v4419, 5
      %v4573 = vsel %vm1345, %v4571, %v4572
      %v4574 = vrot.slane %v4572, 4
      %v4575 = vrot.slane %v4420, 5
      %v4576 = vsel %vm1345, %v4574, %v4575
      %v4577 = vrot.slane %v4421, 5
      %v4578 = vrot.slane %v4577, 4
      %v4579 = vrot.slane %v4422, 5
      %v4580 = vsel %vm1345, %v4578, %v4579
      %v4581 = vrot.slane %v4579, 4
      %v4582 = vrot.slane %v4423, 5
      %v4583 = vsel %vm1345, %v4581, %v4582
      %s4584 = scalar_lea.vmem %s1, 16
      %v4585 = vld [vmem:[%s4584] sm:$0x3]
      %v4586 = vunpack.c.l.b16 %v4475
      %v4587 = vunpack.c.l.b16 %v4478
      %v4588 = vunpack.c.l.b16 %v4482
      %v4589 = vunpack.c.l.b16 %v4485
      %v4590 = vunpack.c.l.b16 %v4489
      %v4591 = vunpack.c.l.b16 %v4492
      %v4592 = vunpack.c.l.b16 %v4496
      %v4593 = vunpack.c.l.b16 %v4499
      %v4594 = vunpack.c.l.b16 %v4503
      %v4595 = vunpack.c.l.b16 %v4506
      %v4596 = vunpack.c.l.b16 %v4510
      %v4597 = vunpack.c.l.b16 %v4513
      %v4598 = vunpack.c.l.b16 %v4517
      %v4599 = vunpack.c.l.b16 %v4520
      %v4600 = vunpack.c.l.b16 %v4524
      %v4601 = vunpack.c.l.b16 %v4527
      %v4602 = vunpack.c.l.b16 %v4531
      %v4603 = vunpack.c.l.b16 %v4534
      %v4604 = vunpack.c.l.b16 %v4538
      %v4605 = vunpack.c.l.b16 %v4541
      %v4606 = vunpack.c.l.b16 %v4545
      %v4607 = vunpack.c.l.b16 %v4548
      %v4608 = vunpack.c.l.b16 %v4552
      %v4609 = vunpack.c.l.b16 %v4555
      %v4610 = vunpack.c.l.b16 %v4559
      %v4611 = vunpack.c.l.b16 %v4562
      %v4612 = vunpack.c.l.b16 %v4566
      %v4613 = vunpack.c.l.b16 %v4569
      %v4614 = vunpack.c.l.b16 %v4573
      %v4615 = vunpack.c.l.b16 %v4576
      %v4616 = vunpack.c.l.b16 %v4580
      %v4617 = vunpack.c.l.b16 %v4583
      %v4618 = vpack.c.b16 %v4587, %v4586
      %v4619 = vpack.c.b16 %v4589, %v4588
      %v4620 = vpack.c.b16 %v4591, %v4590
      %v4621 = vpack.c.b16 %v4593, %v4592
      %v4622 = vpack.c.b16 %v4595, %v4594
      %v4623 = vpack.c.b16 %v4597, %v4596
      %v4624 = vpack.c.b16 %v4599, %v4598
      %v4625 = vpack.c.b16 %v4601, %v4600
      %v4626 = vpack.c.b16 %v4603, %v4602
      %v4627 = vpack.c.b16 %v4605, %v4604
      %v4628 = vpack.c.b16 %v4607, %v4606
      %v4629 = vpack.c.b16 %v4609, %v4608
      %v4630 = vpack.c.b16 %v4611, %v4610
      %v4631 = vpack.c.b16 %v4613, %v4612
      %v4632 = vpack.c.b16 %v4615, %v4614
      %v4633 = vpack.c.b16 %v4617, %v4616
      %v4635 = vsel %vm352, %v4618, 0
      %v4638 = vsel %vm352, %v4619, 0
      %v4641 = vsel %vm352, %v4620, 0
      %v4644 = vsel %vm352, %v4621, 0
      %v4647 = vsel %vm352, %v4622, 0
      %v4650 = vsel %vm352, %v4623, 0
      %v4653 = vsel %vm352, %v4624, 0
      %v4656 = vsel %vm352, %v4625, 0
      %v4659 = vsel %vm352, %v4626, 0
      %v4662 = vsel %vm352, %v4627, 0
      %v4665 = vsel %vm352, %v4628, 0
      %v4668 = vsel %vm352, %v4629, 0
      %v4671 = vsel %vm352, %v4630, 0
      %v4674 = vsel %vm352, %v4631, 0
      %v4677 = vsel %vm352, %v4632, 0
      %v4680 = vsel %vm352, %v4633, 0
      %v4683 = vsel %vm401, %v4585, 0
      %4685 = vmatpush.bf16.msra.mxu0 0
      %4686 = vmatpush.bf16.msra.mxu0 0
      %4687 = vmatpush.bf16.msra.mxu0 0
      %4688 = vmatpush.bf16.msra.mxu0 0
      %4689 = vmatpush.bf16.msra.mxu0 0
      %4690 = vmatpush.bf16.msra.mxu0 0
      %4691 = vmatpush.bf16.msra.mxu0 0
      %4692 = vmatpush.bf16.msra.mxu0 %v4683
      %4693 = vmatmul.bf16.gmra.mxu0 %v4635
      %v4694 = vpop.f32.mrf.mxu0
      %v4695 = vadd.f32 0.0, %v4694
      %v4696 = vpop.f32.mrf.mxu0
      %v4697 = vadd.f32 0.0, %v4696
      %4698 = vmatmul.bf16.gmra.mxu0 %v4638
      %v4699 = vpop.f32.mrf.mxu0
      %v4700 = vadd.f32 0.0, %v4699
      %v4701 = vpop.f32.mrf.mxu0
      %v4702 = vadd.f32 0.0, %v4701
      %4703 = vmatmul.bf16.gmra.mxu0 %v4641
      %v4704 = vpop.f32.mrf.mxu0
      %v4705 = vadd.f32 0.0, %v4704
      %v4706 = vpop.f32.mrf.mxu0
      %v4707 = vadd.f32 0.0, %v4706
      %4708 = vmatmul.bf16.gmra.mxu0 %v4644
      %v4709 = vpop.f32.mrf.mxu0
      %v4710 = vadd.f32 0.0, %v4709
      %v4711 = vpop.f32.mrf.mxu0
      %v4712 = vadd.f32 0.0, %v4711
      %4713 = vmatmul.bf16.gmra.mxu0 %v4647
      %v4714 = vpop.f32.mrf.mxu0
      %v4715 = vadd.f32 0.0, %v4714
      %v4716 = vpop.f32.mrf.mxu0
      %v4717 = vadd.f32 0.0, %v4716
      %4718 = vmatmul.bf16.gmra.mxu0 %v4650
      %v4719 = vpop.f32.mrf.mxu0
      %v4720 = vadd.f32 0.0, %v4719
      %v4721 = vpop.f32.mrf.mxu0
      %v4722 = vadd.f32 0.0, %v4721
      %4723 = vmatmul.bf16.gmra.mxu0 %v4653
      %v4724 = vpop.f32.mrf.mxu0
      %v4725 = vadd.f32 0.0, %v4724
      %v4726 = vpop.f32.mrf.mxu0
      %v4727 = vadd.f32 0.0, %v4726
      %4728 = vmatmul.bf16.gmra.mxu0 %v4656
      %v4729 = vpop.f32.mrf.mxu0
      %v4730 = vadd.f32 0.0, %v4729
      %v4731 = vpop.f32.mrf.mxu0
      %v4732 = vadd.f32 0.0, %v4731
      %4733 = vmatmul.bf16.gmra.mxu0 %v4659
      %v4734 = vpop.f32.mrf.mxu0
      %v4735 = vadd.f32 0.0, %v4734
      %v4736 = vpop.f32.mrf.mxu0
      %v4737 = vadd.f32 0.0, %v4736
      %4738 = vmatmul.bf16.gmra.mxu0 %v4662
      %v4739 = vpop.f32.mrf.mxu0
      %v4740 = vadd.f32 0.0, %v4739
      %v4741 = vpop.f32.mrf.mxu0
      %v4742 = vadd.f32 0.0, %v4741
      %4743 = vmatmul.bf16.gmra.mxu0 %v4665
      %v4744 = vpop.f32.mrf.mxu0
      %v4745 = vadd.f32 0.0, %v4744
      %v4746 = vpop.f32.mrf.mxu0
      %v4747 = vadd.f32 0.0, %v4746
      %4748 = vmatmul.bf16.gmra.mxu0 %v4668
      %v4749 = vpop.f32.mrf.mxu0
      %v4750 = vadd.f32 0.0, %v4749
      %v4751 = vpop.f32.mrf.mxu0
      %v4752 = vadd.f32 0.0, %v4751
      %4753 = vmatmul.bf16.gmra.mxu0 %v4671
      %v4754 = vpop.f32.mrf.mxu0
      %v4755 = vadd.f32 0.0, %v4754
      %v4756 = vpop.f32.mrf.mxu0
      %v4757 = vadd.f32 0.0, %v4756
      %4758 = vmatmul.bf16.gmra.mxu0 %v4674
      %v4759 = vpop.f32.mrf.mxu0
      %v4760 = vadd.f32 0.0, %v4759
      %v4761 = vpop.f32.mrf.mxu0
      %v4762 = vadd.f32 0.0, %v4761
      %4763 = vmatmul.bf16.gmra.mxu0 %v4677
      %v4764 = vpop.f32.mrf.mxu0
      %v4765 = vadd.f32 0.0, %v4764
      %v4766 = vpop.f32.mrf.mxu0
      %v4767 = vadd.f32 0.0, %v4766
      %4768 = vmatmul.bf16.gmra.mxu0 %v4680
      %v4769 = vpop.f32.mrf.mxu0
      %v4770 = vadd.f32 0.0, %v4769
      %v4771 = vpop.f32.mrf.mxu0
      %v4772 = vadd.f32 0.0, %v4771
      %4773 = vdwg.mxu0
      %v4774 = vld [vmem:[#allocation2] sm:$0xff]
      %v4775 = vld [vmem:[#allocation2 + $0x8] sm:$0xff]
      %v4776 = vld [vmem:[#allocation2 + $0x10] sm:$0xff]
      %v4777 = vld [vmem:[#allocation2 + $0x18] sm:$0xff]
      %v4778 = vld [vmem:[#allocation2 + $0x20] sm:$0xff]
      %v4779 = vld [vmem:[#allocation2 + $0x28] sm:$0xff]
      %v4780 = vld [vmem:[#allocation2 + $0x30] sm:$0xff]
      %v4781 = vld [vmem:[#allocation2 + $0x38] sm:$0xff]
      %v4782 = vld [vmem:[#allocation2 + $0x40] sm:$0xff]
      %v4783 = vld [vmem:[#allocation2 + $0x48] sm:$0xff]
      %v4784 = vld [vmem:[#allocation2 + $0x50] sm:$0xff]
      %v4785 = vld [vmem:[#allocation2 + $0x58] sm:$0xff]
      %v4786 = vld [vmem:[#allocation2 + $0x60] sm:$0xff]
      %v4787 = vld [vmem:[#allocation2 + $0x68] sm:$0xff]
      %v4788 = vld [vmem:[#allocation2 + $0x70] sm:$0xff]
      %v4789 = vld [vmem:[#allocation2 + $0x78] sm:$0xff]
      %v4790 = vld [vmem:[#allocation2 + $0x80] sm:$0xff]
      %v4791 = vld [vmem:[#allocation2 + $0x88] sm:$0xff]
      %v4792 = vld [vmem:[#allocation2 + $0x90] sm:$0xff]
      %v4793 = vld [vmem:[#allocation2 + $0x98] sm:$0xff]
      %v4794 = vld [vmem:[#allocation2 + $0xa0] sm:$0xff]
      %v4795 = vld [vmem:[#allocation2 + $0xa8] sm:$0xff]
      %v4796 = vld [vmem:[#allocation2 + $0xb0] sm:$0xff]
      %v4797 = vld [vmem:[#allocation2 + $0xb8] sm:$0xff]
      %v4798 = vld [vmem:[#allocation2 + $0xc0] sm:$0xff]
      %v4799 = vld [vmem:[#allocation2 + $0xc8] sm:$0xff]
      %v4800 = vld [vmem:[#allocation2 + $0xd0] sm:$0xff]
      %v4801 = vld [vmem:[#allocation2 + $0xd8] sm:$0xff]
      %v4802 = vld [vmem:[#allocation2 + $0xe0] sm:$0xff]
      %v4803 = vld [vmem:[#allocation2 + $0xe8] sm:$0xff]
      %v4804 = vld [vmem:[#allocation2 + $0xf0] sm:$0xff]
      %v4805 = vld [vmem:[#allocation2 + $0xf8] sm:$0xff]
      %v4806 = vadd.f32 %v4774, %v4695
      %v4807 = vadd.f32 %v4775, %v4697
      %v4808 = vadd.f32 %v4776, %v4700
      %v4809 = vadd.f32 %v4777, %v4702
      %v4810 = vadd.f32 %v4778, %v4705
      %v4811 = vadd.f32 %v4779, %v4707
      %v4812 = vadd.f32 %v4780, %v4710
      %v4813 = vadd.f32 %v4781, %v4712
      %v4814 = vadd.f32 %v4782, %v4715
      %v4815 = vadd.f32 %v4783, %v4717
      %v4816 = vadd.f32 %v4784, %v4720
      %v4817 = vadd.f32 %v4785, %v4722
      %v4818 = vadd.f32 %v4786, %v4725
      %v4819 = vadd.f32 %v4787, %v4727
      %v4820 = vadd.f32 %v4788, %v4730
      %v4821 = vadd.f32 %v4789, %v4732
      %v4822 = vadd.f32 %v4790, %v4735
      %v4823 = vadd.f32 %v4791, %v4737
      %v4824 = vadd.f32 %v4792, %v4740
      %v4825 = vadd.f32 %v4793, %v4742
      %v4826 = vadd.f32 %v4794, %v4745
      %v4827 = vadd.f32 %v4795, %v4747
      %v4828 = vadd.f32 %v4796, %v4750
      %v4829 = vadd.f32 %v4797, %v4752
      %v4830 = vadd.f32 %v4798, %v4755
      %v4831 = vadd.f32 %v4799, %v4757
      %v4832 = vadd.f32 %v4800, %v4760
      %v4833 = vadd.f32 %v4801, %v4762
      %v4834 = vadd.f32 %v4802, %v4765
      %v4835 = vadd.f32 %v4803, %v4767
      %v4836 = vadd.f32 %v4804, %v4770
      %v4837 = vadd.f32 %v4805, %v4772
      %4838 = vst [vmem:[#allocation2] sm:$0xff] %v4806
      %4839 = vst [vmem:[#allocation2 + $0x8] sm:$0xff] %v4807
      %4840 = vst [vmem:[#allocation2 + $0x10] sm:$0xff] %v4808
      %4841 = vst [vmem:[#allocation2 + $0x18] sm:$0xff] %v4809
      %4842 = vst [vmem:[#allocation2 + $0x20] sm:$0xff] %v4810
      %4843 = vst [vmem:[#allocation2 + $0x28] sm:$0xff] %v4811
      %4844 = vst [vmem:[#allocation2 + $0x30] sm:$0xff] %v4812
      %4845 = vst [vmem:[#allocation2 + $0x38] sm:$0xff] %v4813
      %4846 = vst [vmem:[#allocation2 + $0x40] sm:$0xff] %v4814
      %4847 = vst [vmem:[#allocation2 + $0x48] sm:$0xff] %v4815
      %4848 = vst [vmem:[#allocation2 + $0x50] sm:$0xff] %v4816
      %4849 = vst [vmem:[#allocation2 + $0x58] sm:$0xff] %v4817
      %4850 = vst [vmem:[#allocation2 + $0x60] sm:$0xff] %v4818
      %4851 = vst [vmem:[#allocation2 + $0x68] sm:$0xff] %v4819
      %4852 = vst [vmem:[#allocation2 + $0x70] sm:$0xff] %v4820
      %4853 = vst [vmem:[#allocation2 + $0x78] sm:$0xff] %v4821
      %4854 = vst [vmem:[#allocation2 + $0x80] sm:$0xff] %v4822
      %4855 = vst [vmem:[#allocation2 + $0x88] sm:$0xff] %v4823
      %4856 = vst [vmem:[#allocation2 + $0x90] sm:$0xff] %v4824
      %4857 = vst [vmem:[#allocation2 + $0x98] sm:$0xff] %v4825
      %4858 = vst [vmem:[#allocation2 + $0xa0] sm:$0xff] %v4826
      %4859 = vst [vmem:[#allocation2 + $0xa8] sm:$0xff] %v4827
      %4860 = vst [vmem:[#allocation2 + $0xb0] sm:$0xff] %v4828
      %4861 = vst [vmem:[#allocation2 + $0xb8] sm:$0xff] %v4829
      %4862 = vst [vmem:[#allocation2 + $0xc0] sm:$0xff] %v4830
      %4863 = vst [vmem:[#allocation2 + $0xc8] sm:$0xff] %v4831
      %4864 = vst [vmem:[#allocation2 + $0xd0] sm:$0xff] %v4832
      %4865 = vst [vmem:[#allocation2 + $0xd8] sm:$0xff] %v4833
      %4866 = vst [vmem:[#allocation2 + $0xe0] sm:$0xff] %v4834
      %4867 = vst [vmem:[#allocation2 + $0xe8] sm:$0xff] %v4835
      %4868 = vst [vmem:[#allocation2 + $0xf0] sm:$0xff] %v4836
      %4869 = vst [vmem:[#allocation2 + $0xf8] sm:$0xff] %v4837
      %v4870 = vld [vmem:[#allocation2] sm:$0xff]
      %v4871 = vld [vmem:[#allocation2 + $0x8] sm:$0xff]
      %v4872 = vld [vmem:[#allocation2 + $0x10] sm:$0xff]
      %v4873 = vld [vmem:[#allocation2 + $0x18] sm:$0xff]
      %v4874 = vld [vmem:[#allocation2 + $0x20] sm:$0xff]
      %v4875 = vld [vmem:[#allocation2 + $0x28] sm:$0xff]
      %v4876 = vld [vmem:[#allocation2 + $0x30] sm:$0xff]
      %v4877 = vld [vmem:[#allocation2 + $0x38] sm:$0xff]
      %v4878 = vld [vmem:[#allocation2 + $0x40] sm:$0xff]
      %v4879 = vld [vmem:[#allocation2 + $0x48] sm:$0xff]
      %v4880 = vld [vmem:[#allocation2 + $0x50] sm:$0xff]
      %v4881 = vld [vmem:[#allocation2 + $0x58] sm:$0xff]
      %v4882 = vld [vmem:[#allocation2 + $0x60] sm:$0xff]
      %v4883 = vld [vmem:[#allocation2 + $0x68] sm:$0xff]
      %v4884 = vld [vmem:[#allocation2 + $0x70] sm:$0xff]
      %v4885 = vld [vmem:[#allocation2 + $0x78] sm:$0xff]
      %v4886 = vld [vmem:[#allocation2 + $0x80] sm:$0xff]
      %v4887 = vld [vmem:[#allocation2 + $0x88] sm:$0xff]
      %v4888 = vld [vmem:[#allocation2 + $0x90] sm:$0xff]
      %v4889 = vld [vmem:[#allocation2 + $0x98] sm:$0xff]
      %v4890 = vld [vmem:[#allocation2 + $0xa0] sm:$0xff]
      %v4891 = vld [vmem:[#allocation2 + $0xa8] sm:$0xff]
      %v4892 = vld [vmem:[#allocation2 + $0xb0] sm:$0xff]
      %v4893 = vld [vmem:[#allocation2 + $0xb8] sm:$0xff]
      %v4894 = vld [vmem:[#allocation2 + $0xc0] sm:$0xff]
      %v4895 = vld [vmem:[#allocation2 + $0xc8] sm:$0xff]
      %v4896 = vld [vmem:[#allocation2 + $0xd0] sm:$0xff]
      %v4897 = vld [vmem:[#allocation2 + $0xd8] sm:$0xff]
      %v4898 = vld [vmem:[#allocation2 + $0xe0] sm:$0xff]
      %v4899 = vld [vmem:[#allocation2 + $0xe8] sm:$0xff]
      %v4900 = vld [vmem:[#allocation2 + $0xf0] sm:$0xff]
      %v4901 = vld [vmem:[#allocation2 + $0xf8] sm:$0xff]
      %v4902 = vld [vmem:[%s2] sm:$0x1]
      %v4904 = vperm.slane %v4902, 0
      %v4906 = vadd.f32 %v4870, %v4904
      %v4907 = vadd.f32 %v4871, %v4904
      %v4908 = vadd.f32 %v4872, %v4904
      %v4909 = vadd.f32 %v4873, %v4904
      %v4910 = vadd.f32 %v4874, %v4904
      %v4911 = vadd.f32 %v4875, %v4904
      %v4912 = vadd.f32 %v4876, %v4904
      %v4913 = vadd.f32 %v4877, %v4904
      %v4914 = vadd.f32 %v4878, %v4904
      %v4915 = vadd.f32 %v4879, %v4904
      %v4916 = vadd.f32 %v4880, %v4904
      %v4917 = vadd.f32 %v4881, %v4904
      %v4918 = vadd.f32 %v4882, %v4904
      %v4919 = vadd.f32 %v4883, %v4904
      %v4920 = vadd.f32 %v4884, %v4904
      %v4921 = vadd.f32 %v4885, %v4904
      %v4922 = vadd.f32 %v4886, %v4904
      %v4923 = vadd.f32 %v4887, %v4904
      %v4924 = vadd.f32 %v4888, %v4904
      %v4925 = vadd.f32 %v4889, %v4904
      %v4926 = vadd.f32 %v4890, %v4904
      %v4927 = vadd.f32 %v4891, %v4904
      %v4928 = vadd.f32 %v4892, %v4904
      %v4929 = vadd.f32 %v4893, %v4904
      %v4930 = vadd.f32 %v4894, %v4904
      %v4931 = vadd.f32 %v4895, %v4904
      %v4932 = vadd.f32 %v4896, %v4904
      %v4933 = vadd.f32 %v4897, %v4904
      %v4934 = vadd.f32 %v4898, %v4904
      %v4935 = vadd.f32 %v4899, %v4904
      %v4936 = vadd.f32 %v4900, %v4904
      %v4937 = vadd.f32 %v4901, %v4904
      %v4938 = vpack.c.bf16 %v4906, %v4906
      %v4939 = vpack.c.bf16 %v4907, %v4907
      %v4940 = vpack.c.bf16 %v4908, %v4908
      %v4941 = vpack.c.bf16 %v4909, %v4909
      %v4942 = vpack.c.bf16 %v4910, %v4910
      %v4943 = vpack.c.bf16 %v4911, %v4911
      %v4944 = vpack.c.bf16 %v4912, %v4912
      %v4945 = vpack.c.bf16 %v4913, %v4913
      %v4946 = vpack.c.bf16 %v4914, %v4914
      %v4947 = vpack.c.bf16 %v4915, %v4915
      %v4948 = vpack.c.bf16 %v4916, %v4916
      %v4949 = vpack.c.bf16 %v4917, %v4917
      %v4950 = vpack.c.bf16 %v4918, %v4918
      %v4951 = vpack.c.bf16 %v4919, %v4919
      %v4952 = vpack.c.bf16 %v4920, %v4920
      %v4953 = vpack.c.bf16 %v4921, %v4921
      %v4954 = vpack.c.bf16 %v4922, %v4922
      %v4955 = vpack.c.bf16 %v4923, %v4923
      %v4956 = vpack.c.bf16 %v4924, %v4924
      %v4957 = vpack.c.bf16 %v4925, %v4925
      %v4958 = vpack.c.bf16 %v4926, %v4926
      %v4959 = vpack.c.bf16 %v4927, %v4927
      %v4960 = vpack.c.bf16 %v4928, %v4928
      %v4961 = vpack.c.bf16 %v4929, %v4929
      %v4962 = vpack.c.bf16 %v4930, %v4930
      %v4963 = vpack.c.bf16 %v4931, %v4931
      %v4964 = vpack.c.bf16 %v4932, %v4932
      %v4965 = vpack.c.bf16 %v4933, %v4933
      %v4966 = vpack.c.bf16 %v4934, %v4934
      %v4967 = vpack.c.bf16 %v4935, %v4935
      %v4968 = vpack.c.bf16 %v4936, %v4936
      %v4969 = vpack.c.bf16 %v4937, %v4937
      %4970 = vst [vmem:[%s237] sm:$0xf] %v4938
      %4971 = vst [vmem:[%s237 + $0x4] sm:$0xf] %v4939
      %4972 = vst [vmem:[%s237 + $0x8] sm:$0xf] %v4940
      %4973 = vst [vmem:[%s237 + $0xc] sm:$0xf] %v4941
      %4974 = vst [vmem:[%s237 + $0x10] sm:$0xf] %v4942
      %4975 = vst [vmem:[%s237 + $0x14] sm:$0xf] %v4943
      %4976 = vst [vmem:[%s237 + $0x18] sm:$0xf] %v4944
      %4977 = vst [vmem:[%s237 + $0x1c] sm:$0xf] %v4945
      %4978 = vst [vmem:[%s237 + $0x20] sm:$0xf] %v4946
      %4979 = vst [vmem:[%s237 + $0x24] sm:$0xf] %v4947
      %4980 = vst [vmem:[%s237 + $0x28] sm:$0xf] %v4948
      %4981 = vst [vmem:[%s237 + $0x2c] sm:$0xf] %v4949
      %4982 = vst [vmem:[%s237 + $0x30] sm:$0xf] %v4950
      %4983 = vst [vmem:[%s237 + $0x34] sm:$0xf] %v4951
      %4984 = vst [vmem:[%s237 + $0x38] sm:$0xf] %v4952
      %4985 = vst [vmem:[%s237 + $0x3c] sm:$0xf] %v4953
      %4986 = vst [vmem:[%s237 + $0x40] sm:$0xf] %v4954
      %4987 = vst [vmem:[%s237 + $0x44] sm:$0xf] %v4955
      %4988 = vst [vmem:[%s237 + $0x48] sm:$0xf] %v4956
      %4989 = vst [vmem:[%s237 + $0x4c] sm:$0xf] %v4957
      %4990 = vst [vmem:[%s237 + $0x50] sm:$0xf] %v4958
      %4991 = vst [vmem:[%s237 + $0x54] sm:$0xf] %v4959
      %4992 = vst [vmem:[%s237 + $0x58] sm:$0xf] %v4960
      %4993 = vst [vmem:[%s237 + $0x5c] sm:$0xf] %v4961
      %4994 = vst [vmem:[%s237 + $0x60] sm:$0xf] %v4962
      %4995 = vst [vmem:[%s237 + $0x64] sm:$0xf] %v4963
      %4996 = vst [vmem:[%s237 + $0x68] sm:$0xf] %v4964
      %4997 = vst [vmem:[%s237 + $0x6c] sm:$0xf] %v4965
      %4998 = vst [vmem:[%s237 + $0x70] sm:$0xf] %v4966
      %4999 = vst [vmem:[%s237 + $0x74] sm:$0xf] %v4967
      %5000 = vst [vmem:[%s237 + $0x78] sm:$0xf] %v4968
      %5001 = vst [vmem:[%s237 + $0x7c] sm:$0xf] %v4969
      %p5002 = scmp.lt.s32.totalorder %s19, 1
      %s5003 = scalar_select %p5002, %s19, 1
      %p5004 = scmp.lt.s32.totalorder %s20, 0
      %s5005 = scalar_select %p5004, %s20, 0
      %p5006 = scmp.lt.s32.totalorder %s21, 0
      %s5007 = scalar_select %p5006, %s21, 0
      %s5008 = smul.addr %s5007, 32
      %s5009 = smul.addr %s5005, 32
      %s5010 = sadd.s32 %s5008, %s5009
      %s5011 = smul.addr %s5003, 32
      %s5012 = sadd.s32 %s5010, %s5011
      %s5013 = smul.addr %s5012, 4
      %s5014 = scalar_lea.vmem %s3, %s5013
      // Predicated region
      $region33: #{_conv2d_fwd_impl.1} parent=31 // pred_check
        %p5015 = pneg %p127
      $region34: #{_conv2d_fwd_impl.1} parent=31 // pred_check_branch
        %5017 = sbr.rel (%p5015) target = $region36
      $region35: #{_conv2d_fwd_impl.1} parent=31 // pred_region
        _
      $region36: #{_conv2d_fwd_impl.1} parent=31 // pred_fallthru
        _
    $region32: #{_conv2d_fwd_impl.1} parent=5 // pred_fallthru
      _
    %p5018 = scmp.le.s32.totalorder 2, %s9
    // Predicated region
    $region37: #{_conv2d_fwd_impl.1} parent=5 // pred_check
      %p5019 = pneg %p5018
    $region38: #{_conv2d_fwd_impl.1} parent=5 // pred_check_branch
      %5021 = sbr.rel (%p5019) target = $region40
    $region39: #{_conv2d_fwd_impl.1} parent=5 // pred_region
      %s5022 = ssub.s32 %s9, 2
      // Predicated region
      $region41: #{_conv2d_fwd_impl.1} parent=39 // pred_check
        %p5023 = pneg %p133
      $region42: #{_conv2d_fwd_impl.1} parent=39 // pred_check_branch
        %5025 = sbr.rel (%p5023) target = $region44
      $region43: #{_conv2d_fwd_impl.1} parent=39 // pred_region
        %p5026 = scmp.lt.s32.totalorder %s22, 1
        %s5027 = scalar_select %p5026, %s22, 1
        %p5028 = scmp.lt.s32.totalorder %s23, 0
        %s5029 = scalar_select %p5028, %s23, 0
        %p5030 = scmp.lt.s32.totalorder %s24, 0
        %s5031 = scalar_select %p5030, %s24, 0
        %s5032 = smul.addr %s5031, 32
        %s5033 = smul.addr %s5029, 32
        %s5034 = sadd.s32 %s5032, %s5033
        %s5035 = smul.addr %s5027, 32
        %s5036 = sadd.s32 %s5034, %s5035
        %s5037 = smul.addr %s5036, 4
        %s5038 = scalar_lea.vmem %s3, %s5037
      $region44: #{_conv2d_fwd_impl.1} parent=39 // pred_fallthru
        _
    $region40: #{_conv2d_fwd_impl.1} parent=5 // pred_fallthru
      _
  $region6: #{_conv2d_fwd_impl.1} parent=0 // loop_footer
    %s13 = sadd.s32 1, %s9
  $region7: #{_conv2d_fwd_impl.1} parent=0 // loop_footer_branch
    %8 = sbr.rel target = $region3
  $region8: #{_conv2d_fwd_impl.1} parent=0 // loop_exit
    _

</llo_original>
